<compile_context>
chip_gen: v5e
topology: v5e:2x2
jax: 0.10.0
libtpu: 0.0.40
codegen_flags: <defaults>
</compile_context>

<pallas_src>
import math
import functools

import jax
import jax.numpy as jnp
from jax.experimental import pallas as pl
from jax.experimental.pallas import tpu as pltpu


HIDDEN = 128            # hidden_size (512 in the real config; scaled down but lane-dense)
NUM_HEADS = 4
HEAD_DIM = HIDDEN // NUM_HEADS
INTERMEDIATE = 4 * HIDDEN
LN_EPS = 1e-12


# --------------------------------------------------------------------------- #
# Fused Pallas kernel: joint MHA + attn-LN + FFN + output-LN for TB batch items
# --------------------------------------------------------------------------- #
def _fused_layer_kernel(lang_ref, visn_ref, text_ref, cat_ref, mask_ref,
                        wq_ref, wkv_ref, wo_ref, w1_ref, w2_ref,
                        vecs_ref, bkv_ref, b1_ref,
                        o_ref, *, num_heads, head_dim, eps):
    f32, bf16 = jnp.float32, jnp.bfloat16
    TB, Sq, H = lang_ref.shape
    dh = head_dim

    # Packed bias / LayerNorm vectors: rows = [bq, bo, g1, be1, b2, g2, be2, 0]
    vecs = vecs_ref[...]
    bq, bo = vecs[0:1], vecs[1:2]
    g1, be1 = vecs[2:3], vecs[3:4]
    b2, g2, be2 = vecs[4:5], vecs[5:6], vecs[6:7]

    # Queries / residual, flattened so every MXU matmul sees M = TB*Sq rows.
    x3 = lang_ref[...]
    xf = x3.reshape(TB * Sq, H)                                   # (rows, H) f32

    # KV context: seq-axis (sublane) concat of the four sources; offsets are multiples
    # of 8 so this is sublane-aligned (no lane shuffles).
    ctx3 = jnp.concatenate(
        [lang_ref[...], visn_ref[...], text_ref[...], cat_ref[...]], axis=1)  # (TB,Sk,H)
    Sk = ctx3.shape[1]
    ctxf = ctx3.reshape(TB * Sk, H)

    # ---------------- full-width projections (K = H = 128 on the MXU) ---------------- #
    # 1/sqrt(head_dim) is folded into Wq/bq wrapper-side.
    q = jnp.dot(xf.astype(bf16), wq_ref[...], preferred_element_type=f32) + bq
    kv = (jnp.dot(ctxf.astype(bf16), wkv_ref[...], preferred_element_type=f32)
          + bkv_ref[...])

    q3 = q.reshape(TB, Sq, H)                                     # heads along lanes
    kv3 = kv.reshape(TB, Sk, 2 * H)
    k3, v3 = kv3[:, :, :H], kv3[:, :, H:]

    mask = mask_ref[...]                                          # (TB, Sq, Sk) additive

    # ---------------- per-(batch, head) scores / softmax / PV ------------------------ #
    head_out = []
    for h in range(num_heads):
        sl = slice(h * dh, (h + 1) * dh)
        qh = q3[:, :, sl].astype(bf16)                            # (TB, Sq, dh)
        kh = k3[:, :, sl].astype(bf16)                            # (TB, Sk, dh)
        vh = v3[:, :, sl].astype(bf16)                            # (TB, Sk, dh)

        s = jnp.einsum('bqd,bkd->bqk', qh, kh,
                       preferred_element_type=f32) + mask         # (TB, Sq, Sk)
        s = s - jnp.max(s, axis=-1, keepdims=True)
        p = jnp.exp(s)
        p = p * pl.reciprocal(jnp.sum(p, axis=-1, keepdims=True), approx=True)
        head_out.append(jnp.einsum('bqk,bkd->bqd', p.astype(bf16), vh,
                                   preferred_element_type=f32))   # (TB, Sq, dh)

    # Lane-concatenate heads -> (rows, H), then ONE 128-contraction output projection.
    ctx_heads = jnp.concatenate(head_out, axis=-1).reshape(TB * Sq, H)
    attn = jnp.dot(ctx_heads.astype(bf16), wo_ref[...],
                   preferred_element_type=f32) + bo               # (rows, H)

    # dropout = identity (eval mode); residual + LayerNorm (f32)
    y = attn + xf
    mu = jnp.mean(y, axis=-1, keepdims=True)
    var = jnp.mean((y - mu) ** 2, axis=-1, keepdims=True)
    x1 = (y - mu) * jax.lax.rsqrt(var + eps) * g1 + be1

    # ---------------- BertIntermediate + BertOutput (x1 stays in VMEM) --------------- #
    hmid = jnp.dot(x1.astype(bf16), w1_ref[...],
                   preferred_element_type=f32) + b1_ref[...]
    hmid = 0.5 * hmid * (1.0 + jax.lax.erf(hmid * (1.0 / math.sqrt(2.0))))  # exact BERT gelu
    out = jnp.dot(hmid.astype(bf16), w2_ref[...],
                  preferred_element_type=f32) + b2
    y2 = out + x1
    mu2 = jnp.mean(y2, axis=-1, keepdims=True)
    var2 = jnp.mean((y2 - mu2) ** 2, axis=-1, keepdims=True)
    o_ref[...] = (((y2 - mu2) * jax.lax.rsqrt(var2 + eps) * g2 + be2)
                  .reshape(TB, Sq, H).astype(o_ref.dtype))


# --------------------------------------------------------------------------- #
# Wrapper-side (one-time) parameter reorganization
# --------------------------------------------------------------------------- #
def _prep_weights(params):
    """Full-width 2-D weights (heads folded into the lane/output dim), fold 1/sqrt(dh)
    into Wq/bq, fuse Wk|Wv, cast matmul weights to bf16 (MXU-native).  Biases and
    LayerNorm vectors stay f32 and are packed into one (8, H) block.

    NOTE: weights assumed in (in, out) layout — a PyTorch nn.Linear checkpoint
    stores (out, in) and needs a transpose here."""
    sa, ffn = params["self_attn"], params["ffn"]
    H, I = HIDDEN, INTERMEDIATE
    scale = 1.0 / math.sqrt(HEAD_DIM)

    wq = (sa["wq"] * scale).astype(jnp.bfloat16)                        # (H, H)
    wkv = jnp.concatenate([sa["wk"], sa["wv"]], axis=-1).astype(jnp.bfloat16)  # (H, 2H)
    wo = sa["wo"].astype(jnp.bfloat16)                                  # (H, H)
    w1 = ffn["w1"].astype(jnp.bfloat16)                                 # (H, I)
    w2 = ffn["w2"].astype(jnp.bfloat16)                                 # (I, H)

    vecs = jnp.concatenate([
        sa["bq"].reshape(1, H) * scale,        # bq (scale folded, like Wq)
        sa["bo"].reshape(1, H),                # bo
        sa["gamma"].reshape(1, H),             # attn LN gamma
        sa["beta"].reshape(1, H),              # attn LN beta
        ffn["b2"].reshape(1, H),               # FFN output bias
        ffn["gamma"].reshape(1, H),            # output LN gamma
        ffn["beta"].reshape(1, H),             # output LN beta
        jnp.zeros((1, H), jnp.float32),        # pad row
    ], axis=0).astype(jnp.float32)                                      # (8, H)

    bkv = jnp.concatenate([sa["bk"].reshape(1, H),
                           sa["bv"].reshape(1, H)], axis=-1)            # (1, 2H)
    b1 = ffn["b1"].reshape(1, I)                                        # (1, I)
    return wq, wkv, wo, w1, w2, vecs, bkv, b1


def _pick_block_batch(B, target=8):
    """Largest TB <= target dividing B; keep >= 2 grid steps when possible so
    dimension_semantics=("parallel",) feeds both TensorCores on v7x."""
    tb = max(1, min(target, B))
    while B % tb:
        tb -= 1
    if B >= 2 and B // tb < 2:
        tb = max(1, B // 2)
        while B % tb:
            tb -= 1
    return tb


# --------------------------------------------------------------------------- #
# Module forward (single fused pallas_call, batch-blocked grid)
# --------------------------------------------------------------------------- #
def bert_generation_layer(params, lang_feats, visn_feats, text_feats, cat_feats,
                          lang_attention_mask, v_attention_mask, mix_attention_mask,
                          *, block_batch=8):
    B, Sq, H = lang_feats.shape
    Sv, St, Sc = visn_feats.shape[1], text_feats.shape[1], cat_feats.shape[1]
    Sk = Sq + Sv + St + Sc
    I = params["ffn"]["w1"].shape[1]

    TB = _pick_block_batch(B, block_batch)

    # NOTE: mix_cross_attention(lang, cat, cat, mix_mask) is computed and then DISCARDED
    # by the PyTorch module (it only rebinds a local variable) — it has no effect on the
    # returned value, so it is intentionally not executed here.

    # Joint additive mask pre-concatenated wrapper-side (text mask is None in the
    # forward -> zeros).  Tiny in HBM; removes per-step lane-unaligned concat in VMEM.
    mask = jnp.concatenate([
        lang_attention_mask.astype(jnp.float32),
        v_attention_mask.astype(jnp.float32),
        jnp.zeros((B, Sq, St), jnp.float32),
        mix_attention_mask.astype(jnp.float32)], axis=-1)               # (B, Sq, Sk)

    weights = _prep_weights(params)

    def batched(s1, s2):
        return pl.BlockSpec((TB, s1, s2), lambda b: (b, 0, 0))

    def const(shape):
        # Grid-invariant weight blocks (fetched once).  At the real config (H=512)
        # add pipeline_mode=pl.Buffered(1) here to single-buffer them in VMEM.
        return pl.BlockSpec(shape, lambda b: (0,) * len(shape))

    kern = functools.partial(_fused_layer_kernel, num_heads=NUM_HEADS,
                             head_dim=HEAD_DIM, eps=LN_EPS)

    return pl.pallas_call(
        kern,
        out_shape=jax.ShapeDtypeStruct((B, Sq, H), lang_feats.dtype),
        grid=(B // TB,),
        in_specs=[
            batched(Sq, H),                 # lang (queries / residual)
            batched(Sv, H),                 # visn
            batched(St, H),                 # text
            batched(Sc, H),                 # cat
            batched(Sq, Sk),                # pre-concatenated additive mask
            const((H, H)),                  # Wq (scale folded, bf16)
            const((H, 2 * H)),              # Wk|Wv fused (bf16)
            const((H, H)),                  # Wo (bf16)
            const((H, I)),                  # W1 (bf16)
            const((I, H)),                  # W2 (bf16)
            const((8, H)),                  # packed [bq,bo,g1,be1,b2,g2,be2,0]
            const((1, 2 * H)),              # bk|bv fused
            const((1, I)),                  # b1
        ],
        out_specs=pl.BlockSpec((TB, Sq, H), lambda b: (b, 0, 0)),
        compiler_params=pltpu.CompilerParams(
            dimension_semantics=("parallel",),      # batch blocks split across TCs on v7x
            vmem_limit_bytes=32 * 1024 * 1024),
    )(lang_feats, visn_feats, text_feats, cat_feats, mask, *weights)


# --------------------------------------------------------------------------- #
# Deterministic parameter init
# --------------------------------------------------------------------------- #
def init_params(key):
    def dense(k, din, dout):
        return jax.random.normal(k, (din, dout), jnp.float32) * 0.02

    ks = jax.random.split(key, 16)

    def attn_params(kset):
        return dict(
            wq=dense(kset[0], HIDDEN, HIDDEN), bq=jnp.zeros((1, HIDDEN), jnp.float32),
            wk=dense(kset[1], HIDDEN, HIDDEN), bk=jnp.zeros((1, HIDDEN), jnp.float32),
            wv=dense(kset[2], HIDDEN, HIDDEN), bv=jnp.zeros((1, HIDDEN), jnp.float32),
            wo=dense(kset[3], HIDDEN, HIDDEN), bo=jnp.zeros((1, HIDDEN), jnp.float32),
            gamma=jnp.ones((1, HIDDEN), jnp.float32),
            beta=jnp.zeros((1, HIDDEN), jnp.float32),
        )

    params = dict(
        self_attn=attn_params(ks[0:4]),
        # mix_cross_attention params: present for module fidelity; its output is
        # discarded by the forward, so they are never consumed.
        cross_attn=attn_params(ks[4:8]),
        ffn=dict(
            w1=dense(ks[8], HIDDEN, INTERMEDIATE),
            b1=jnp.zeros((1, INTERMEDIATE), jnp.float32),
            w2=dense(ks[9], INTERMEDIATE, HIDDEN),
            b2=jnp.zeros((1, HIDDEN), jnp.float32),
            gamma=jnp.ones((1, HIDDEN), jnp.float32),
            beta=jnp.zeros((1, HIDDEN), jnp.float32),
        ),
        # fc_alpha = Linear(2*hidden, 1): declared in __init__ but never used in forward.
        fc_alpha=dict(w=dense(ks[10], 2 * HIDDEN, 1),
                      b=jnp.zeros((1, 1), jnp.float32)),
    )
    return params


# --------------------------------------------------------------------------- #
if __name__ == "__main__":
    key = jax.random.PRNGKey(0)
    B, S_LANG, S_VISN, S_TEXT, S_CAT = 8, 8, 16, 8, 8

    kp, k1, k2, k3, k4 = jax.random.split(key, 5)
    lang_feats = jax.random.normal(k1, (B, S_LANG, HIDDEN), jnp.float32)
    visn_feats = jax.random.normal(k2, (B, S_VISN, HIDDEN), jnp.float32)
    text_feats = jax.random.normal(k3, (B, S_TEXT, HIDDEN), jnp.float32)
    cat_feats = jax.random.normal(k4, (B, S_CAT, HIDDEN), jnp.float32)

    # lang mask: causal (decoder self-attention part), additive form
    i = jnp.arange(S_LANG)
    causal = jnp.where(i[None, :] <= i[:, None], 0.0, -10000.0).astype(jnp.float32)
    lang_attention_mask = jnp.broadcast_to(causal, (B, S_LANG, S_LANG))

    # visn mask: per-batch key padding
    visn_valid = jnp.where(jnp.arange(B) % 2 == 0, S_VISN, 12)
    v_key = jnp.where(jnp.arange(S_VISN)[None, :] < visn_valid[:, None], 0.0, -10000.0)
    v_attention_mask = jnp.broadcast_to(
        v_key[:, None, :], (B, S_LANG, S_VISN)).astype(jnp.float32)

    # mix/cat mask: per-batch key padding
    cat_valid = jnp.where(jnp.arange(B) % 2 == 0, S_CAT, 5)
    c_key = jnp.where(jnp.arange(S_CAT)[None, :] < cat_valid[:, None], 0.0, -10000.0)
    mix_attention_mask = jnp.broadcast_to(
        c_key[:, None, :], (B, S_LANG, S_CAT)).astype(jnp.float32)

    params = init_params(kp)

    layer = jax.jit(bert_generation_layer)
    out = layer(params, lang_feats, visn_feats, text_feats, cat_feats,
                lang_attention_mask, v_attention_mask, mix_attention_mask)
    out = jax.block_until_ready(out)
    assert out.shape == (B, S_LANG, HIDDEN) and out.dtype == jnp.float32
    print("KERNEL_OK")
</pallas_src>

<mosaic_0001>
module attributes {stable_mosaic.version = 11 : i64} {
  func.func @_fused_layer_kernel(%arg0: i32, %arg1: memref<4x8x128xf32, #tpu.memory_space<vmem>>, %arg2: memref<4x16x128xf32, #tpu.memory_space<vmem>>, %arg3: memref<4x8x128xf32, #tpu.memory_space<vmem>>, %arg4: memref<4x8x128xf32, #tpu.memory_space<vmem>>, %arg5: memref<4x8x40xf32, #tpu.memory_space<vmem>>, %arg6: memref<128x128xbf16, #tpu.memory_space<vmem>>, %arg7: memref<128x256xbf16, #tpu.memory_space<vmem>>, %arg8: memref<128x128xbf16, #tpu.memory_space<vmem>>, %arg9: memref<128x512xbf16, #tpu.memory_space<vmem>>, %arg10: memref<512x128xbf16, #tpu.memory_space<vmem>>, %arg11: memref<8x128xf32, #tpu.memory_space<vmem>>, %arg12: memref<1x256xf32, #tpu.memory_space<vmem>>, %arg13: memref<1x512xf32, #tpu.memory_space<vmem>>, %arg14: memref<4x8x128xf32, #tpu.memory_space<vmem>>) attributes {dimension_semantics = [#tpu.dimension_semantics<parallel>], iteration_bounds = array<i64: 2>, scalar_prefetch = 0 : i64, scratch_operands = 0 : i64, tpu.core_type = #tpu.core_type<tc>, window_params = [{transform_indices = @transform_0, window_bounds = array<i64: 4, 8, 128>}, {transform_indices = @transform_1, window_bounds = array<i64: 4, 16, 128>}, {transform_indices = @transform_2, window_bounds = array<i64: 4, 8, 128>}, {transform_indices = @transform_3, window_bounds = array<i64: 4, 8, 128>}, {transform_indices = @transform_4, window_bounds = array<i64: 4, 8, 40>}, {pipeline_mode = #tpu.pipeline_mode<synchronous>, transform_indices = @transform_5, window_bounds = array<i64: 128, 128>}, {pipeline_mode = #tpu.pipeline_mode<synchronous>, transform_indices = @transform_6, window_bounds = array<i64: 128, 256>}, {pipeline_mode = #tpu.pipeline_mode<synchronous>, transform_indices = @transform_7, window_bounds = array<i64: 128, 128>}, {pipeline_mode = #tpu.pipeline_mode<synchronous>, transform_indices = @transform_8, window_bounds = array<i64: 128, 512>}, {pipeline_mode = #tpu.pipeline_mode<synchronous>, transform_indices = @transform_9, window_bounds = array<i64: 512, 128>}, {pipeline_mode = #tpu.pipeline_mode<synchronous>, transform_indices = @transform_10, window_bounds = array<i64: 8, 128>}, {pipeline_mode = #tpu.pipeline_mode<synchronous>, transform_indices = @transform_11, window_bounds = array<i64: 1, 256>}, {pipeline_mode = #tpu.pipeline_mode<synchronous>, transform_indices = @transform_12, window_bounds = array<i64: 1, 512>}, {transform_indices = @transform_13, window_bounds = array<i64: 4, 8, 128>}]} {
    %c0 = arith.constant 0 : index
    %c0_0 = arith.constant 0 : index
    %0 = vector.load %arg11[%c0, %c0_0] : memref<8x128xf32, #tpu.memory_space<vmem>>, vector<8x128xf32>
    %1 = vector.extract_strided_slice %0 {offsets = [0, 0], sizes = [1, 128], strides = [1, 1]} : vector<8x128xf32> to vector<1x128xf32>
    %2 = vector.extract_strided_slice %0 {offsets = [1, 0], sizes = [1, 128], strides = [1, 1]} : vector<8x128xf32> to vector<1x128xf32>
    %3 = vector.extract_strided_slice %0 {offsets = [2, 0], sizes = [1, 128], strides = [1, 1]} : vector<8x128xf32> to vector<1x128xf32>
    %4 = vector.extract_strided_slice %0 {offsets = [3, 0], sizes = [1, 128], strides = [1, 1]} : vector<8x128xf32> to vector<1x128xf32>
    %5 = vector.extract_strided_slice %0 {offsets = [4, 0], sizes = [1, 128], strides = [1, 1]} : vector<8x128xf32> to vector<1x128xf32>
    %6 = vector.extract_strided_slice %0 {offsets = [5, 0], sizes = [1, 128], strides = [1, 1]} : vector<8x128xf32> to vector<1x128xf32>
    %7 = vector.extract_strided_slice %0 {offsets = [6, 0], sizes = [1, 128], strides = [1, 1]} : vector<8x128xf32> to vector<1x128xf32>
    %c0_1 = arith.constant 0 : index
    %c0_2 = arith.constant 0 : index
    %c0_3 = arith.constant 0 : index
    %8 = vector.load %arg1[%c0_1, %c0_2, %c0_3] : memref<4x8x128xf32, #tpu.memory_space<vmem>>, vector<4x8x128xf32>
    %9 = vector.shape_cast %8 : vector<4x8x128xf32> to vector<32x128xf32>
    %c0_4 = arith.constant 0 : index
    %c0_5 = arith.constant 0 : index
    %c0_6 = arith.constant 0 : index
    %10 = vector.load %arg1[%c0_4, %c0_5, %c0_6] : memref<4x8x128xf32, #tpu.memory_space<vmem>>, vector<4x8x128xf32>
    %c0_7 = arith.constant 0 : index
    %c0_8 = arith.constant 0 : index
    %c0_9 = arith.constant 0 : index
    %11 = vector.load %arg2[%c0_7, %c0_8, %c0_9] : memref<4x16x128xf32, #tpu.memory_space<vmem>>, vector<4x16x128xf32>
    %c0_10 = arith.constant 0 : index
    %c0_11 = arith.constant 0 : index
    %c0_12 = arith.constant 0 : index
    %12 = vector.load %arg3[%c0_10, %c0_11, %c0_12] : memref<4x8x128xf32, #tpu.memory_space<vmem>>, vector<4x8x128xf32>
    %c0_13 = arith.constant 0 : index
    %c0_14 = arith.constant 0 : index
    %c0_15 = arith.constant 0 : index
    %13 = vector.load %arg4[%c0_13, %c0_14, %c0_15] : memref<4x8x128xf32, #tpu.memory_space<vmem>>, vector<4x8x128xf32>
    %14 = tpu.concatenate %10, %11, %12, %13 in 1 : vector<4x8x128xf32>, vector<4x16x128xf32>, vector<4x8x128xf32>, vector<4x8x128xf32> -> vector<4x40x128xf32>
    %15 = vector.shape_cast %14 : vector<4x40x128xf32> to vector<160x128xf32>
    %16 = arith.truncf %9 : vector<32x128xf32> to vector<32x128xbf16>
    %c0_16 = arith.constant 0 : index
    %c0_17 = arith.constant 0 : index
    %17 = vector.load %arg6[%c0_16, %c0_17] : memref<128x128xbf16, #tpu.memory_space<vmem>>, vector<128x128xbf16>
    %cst = arith.constant dense<0.000000e+00> : vector<32x128xf32>
    %18 = tpu.matmul %16, %17, %cst {dimension_numbers = #tpu.dot_dimension_numbers<[1], [0], [0], [1], [0, 0, 1, 1], [], []>} : vector<32x128xbf16>, vector<128x128xbf16>, vector<32x128xf32> -> vector<32x128xf32>
    %19 = vector.broadcast %1 : vector<1x128xf32> to vector<32x128xf32>
    %20 = arith.addf %18, %19 : vector<32x128xf32>
    %21 = arith.truncf %15 : vector<160x128xf32> to vector<160x128xbf16>
    %c0_18 = arith.constant 0 : index
    %c0_19 = arith.constant 0 : index
    %22 = vector.load %arg7[%c0_18, %c0_19] : memref<128x256xbf16, #tpu.memory_space<vmem>>, vector<128x256xbf16>
    %cst_20 = arith.constant dense<0.000000e+00> : vector<160x256xf32>
    %23 = tpu.matmul %21, %22, %cst_20 {dimension_numbers = #tpu.dot_dimension_numbers<[1], [0], [0], [1], [0, 0, 1, 1], [], []>} : vector<160x128xbf16>, vector<128x256xbf16>, vector<160x256xf32> -> vector<160x256xf32>
    %c0_21 = arith.constant 0 : index
    %c0_22 = arith.constant 0 : index
    %24 = vector.load %arg12[%c0_21, %c0_22] : memref<1x256xf32, #tpu.memory_space<vmem>>, vector<1x256xf32>
    %25 = vector.broadcast %24 : vector<1x256xf32> to vector<160x256xf32>
    %26 = arith.addf %23, %25 : vector<160x256xf32>
    %27 = vector.shape_cast %20 : vector<32x128xf32> to vector<4x8x128xf32>
    %28 = vector.shape_cast %26 : vector<160x256xf32> to vector<4x40x256xf32>
    %29 = vector.extract_strided_slice %28 {offsets = [0, 0, 0], sizes = [4, 40, 128], strides = [1, 1, 1]} : vector<4x40x256xf32> to vector<4x40x128xf32>
    %30 = vector.extract_strided_slice %28 {offsets = [0, 0, 128], sizes = [4, 40, 128], strides = [1, 1, 1]} : vector<4x40x256xf32> to vector<4x40x128xf32>
    %c0_23 = arith.constant 0 : index
    %c0_24 = arith.constant 0 : index
    %c0_25 = arith.constant 0 : index
    %31 = vector.load %arg5[%c0_23, %c0_24, %c0_25] : memref<4x8x40xf32, #tpu.memory_space<vmem>>, vector<4x8x40xf32>
    %32 = vector.extract_strided_slice %27 {offsets = [0, 0, 0], sizes = [4, 8, 32], strides = [1, 1, 1]} : vector<4x8x128xf32> to vector<4x8x32xf32>
    %33 = arith.truncf %32 : vector<4x8x32xf32> to vector<4x8x32xbf16>
    %34 = vector.extract_strided_slice %29 {offsets = [0, 0, 0], sizes = [4, 40, 32], strides = [1, 1, 1]} : vector<4x40x128xf32> to vector<4x40x32xf32>
    %35 = arith.truncf %34 : vector<4x40x32xf32> to vector<4x40x32xbf16>
    %36 = vector.extract_strided_slice %30 {offsets = [0, 0, 0], sizes = [4, 40, 32], strides = [1, 1, 1]} : vector<4x40x128xf32> to vector<4x40x32xf32>
    %37 = arith.truncf %36 : vector<4x40x32xf32> to vector<4x40x32xbf16>
    "tpu.trace_start"() <{level = 10 : i32, message = "bqd,bkd->bqk"}> : () -> ()
    %cst_26 = arith.constant dense<0.000000e+00> : vector<4x8x40xf32>
    %38 = tpu.matmul %33, %35, %cst_26 {dimension_numbers = #tpu.dot_dimension_numbers<[2], [2], [1], [1], [0, 0, 0, 1, 1, 1], [0], [0]>} : vector<4x8x32xbf16>, vector<4x40x32xbf16>, vector<4x8x40xf32> -> vector<4x8x40xf32>
    "tpu.trace_stop"() : () -> ()
    %39 = arith.addf %38, %31 : vector<4x8x40xf32>
    %cst_27 = arith.constant dense<0xFF800000> : vector<4x8xf32>
    %40 = vector.multi_reduction <maximumf>, %39, %cst_27 [2] : vector<4x8x40xf32> to vector<4x8xf32>
    %41 = vector.shape_cast %40 : vector<4x8xf32> to vector<4x8x1xf32>
    %42 = vector.broadcast %41 : vector<4x8x1xf32> to vector<4x8x40xf32>
    %43 = arith.subf %39, %42 : vector<4x8x40xf32>
    %44 = math.exp %43 : vector<4x8x40xf32>
    %cst_28 = arith.constant dense<0.000000e+00> : vector<4x8xf32>
    %45 = vector.multi_reduction <add>, %44, %cst_28 [2] : vector<4x8x40xf32> to vector<4x8xf32>
    %46 = vector.shape_cast %45 : vector<4x8xf32> to vector<4x8x1xf32>
    %47 = tpu.reciprocal %46 {approx = true} : vector<4x8x1xf32> -> vector<4x8x1xf32>
    %48 = vector.broadcast %47 : vector<4x8x1xf32> to vector<4x8x40xf32>
    %49 = arith.mulf %44, %48 : vector<4x8x40xf32>
    %50 = arith.truncf %49 : vector<4x8x40xf32> to vector<4x8x40xbf16>
    "tpu.trace_start"() <{level = 10 : i32, message = "bqk,bkd->bqd"}> : () -> ()
    %cst_29 = arith.constant dense<0.000000e+00> : vector<4x8x32xf32>
    %51 = tpu.matmul %50, %37, %cst_29 {dimension_numbers = #tpu.dot_dimension_numbers<[2], [1], [1], [2], [0, 0, 0, 1, 1, 2], [0], [0]>} : vector<4x8x40xbf16>, vector<4x40x32xbf16>, vector<4x8x32xf32> -> vector<4x8x32xf32>
    "tpu.trace_stop"() : () -> ()
    %52 = vector.extract_strided_slice %27 {offsets = [0, 0, 32], sizes = [4, 8, 32], strides = [1, 1, 1]} : vector<4x8x128xf32> to vector<4x8x32xf32>
    %53 = arith.truncf %52 : vector<4x8x32xf32> to vector<4x8x32xbf16>
    %54 = vector.extract_strided_slice %29 {offsets = [0, 0, 32], sizes = [4, 40, 32], strides = [1, 1, 1]} : vector<4x40x128xf32> to vector<4x40x32xf32>
    %55 = arith.truncf %54 : vector<4x40x32xf32> to vector<4x40x32xbf16>
    %56 = vector.extract_strided_slice %30 {offsets = [0, 0, 32], sizes = [4, 40, 32], strides = [1, 1, 1]} : vector<4x40x128xf32> to vector<4x40x32xf32>
    %57 = arith.truncf %56 : vector<4x40x32xf32> to vector<4x40x32xbf16>
    "tpu.trace_start"() <{level = 10 : i32, message = "bqd,bkd->bqk"}> : () -> ()
    %cst_30 = arith.constant dense<0.000000e+00> : vector<4x8x40xf32>
    %58 = tpu.matmul %53, %55, %cst_30 {dimension_numbers = #tpu.dot_dimension_numbers<[2], [2], [1], [1], [0, 0, 0, 1, 1, 1], [0], [0]>} : vector<4x8x32xbf16>, vector<4x40x32xbf16>, vector<4x8x40xf32> -> vector<4x8x40xf32>
    "tpu.trace_stop"() : () -> ()
    %59 = arith.addf %58, %31 : vector<4x8x40xf32>
    %cst_31 = arith.constant dense<0xFF800000> : vector<4x8xf32>
    %60 = vector.multi_reduction <maximumf>, %59, %cst_31 [2] : vector<4x8x40xf32> to vector<4x8xf32>
    %61 = vector.shape_cast %60 : vector<4x8xf32> to vector<4x8x1xf32>
    %62 = vector.broadcast %61 : vector<4x8x1xf32> to vector<4x8x40xf32>
    %63 = arith.subf %59, %62 : vector<4x8x40xf32>
    %64 = math.exp %63 : vector<4x8x40xf32>
    %cst_32 = arith.constant dense<0.000000e+00> : vector<4x8xf32>
    %65 = vector.multi_reduction <add>, %64, %cst_32 [2] : vector<4x8x40xf32> to vector<4x8xf32>
    %66 = vector.shape_cast %65 : vector<4x8xf32> to vector<4x8x1xf32>
    %67 = tpu.reciprocal %66 {approx = true} : vector<4x8x1xf32> -> vector<4x8x1xf32>
    %68 = vector.broadcast %67 : vector<4x8x1xf32> to vector<4x8x40xf32>
    %69 = arith.mulf %64, %68 : vector<4x8x40xf32>
    %70 = arith.truncf %69 : vector<4x8x40xf32> to vector<4x8x40xbf16>
    "tpu.trace_start"() <{level = 10 : i32, message = "bqk,bkd->bqd"}> : () -> ()
    %cst_33 = arith.constant dense<0.000000e+00> : vector<4x8x32xf32>
    %71 = tpu.matmul %70, %57, %cst_33 {dimension_numbers = #tpu.dot_dimension_numbers<[2], [1], [1], [2], [0, 0, 0, 1, 1, 2], [0], [0]>} : vector<4x8x40xbf16>, vector<4x40x32xbf16>, vector<4x8x32xf32> -> vector<4x8x32xf32>
    "tpu.trace_stop"() : () -> ()
    %72 = vector.extract_strided_slice %27 {offsets = [0, 0, 64], sizes = [4, 8, 32], strides = [1, 1, 1]} : vector<4x8x128xf32> to vector<4x8x32xf32>
    %73 = arith.truncf %72 : vector<4x8x32xf32> to vector<4x8x32xbf16>
    %74 = vector.extract_strided_slice %29 {offsets = [0, 0, 64], sizes = [4, 40, 32], strides = [1, 1, 1]} : vector<4x40x128xf32> to vector<4x40x32xf32>
    %75 = arith.truncf %74 : vector<4x40x32xf32> to vector<4x40x32xbf16>
    %76 = vector.extract_strided_slice %30 {offsets = [0, 0, 64], sizes = [4, 40, 32], strides = [1, 1, 1]} : vector<4x40x128xf32> to vector<4x40x32xf32>
    %77 = arith.truncf %76 : vector<4x40x32xf32> to vector<4x40x32xbf16>
    "tpu.trace_start"() <{level = 10 : i32, message = "bqd,bkd->bqk"}> : () -> ()
    %cst_34 = arith.constant dense<0.000000e+00> : vector<4x8x40xf32>
    %78 = tpu.matmul %73, %75, %cst_34 {dimension_numbers = #tpu.dot_dimension_numbers<[2], [2], [1], [1], [0, 0, 0, 1, 1, 1], [0], [0]>} : vector<4x8x32xbf16>, vector<4x40x32xbf16>, vector<4x8x40xf32> -> vector<4x8x40xf32>
    "tpu.trace_stop"() : () -> ()
    %79 = arith.addf %78, %31 : vector<4x8x40xf32>
    %cst_35 = arith.constant dense<0xFF800000> : vector<4x8xf32>
    %80 = vector.multi_reduction <maximumf>, %79, %cst_35 [2] : vector<4x8x40xf32> to vector<4x8xf32>
    %81 = vector.shape_cast %80 : vector<4x8xf32> to vector<4x8x1xf32>
    %82 = vector.broadcast %81 : vector<4x8x1xf32> to vector<4x8x40xf32>
    %83 = arith.subf %79, %82 : vector<4x8x40xf32>
    %84 = math.exp %83 : vector<4x8x40xf32>
    %cst_36 = arith.constant dense<0.000000e+00> : vector<4x8xf32>
    %85 = vector.multi_reduction <add>, %84, %cst_36 [2] : vector<4x8x40xf32> to vector<4x8xf32>
    %86 = vector.shape_cast %85 : vector<4x8xf32> to vector<4x8x1xf32>
    %87 = tpu.reciprocal %86 {approx = true} : vector<4x8x1xf32> -> vector<4x8x1xf32>
    %88 = vector.broadcast %87 : vector<4x8x1xf32> to vector<4x8x40xf32>
    %89 = arith.mulf %84, %88 : vector<4x8x40xf32>
    %90 = arith.truncf %89 : vector<4x8x40xf32> to vector<4x8x40xbf16>
    "tpu.trace_start"() <{level = 10 : i32, message = "bqk,bkd->bqd"}> : () -> ()
    %cst_37 = arith.constant dense<0.000000e+00> : vector<4x8x32xf32>
    %91 = tpu.matmul %90, %77, %cst_37 {dimension_numbers = #tpu.dot_dimension_numbers<[2], [1], [1], [2], [0, 0, 0, 1, 1, 2], [0], [0]>} : vector<4x8x40xbf16>, vector<4x40x32xbf16>, vector<4x8x32xf32> -> vector<4x8x32xf32>
    "tpu.trace_stop"() : () -> ()
    %92 = vector.extract_strided_slice %27 {offsets = [0, 0, 96], sizes = [4, 8, 32], strides = [1, 1, 1]} : vector<4x8x128xf32> to vector<4x8x32xf32>
    %93 = arith.truncf %92 : vector<4x8x32xf32> to vector<4x8x32xbf16>
    %94 = vector.extract_strided_slice %29 {offsets = [0, 0, 96], sizes = [4, 40, 32], strides = [1, 1, 1]} : vector<4x40x128xf32> to vector<4x40x32xf32>
    %95 = arith.truncf %94 : vector<4x40x32xf32> to vector<4x40x32xbf16>
    %96 = vector.extract_strided_slice %30 {offsets = [0, 0, 96], sizes = [4, 40, 32], strides = [1, 1, 1]} : vector<4x40x128xf32> to vector<4x40x32xf32>
    %97 = arith.truncf %96 : vector<4x40x32xf32> to vector<4x40x32xbf16>
    "tpu.trace_start"() <{level = 10 : i32, message = "bqd,bkd->bqk"}> : () -> ()
    %cst_38 = arith.constant dense<0.000000e+00> : vector<4x8x40xf32>
    %98 = tpu.matmul %93, %95, %cst_38 {dimension_numbers = #tpu.dot_dimension_numbers<[2], [2], [1], [1], [0, 0, 0, 1, 1, 1], [0], [0]>} : vector<4x8x32xbf16>, vector<4x40x32xbf16>, vector<4x8x40xf32> -> vector<4x8x40xf32>
    "tpu.trace_stop"() : () -> ()
    %99 = arith.addf %98, %31 : vector<4x8x40xf32>
    %cst_39 = arith.constant dense<0xFF800000> : vector<4x8xf32>
    %100 = vector.multi_reduction <maximumf>, %99, %cst_39 [2] : vector<4x8x40xf32> to vector<4x8xf32>
    %101 = vector.shape_cast %100 : vector<4x8xf32> to vector<4x8x1xf32>
    %102 = vector.broadcast %101 : vector<4x8x1xf32> to vector<4x8x40xf32>
    %103 = arith.subf %99, %102 : vector<4x8x40xf32>
    %104 = math.exp %103 : vector<4x8x40xf32>
    %cst_40 = arith.constant dense<0.000000e+00> : vector<4x8xf32>
    %105 = vector.multi_reduction <add>, %104, %cst_40 [2] : vector<4x8x40xf32> to vector<4x8xf32>
    %106 = vector.shape_cast %105 : vector<4x8xf32> to vector<4x8x1xf32>
    %107 = tpu.reciprocal %106 {approx = true} : vector<4x8x1xf32> -> vector<4x8x1xf32>
    %108 = vector.broadcast %107 : vector<4x8x1xf32> to vector<4x8x40xf32>
    %109 = arith.mulf %104, %108 : vector<4x8x40xf32>
    %110 = arith.truncf %109 : vector<4x8x40xf32> to vector<4x8x40xbf16>
    "tpu.trace_start"() <{level = 10 : i32, message = "bqk,bkd->bqd"}> : () -> ()
    %cst_41 = arith.constant dense<0.000000e+00> : vector<4x8x32xf32>
    %111 = tpu.matmul %110, %97, %cst_41 {dimension_numbers = #tpu.dot_dimension_numbers<[2], [1], [1], [2], [0, 0, 0, 1, 1, 2], [0], [0]>} : vector<4x8x40xbf16>, vector<4x40x32xbf16>, vector<4x8x32xf32> -> vector<4x8x32xf32>
    "tpu.trace_stop"() : () -> ()
    %112 = tpu.concatenate %51, %71, %91, %111 in 2 : vector<4x8x32xf32>, vector<4x8x32xf32>, vector<4x8x32xf32>, vector<4x8x32xf32> -> vector<4x8x128xf32>
    %113 = vector.shape_cast %112 : vector<4x8x128xf32> to vector<32x128xf32>
    %114 = arith.truncf %113 : vector<32x128xf32> to vector<32x128xbf16>
    %c0_42 = arith.constant 0 : index
    %c0_43 = arith.constant 0 : index
    %115 = vector.load %arg8[%c0_42, %c0_43] : memref<128x128xbf16, #tpu.memory_space<vmem>>, vector<128x128xbf16>
    %cst_44 = arith.constant dense<0.000000e+00> : vector<32x128xf32>
    %116 = tpu.matmul %114, %115, %cst_44 {dimension_numbers = #tpu.dot_dimension_numbers<[1], [0], [0], [1], [0, 0, 1, 1], [], []>} : vector<32x128xbf16>, vector<128x128xbf16>, vector<32x128xf32> -> vector<32x128xf32>
    %117 = vector.broadcast %2 : vector<1x128xf32> to vector<32x128xf32>
    %118 = arith.addf %116, %117 : vector<32x128xf32>
    %119 = arith.addf %118, %9 : vector<32x128xf32>
    %cst_45 = arith.constant dense<0.000000e+00> : vector<32xf32>
    %120 = vector.multi_reduction <add>, %119, %cst_45 [1] : vector<32x128xf32> to vector<32xf32>
    %121 = vector.shape_cast %120 : vector<32xf32> to vector<32x1xf32>
    %cst_46 = arith.constant 1.280000e+02 : f32
    %122 = vector.broadcast %cst_46 : f32 to vector<32x1xf32>
    %123 = arith.divf %121, %122 : vector<32x1xf32>
    %124 = vector.broadcast %123 : vector<32x1xf32> to vector<32x128xf32>
    %125 = arith.subf %119, %124 : vector<32x128xf32>
    %126 = arith.mulf %125, %125 : vector<32x128xf32>
    %cst_47 = arith.constant dense<0.000000e+00> : vector<32xf32>
    %127 = vector.multi_reduction <add>, %126, %cst_47 [1] : vector<32x128xf32> to vector<32xf32>
    %128 = vector.shape_cast %127 : vector<32xf32> to vector<32x1xf32>
    %cst_48 = arith.constant 1.280000e+02 : f32
    %129 = vector.broadcast %cst_48 : f32 to vector<32x1xf32>
    %130 = arith.divf %128, %129 : vector<32x1xf32>
    %131 = vector.broadcast %123 : vector<32x1xf32> to vector<32x128xf32>
    %132 = arith.subf %119, %131 : vector<32x128xf32>
    %cst_49 = arith.constant 9.99999996E-13 : f32
    %133 = vector.broadcast %cst_49 : f32 to vector<32x1xf32>
    %134 = arith.addf %130, %133 : vector<32x1xf32>
    %135 = math.rsqrt %134 : vector<32x1xf32>
    %136 = vector.broadcast %135 : vector<32x1xf32> to vector<32x128xf32>
    %137 = arith.mulf %132, %136 : vector<32x128xf32>
    %138 = vector.broadcast %3 : vector<1x128xf32> to vector<32x128xf32>
    %139 = arith.mulf %137, %138 : vector<32x128xf32>
    %140 = vector.broadcast %4 : vector<1x128xf32> to vector<32x128xf32>
    %141 = arith.addf %139, %140 : vector<32x128xf32>
    %142 = arith.truncf %141 : vector<32x128xf32> to vector<32x128xbf16>
    %c0_50 = arith.constant 0 : index
    %c0_51 = arith.constant 0 : index
    %143 = vector.load %arg9[%c0_50, %c0_51] : memref<128x512xbf16, #tpu.memory_space<vmem>>, vector<128x512xbf16>
    %cst_52 = arith.constant dense<0.000000e+00> : vector<32x512xf32>
    %144 = tpu.matmul %142, %143, %cst_52 {dimension_numbers = #tpu.dot_dimension_numbers<[1], [0], [0], [1], [0, 0, 1, 1], [], []>} : vector<32x128xbf16>, vector<128x512xbf16>, vector<32x512xf32> -> vector<32x512xf32>
    %c0_53 = arith.constant 0 : index
    %c0_54 = arith.constant 0 : index
    %145 = vector.load %arg13[%c0_53, %c0_54] : memref<1x512xf32, #tpu.memory_space<vmem>>, vector<1x512xf32>
    %146 = vector.broadcast %145 : vector<1x512xf32> to vector<32x512xf32>
    %147 = arith.addf %144, %146 : vector<32x512xf32>
    %cst_55 = arith.constant 5.000000e-01 : f32
    %148 = vector.broadcast %cst_55 : f32 to vector<32x512xf32>
    %149 = arith.mulf %148, %147 : vector<32x512xf32>
    %cst_56 = arith.constant 0.707106769 : f32
    %150 = vector.broadcast %cst_56 : f32 to vector<32x512xf32>
    %151 = arith.mulf %147, %150 : vector<32x512xf32>
    %152 = math.erf %151 : vector<32x512xf32>
    %cst_57 = arith.constant 1.000000e+00 : f32
    %153 = vector.broadcast %cst_57 : f32 to vector<32x512xf32>
    %154 = arith.addf %153, %152 : vector<32x512xf32>
    %155 = arith.mulf %149, %154 : vector<32x512xf32>
    %156 = arith.truncf %155 : vector<32x512xf32> to vector<32x512xbf16>
    %c0_58 = arith.constant 0 : index
    %c0_59 = arith.constant 0 : index
    %157 = vector.load %arg10[%c0_58, %c0_59] : memref<512x128xbf16, #tpu.memory_space<vmem>>, vector<512x128xbf16>
    %cst_60 = arith.constant dense<0.000000e+00> : vector<32x128xf32>
    %158 = tpu.matmul %156, %157, %cst_60 {dimension_numbers = #tpu.dot_dimension_numbers<[1], [0], [0], [1], [0, 0, 1, 1], [], []>} : vector<32x512xbf16>, vector<512x128xbf16>, vector<32x128xf32> -> vector<32x128xf32>
    %159 = vector.broadcast %5 : vector<1x128xf32> to vector<32x128xf32>
    %160 = arith.addf %158, %159 : vector<32x128xf32>
    %161 = arith.addf %160, %141 : vector<32x128xf32>
    %cst_61 = arith.constant dense<0.000000e+00> : vector<32xf32>
    %162 = vector.multi_reduction <add>, %161, %cst_61 [1] : vector<32x128xf32> to vector<32xf32>
    %163 = vector.shape_cast %162 : vector<32xf32> to vector<32x1xf32>
    %cst_62 = arith.constant 1.280000e+02 : f32
    %164 = vector.broadcast %cst_62 : f32 to vector<32x1xf32>
    %165 = arith.divf %163, %164 : vector<32x1xf32>
    %166 = vector.broadcast %165 : vector<32x1xf32> to vector<32x128xf32>
    %167 = arith.subf %161, %166 : vector<32x128xf32>
    %168 = arith.mulf %167, %167 : vector<32x128xf32>
    %cst_63 = arith.constant dense<0.000000e+00> : vector<32xf32>
    %169 = vector.multi_reduction <add>, %168, %cst_63 [1] : vector<32x128xf32> to vector<32xf32>
    %170 = vector.shape_cast %169 : vector<32xf32> to vector<32x1xf32>
    %cst_64 = arith.constant 1.280000e+02 : f32
    %171 = vector.broadcast %cst_64 : f32 to vector<32x1xf32>
    %172 = arith.divf %170, %171 : vector<32x1xf32>
    %173 = vector.broadcast %165 : vector<32x1xf32> to vector<32x128xf32>
    %174 = arith.subf %161, %173 : vector<32x128xf32>
    %cst_65 = arith.constant 9.99999996E-13 : f32
    %175 = vector.broadcast %cst_65 : f32 to vector<32x1xf32>
    %176 = arith.addf %172, %175 : vector<32x1xf32>
    %177 = math.rsqrt %176 : vector<32x1xf32>
    %178 = vector.broadcast %177 : vector<32x1xf32> to vector<32x128xf32>
    %179 = arith.mulf %174, %178 : vector<32x128xf32>
    %180 = vector.broadcast %6 : vector<1x128xf32> to vector<32x128xf32>
    %181 = arith.mulf %179, %180 : vector<32x128xf32>
    %182 = vector.broadcast %7 : vector<1x128xf32> to vector<32x128xf32>
    %183 = arith.addf %181, %182 : vector<32x128xf32>
    %184 = vector.shape_cast %183 : vector<32x128xf32> to vector<4x8x128xf32>
    %c0_66 = arith.constant 0 : index
    %c0_67 = arith.constant 0 : index
    %c0_68 = arith.constant 0 : index
    %185 = vector.load %arg14[%c0_66, %c0_67, %c0_68] : memref<4x8x128xf32, #tpu.memory_space<vmem>>, vector<4x8x128xf32>
    tpu.vector_store %arg14[%c0_66, %c0_67, %c0_68], %184 {strides = array<i32>} : memref<4x8x128xf32, #tpu.memory_space<vmem>>, vector<4x8x128xf32>,
    return
  }
  func.func @transform_0(%arg0: i32) -> (i32, i32, i32) {
    %c0_i32 = arith.constant 0 : i32
    %c0_i32_0 = arith.constant 0 : i32
    %c0_i32_1 = arith.constant 0 : i32
    return %arg0, %c0_i32, %c0_i32_0 : i32, i32, i32
  }
  func.func @transform_1(%arg0: i32) -> (i32, i32, i32) {
    %c0_i32 = arith.constant 0 : i32
    %c0_i32_0 = arith.constant 0 : i32
    %c0_i32_1 = arith.constant 0 : i32
    return %arg0, %c0_i32, %c0_i32_0 : i32, i32, i32
  }
  func.func @transform_2(%arg0: i32) -> (i32, i32, i32) {
    %c0_i32 = arith.constant 0 : i32
    %c0_i32_0 = arith.constant 0 : i32
    %c0_i32_1 = arith.constant 0 : i32
    return %arg0, %c0_i32, %c0_i32_0 : i32, i32, i32
  }
  func.func @transform_3(%arg0: i32) -> (i32, i32, i32) {
    %c0_i32 = arith.constant 0 : i32
    %c0_i32_0 = arith.constant 0 : i32
    %c0_i32_1 = arith.constant 0 : i32
    return %arg0, %c0_i32, %c0_i32_0 : i32, i32, i32
  }
  func.func @transform_4(%arg0: i32) -> (i32, i32, i32) {
    %c0_i32 = arith.constant 0 : i32
    %c0_i32_0 = arith.constant 0 : i32
    %c0_i32_1 = arith.constant 0 : i32
    return %arg0, %c0_i32, %c0_i32_0 : i32, i32, i32
  }
  func.func @transform_5(%arg0: i32) -> (i32, i32) {
    %c0_i32 = arith.constant 0 : i32
    %c0_i32_0 = arith.constant 0 : i32
    %c0_i32_1 = arith.constant 0 : i32
    return %c0_i32, %c0_i32_0 : i32, i32
  }
  func.func @transform_6(%arg0: i32) -> (i32, i32) {
    %c0_i32 = arith.constant 0 : i32
    %c0_i32_0 = arith.constant 0 : i32
    %c0_i32_1 = arith.constant 0 : i32
    return %c0_i32, %c0_i32_0 : i32, i32
  }
  func.func @transform_7(%arg0: i32) -> (i32, i32) {
    %c0_i32 = arith.constant 0 : i32
    %c0_i32_0 = arith.constant 0 : i32
    %c0_i32_1 = arith.constant 0 : i32
    return %c0_i32, %c0_i32_0 : i32, i32
  }
  func.func @transform_8(%arg0: i32) -> (i32, i32) {
    %c0_i32 = arith.constant 0 : i32
    %c0_i32_0 = arith.constant 0 : i32
    %c0_i32_1 = arith.constant 0 : i32
    return %c0_i32, %c0_i32_0 : i32, i32
  }
  func.func @transform_9(%arg0: i32) -> (i32, i32) {
    %c0_i32 = arith.constant 0 : i32
    %c0_i32_0 = arith.constant 0 : i32
    %c0_i32_1 = arith.constant 0 : i32
    return %c0_i32, %c0_i32_0 : i32, i32
  }
  func.func @transform_10(%arg0: i32) -> (i32, i32) {
    %c0_i32 = arith.constant 0 : i32
    %c0_i32_0 = arith.constant 0 : i32
    %c0_i32_1 = arith.constant 0 : i32
    return %c0_i32, %c0_i32_0 : i32, i32
  }
  func.func @transform_11(%arg0: i32) -> (i32, i32) {
    %c0_i32 = arith.constant 0 : i32
    %c0_i32_0 = arith.constant 0 : i32
    %c0_i32_1 = arith.constant 0 : i32
    return %c0_i32, %c0_i32_0 : i32, i32
  }
  func.func @transform_12(%arg0: i32) -> (i32, i32) {
    %c0_i32 = arith.constant 0 : i32
    %c0_i32_0 = arith.constant 0 : i32
    %c0_i32_1 = arith.constant 0 : i32
    return %c0_i32, %c0_i32_0 : i32, i32
  }
  func.func @transform_13(%arg0: i32) -> (i32, i32, i32) {
    %c0_i32 = arith.constant 0 : i32
    %c0_i32_0 = arith.constant 0 : i32
    %c0_i32_1 = arith.constant 0 : i32
    return %arg0, %c0_i32, %c0_i32_0 : i32, i32, i32
  }
}

</mosaic_0001>

<llo_original>
// kernel: bert_generation_layer.1
$region0: #{bert_generation_layer.1}
  #allocation0 [shape = 'u32[]', space=smem, size = 0x4, offset = 0x4, fixed_abs, tag = 'smem constant byte address 0x4 - core index']
  #allocation1 [shape = 'u32[72,128]{1,0:T(1,128)}', space=vmem, size = 0x9000, scoped, tag = 'internal scratch']
  %s0 = inlined_call_operand.vmem [shape: f32[8,8,128], index: 0, kind: input, shape index: {}]
  %s1 = inlined_call_operand.vmem [shape: f32[8,16,128], index: 1, kind: input, shape index: {}]
  %s2 = inlined_call_operand.vmem [shape: f32[8,8,128], index: 2, kind: input, shape index: {}]
  %s3 = inlined_call_operand.vmem [shape: f32[8,8,128], index: 3, kind: input, shape index: {}]
  %s4 = inlined_call_operand.vmem [shape: f32[8,8,40], index: 4, kind: input, shape index: {}]
  %s5 = inlined_call_operand.vmem [shape: bf16[128,128], index: 5, kind: input, shape index: {}]
  %s6 = inlined_call_operand.vmem [shape: bf16[128,256], index: 6, kind: input, shape index: {}]
  %s7 = inlined_call_operand.vmem [shape: bf16[128,128], index: 7, kind: input, shape index: {}]
  %s8 = inlined_call_operand.vmem [shape: bf16[128,512], index: 8, kind: input, shape index: {}]
  %s9 = inlined_call_operand.vmem [shape: bf16[512,128], index: 9, kind: input, shape index: {}]
  %s10 = inlined_call_operand.vmem [shape: f32[8,128], index: 10, kind: input, shape index: {}]
  %s11 = inlined_call_operand.vmem [shape: f32[1,256], index: 11, kind: input, shape index: {}]
  %s12 = inlined_call_operand.vmem [shape: f32[1,512], index: 12, kind: input, shape index: {}]
  %s13 = inlined_call_operand.hbm [shape: f32[8,8,128], index: 13, kind: output, shape index: {}]
  %s14 = sld [smem:[#allocation0]]
  $region85: #{bert_generation_layer.1} parent=0
    _
  %s16 = ssub.s32 1, %s14
  %s17 = scalar_select 0, %s16, %s14
  $region1: #{bert_generation_layer.1} parent=0
    #allocation2 [shape = 'u8[32768]{0}', space=vmem, size = 0x8000, scoped, tag = 'output window, operand 0']
    #allocation3 [shape = 's32[2]{0}', space=sflag, size = 0x8, scoped, tag = 'scoped memory for bert_generation_layer.1']
    %18 = vsyncpa [#allocation3], 0
    %s19 = scalar_lea.sflag [#allocation3], 1
    %20 = vsyncpa %s19, 0
    loop: start=0, step=1, limit=4
    $region2: #{bert_generation_layer.1} parent=1 // loop_pre_header
      _
    $region3: #{bert_generation_layer.1} parent=1 // loop_header
      %s22 = sphi 0, %s26
      %p23 = scmp.ge.s32.totalorder %s22, 4
      %s32 = sphi 0, %s34
      %s35 = sphi 0, %s32
      %s36 = sphi 0, %s35
      %s52 = sphi 0, %s36
      %s58 = sphi 0, %s60
      %s61 = sphi 0, %s58
      %s62 = sphi 0, %s61
      %s78 = sphi 0, %s62
      %s84 = sphi 0, %s86
      %s87 = sphi 0, %s84
      %s88 = sphi 0, %s87
      %s104 = sphi 0, %s88
      %s110 = sphi 0, %s112
      %s113 = sphi 0, %s110
      %s114 = sphi 0, %s113
      %s130 = sphi 0, %s114
      %s136 = sphi 0, %s138
      %s139 = sphi 0, %s136
      %s140 = sphi 0, %s139
      %s156 = sphi 0, %s140
      %s160 = sphi 0, %s160
      %s162 = sphi 0, %s160
      %s163 = sphi 0, %s162
      %s177 = sphi 0, %s163
      %s181 = sphi 0, %s181
      %s183 = sphi 0, %s181
      %s184 = sphi 0, %s183
      %s198 = sphi 0, %s184
      %s202 = sphi 0, %s202
      %s204 = sphi 0, %s202
      %s205 = sphi 0, %s204
      %s219 = sphi 0, %s205
      %s223 = sphi 0, %s223
      %s225 = sphi 0, %s223
      %s226 = sphi 0, %s225
      %s240 = sphi 0, %s226
      %s244 = sphi 0, %s244
      %s246 = sphi 0, %s244
      %s247 = sphi 0, %s246
      %s261 = sphi 0, %s247
      %s265 = sphi 0, %s265
      %s267 = sphi 0, %s265
      %s268 = sphi 0, %s267
      %s282 = sphi 0, %s268
      %s286 = sphi 0, %s286
      %s288 = sphi 0, %s286
      %s289 = sphi 0, %s288
      %s303 = sphi 0, %s289
      %s307 = sphi 0, %s307
      %s309 = sphi 0, %s307
      %s310 = sphi 0, %s309
      %s324 = sphi 0, %s310
      %s330 = sphi 0, %s332
      %s333 = sphi 0, %s330
      %s334 = sphi 0, %s333
      %s350 = sphi 0, %s334
    $region4: #{bert_generation_layer.1} parent=1 // loop_header_branch
      %25 = sbr.rel (%p23) target = $region8
    $region5: #{bert_generation_layer.1} parent=1 // loop_body
      %s27 = ssub.s32 %s22, 1
      %s28 = ssub.s32 %s22, 2
      %s29 = sadd.s32 %s22, 1
      %s30 = ssub.s32 %s22, %s29
      %p31 = scmp.eq.s32.totalorder %s30, 0
      %s33 = sadd.s32 %s32, 1
      %s34 = scalar_select %p31, %s32, %s33
      %p37 = pneg %p31
      %p38 = scmp.eq.s32.totalorder %s22, 1
      %p39 = por %p37, %p38
      %p40 = scmp.ne.s32.totalorder %s32, %s35
      %p41 = scmp.eq.s32.totalorder %s22, 0
      %p42 = por %p40, %p41
      %p43 = scmp.ne.s32.totalorder %s32, %s35
      %p44 = scmp.eq.s32.totalorder %s27, 1
      %p45 = por %p43, %p44
      %p46 = scmp.ne.s32.totalorder %s35, %s36
      %p47 = scmp.eq.s32.totalorder %s27, 0
      %p48 = por %p46, %p47
      %p49 = scmp.ne.s32.totalorder %s35, %s36
      %p50 = scmp.eq.s32.totalorder %s28, 1
      %p51 = por %p49, %p50
      %p53 = scmp.ne.s32.totalorder %s36, %s52
      %p54 = scmp.eq.s32.totalorder %s28, 0
      %p55 = por %p53, %p54
      %s56 = ssub.s32 %s22, %s29
      %p57 = scmp.eq.s32.totalorder %s56, 0
      %s59 = sadd.s32 %s58, 1
      %s60 = scalar_select %p57, %s58, %s59
      %p63 = pneg %p57
      %p64 = scmp.eq.s32.totalorder %s22, 1
      %p65 = por %p63, %p64
      %p66 = scmp.ne.s32.totalorder %s58, %s61
      %p67 = scmp.eq.s32.totalorder %s22, 0
      %p68 = por %p66, %p67
      %p69 = scmp.ne.s32.totalorder %s58, %s61
      %p70 = scmp.eq.s32.totalorder %s27, 1
      %p71 = por %p69, %p70
      %p72 = scmp.ne.s32.totalorder %s61, %s62
      %p73 = scmp.eq.s32.totalorder %s27, 0
      %p74 = por %p72, %p73
      %p75 = scmp.ne.s32.totalorder %s61, %s62
      %p76 = scmp.eq.s32.totalorder %s28, 1
      %p77 = por %p75, %p76
      %p79 = scmp.ne.s32.totalorder %s62, %s78
      %p80 = scmp.eq.s32.totalorder %s28, 0
      %p81 = por %p79, %p80
      %s82 = ssub.s32 %s22, %s29
      %p83 = scmp.eq.s32.totalorder %s82, 0
      %s85 = sadd.s32 %s84, 1
      %s86 = scalar_select %p83, %s84, %s85
      %p89 = pneg %p83
      %p90 = scmp.eq.s32.totalorder %s22, 1
      %p91 = por %p89, %p90
      %p92 = scmp.ne.s32.totalorder %s84, %s87
      %p93 = scmp.eq.s32.totalorder %s22, 0
      %p94 = por %p92, %p93
      %p95 = scmp.ne.s32.totalorder %s84, %s87
      %p96 = scmp.eq.s32.totalorder %s27, 1
      %p97 = por %p95, %p96
      %p98 = scmp.ne.s32.totalorder %s87, %s88
      %p99 = scmp.eq.s32.totalorder %s27, 0
      %p100 = por %p98, %p99
      %p101 = scmp.ne.s32.totalorder %s87, %s88
      %p102 = scmp.eq.s32.totalorder %s28, 1
      %p103 = por %p101, %p102
      %p105 = scmp.ne.s32.totalorder %s88, %s104
      %p106 = scmp.eq.s32.totalorder %s28, 0
      %p107 = por %p105, %p106
      %s108 = ssub.s32 %s22, %s29
      %p109 = scmp.eq.s32.totalorder %s108, 0
      %s111 = sadd.s32 %s110, 1
      %s112 = scalar_select %p109, %s110, %s111
      %p115 = pneg %p109
      %p116 = scmp.eq.s32.totalorder %s22, 1
      %p117 = por %p115, %p116
      %p118 = scmp.ne.s32.totalorder %s110, %s113
      %p119 = scmp.eq.s32.totalorder %s22, 0
      %p120 = por %p118, %p119
      %p121 = scmp.ne.s32.totalorder %s110, %s113
      %p122 = scmp.eq.s32.totalorder %s27, 1
      %p123 = por %p121, %p122
      %p124 = scmp.ne.s32.totalorder %s113, %s114
      %p125 = scmp.eq.s32.totalorder %s27, 0
      %p126 = por %p124, %p125
      %p127 = scmp.ne.s32.totalorder %s113, %s114
      %p128 = scmp.eq.s32.totalorder %s28, 1
      %p129 = por %p127, %p128
      %p131 = scmp.ne.s32.totalorder %s114, %s130
      %p132 = scmp.eq.s32.totalorder %s28, 0
      %p133 = por %p131, %p132
      %s134 = ssub.s32 %s22, %s29
      %p135 = scmp.eq.s32.totalorder %s134, 0
      %s137 = sadd.s32 %s136, 1
      %s138 = scalar_select %p135, %s136, %s137
      %p141 = pneg %p135
      %p142 = scmp.eq.s32.totalorder %s22, 1
      %p143 = por %p141, %p142
      %p144 = scmp.ne.s32.totalorder %s136, %s139
      %p145 = scmp.eq.s32.totalorder %s22, 0
      %p146 = por %p144, %p145
      %p147 = scmp.ne.s32.totalorder %s136, %s139
      %p148 = scmp.eq.s32.totalorder %s27, 1
      %p149 = por %p147, %p148
      %p150 = scmp.ne.s32.totalorder %s139, %s140
      %p151 = scmp.eq.s32.totalorder %s27, 0
      %p152 = por %p150, %p151
      %p153 = scmp.ne.s32.totalorder %s139, %s140
      %p154 = scmp.eq.s32.totalorder %s28, 1
      %p155 = por %p153, %p154
      %p157 = scmp.ne.s32.totalorder %s140, %s156
      %p158 = scmp.eq.s32.totalorder %s28, 0
      %p159 = por %p157, %p158
      %s161 = sadd.s32 %s160, 1
      %p164 = scmp.eq.s32.totalorder %s22, 1
      %p165 = scmp.ne.s32.totalorder %s160, %s162
      %p166 = scmp.eq.s32.totalorder %s22, 0
      %p167 = por %p165, %p166
      %p168 = scmp.ne.s32.totalorder %s160, %s162
      %p169 = scmp.eq.s32.totalorder %s27, 1
      %p170 = por %p168, %p169
      %p171 = scmp.ne.s32.totalorder %s162, %s163
      %p172 = scmp.eq.s32.totalorder %s27, 0
      %p173 = por %p171, %p172
      %p174 = scmp.ne.s32.totalorder %s162, %s163
      %p175 = scmp.eq.s32.totalorder %s28, 1
      %p176 = por %p174, %p175
      %p178 = scmp.ne.s32.totalorder %s163, %s177
      %p179 = scmp.eq.s32.totalorder %s28, 0
      %p180 = por %p178, %p179
      %s182 = sadd.s32 %s181, 1
      %p185 = scmp.eq.s32.totalorder %s22, 1
      %p186 = scmp.ne.s32.totalorder %s181, %s183
      %p187 = scmp.eq.s32.totalorder %s22, 0
      %p188 = por %p186, %p187
      %p189 = scmp.ne.s32.totalorder %s181, %s183
      %p190 = scmp.eq.s32.totalorder %s27, 1
      %p191 = por %p189, %p190
      %p192 = scmp.ne.s32.totalorder %s183, %s184
      %p193 = scmp.eq.s32.totalorder %s27, 0
      %p194 = por %p192, %p193
      %p195 = scmp.ne.s32.totalorder %s183, %s184
      %p196 = scmp.eq.s32.totalorder %s28, 1
      %p197 = por %p195, %p196
      %p199 = scmp.ne.s32.totalorder %s184, %s198
      %p200 = scmp.eq.s32.totalorder %s28, 0
      %p201 = por %p199, %p200
      %s203 = sadd.s32 %s202, 1
      %p206 = scmp.eq.s32.totalorder %s22, 1
      %p207 = scmp.ne.s32.totalorder %s202, %s204
      %p208 = scmp.eq.s32.totalorder %s22, 0
      %p209 = por %p207, %p208
      %p210 = scmp.ne.s32.totalorder %s202, %s204
      %p211 = scmp.eq.s32.totalorder %s27, 1
      %p212 = por %p210, %p211
      %p213 = scmp.ne.s32.totalorder %s204, %s205
      %p214 = scmp.eq.s32.totalorder %s27, 0
      %p215 = por %p213, %p214
      %p216 = scmp.ne.s32.totalorder %s204, %s205
      %p217 = scmp.eq.s32.totalorder %s28, 1
      %p218 = por %p216, %p217
      %p220 = scmp.ne.s32.totalorder %s205, %s219
      %p221 = scmp.eq.s32.totalorder %s28, 0
      %p222 = por %p220, %p221
      %s224 = sadd.s32 %s223, 1
      %p227 = scmp.eq.s32.totalorder %s22, 1
      %p228 = scmp.ne.s32.totalorder %s223, %s225
      %p229 = scmp.eq.s32.totalorder %s22, 0
      %p230 = por %p228, %p229
      %p231 = scmp.ne.s32.totalorder %s223, %s225
      %p232 = scmp.eq.s32.totalorder %s27, 1
      %p233 = por %p231, %p232
      %p234 = scmp.ne.s32.totalorder %s225, %s226
      %p235 = scmp.eq.s32.totalorder %s27, 0
      %p236 = por %p234, %p235
      %p237 = scmp.ne.s32.totalorder %s225, %s226
      %p238 = scmp.eq.s32.totalorder %s28, 1
      %p239 = por %p237, %p238
      %p241 = scmp.ne.s32.totalorder %s226, %s240
      %p242 = scmp.eq.s32.totalorder %s28, 0
      %p243 = por %p241, %p242
      %s245 = sadd.s32 %s244, 1
      %p248 = scmp.eq.s32.totalorder %s22, 1
      %p249 = scmp.ne.s32.totalorder %s244, %s246
      %p250 = scmp.eq.s32.totalorder %s22, 0
      %p251 = por %p249, %p250
      %p252 = scmp.ne.s32.totalorder %s244, %s246
      %p253 = scmp.eq.s32.totalorder %s27, 1
      %p254 = por %p252, %p253
      %p255 = scmp.ne.s32.totalorder %s246, %s247
      %p256 = scmp.eq.s32.totalorder %s27, 0
      %p257 = por %p255, %p256
      %p258 = scmp.ne.s32.totalorder %s246, %s247
      %p259 = scmp.eq.s32.totalorder %s28, 1
      %p260 = por %p258, %p259
      %p262 = scmp.ne.s32.totalorder %s247, %s261
      %p263 = scmp.eq.s32.totalorder %s28, 0
      %p264 = por %p262, %p263
      %s266 = sadd.s32 %s265, 1
      %p269 = scmp.eq.s32.totalorder %s22, 1
      %p270 = scmp.ne.s32.totalorder %s265, %s267
      %p271 = scmp.eq.s32.totalorder %s22, 0
      %p272 = por %p270, %p271
      %p273 = scmp.ne.s32.totalorder %s265, %s267
      %p274 = scmp.eq.s32.totalorder %s27, 1
      %p275 = por %p273, %p274
      %p276 = scmp.ne.s32.totalorder %s267, %s268
      %p277 = scmp.eq.s32.totalorder %s27, 0
      %p278 = por %p276, %p277
      %p279 = scmp.ne.s32.totalorder %s267, %s268
      %p280 = scmp.eq.s32.totalorder %s28, 1
      %p281 = por %p279, %p280
      %p283 = scmp.ne.s32.totalorder %s268, %s282
      %p284 = scmp.eq.s32.totalorder %s28, 0
      %p285 = por %p283, %p284
      %s287 = sadd.s32 %s286, 1
      %p290 = scmp.eq.s32.totalorder %s22, 1
      %p291 = scmp.ne.s32.totalorder %s286, %s288
      %p292 = scmp.eq.s32.totalorder %s22, 0
      %p293 = por %p291, %p292
      %p294 = scmp.ne.s32.totalorder %s286, %s288
      %p295 = scmp.eq.s32.totalorder %s27, 1
      %p296 = por %p294, %p295
      %p297 = scmp.ne.s32.totalorder %s288, %s289
      %p298 = scmp.eq.s32.totalorder %s27, 0
      %p299 = por %p297, %p298
      %p300 = scmp.ne.s32.totalorder %s288, %s289
      %p301 = scmp.eq.s32.totalorder %s28, 1
      %p302 = por %p300, %p301
      %p304 = scmp.ne.s32.totalorder %s289, %s303
      %p305 = scmp.eq.s32.totalorder %s28, 0
      %p306 = por %p304, %p305
      %s308 = sadd.s32 %s307, 1
      %p311 = scmp.eq.s32.totalorder %s22, 1
      %p312 = scmp.ne.s32.totalorder %s307, %s309
      %p313 = scmp.eq.s32.totalorder %s22, 0
      %p314 = por %p312, %p313
      %p315 = scmp.ne.s32.totalorder %s307, %s309
      %p316 = scmp.eq.s32.totalorder %s27, 1
      %p317 = por %p315, %p316
      %p318 = scmp.ne.s32.totalorder %s309, %s310
      %p319 = scmp.eq.s32.totalorder %s27, 0
      %p320 = por %p318, %p319
      %p321 = scmp.ne.s32.totalorder %s309, %s310
      %p322 = scmp.eq.s32.totalorder %s28, 1
      %p323 = por %p321, %p322
      %p325 = scmp.ne.s32.totalorder %s310, %s324
      %p326 = scmp.eq.s32.totalorder %s28, 0
      %p327 = por %p325, %p326
      %s328 = ssub.s32 %s22, %s29
      %p329 = scmp.eq.s32.totalorder %s328, 0
      %s331 = sadd.s32 %s330, 1
      %s332 = scalar_select %p329, %s330, %s331
      %p335 = pneg %p329
      %p336 = scmp.eq.s32.totalorder %s22, 1
      %p337 = por %p335, %p336
      %p338 = scmp.ne.s32.totalorder %s330, %s333
      %p339 = scmp.eq.s32.totalorder %s22, 0
      %p340 = por %p338, %p339
      %p341 = scmp.ne.s32.totalorder %s330, %s333
      %p342 = scmp.eq.s32.totalorder %s27, 1
      %p343 = por %p341, %p342
      %p344 = scmp.ne.s32.totalorder %s333, %s334
      %p345 = scmp.eq.s32.totalorder %s27, 0
      %p346 = por %p344, %p345
      %p347 = scmp.ne.s32.totalorder %s333, %s334
      %p348 = scmp.eq.s32.totalorder %s28, 1
      %p349 = por %p347, %p348
      %p351 = scmp.ne.s32.totalorder %s334, %s350
      %p352 = scmp.eq.s32.totalorder %s28, 0
      %p353 = por %p351, %p352
      %p354 = scmp.le.s32.totalorder 1, %s22
      %p355 = scmp.lt.s32.totalorder %s22, 3
      %p356 = pnand %p354, %p355
      %p357 = pneg %p356
      // Predicated region
      $region9: #{bert_generation_layer.1} parent=5 // pred_check
        _
      $region10: #{bert_generation_layer.1} parent=5 // pred_check_branch
        %359 = sbr.rel (%p356) target = $region12
      $region11: #{bert_generation_layer.1} parent=5 // pred_region
        %s360 = ssub.s32 %s22, 1
        // Predicated region
        $region13: #{bert_generation_layer.1} parent=11 // pred_check
          %p361 = pneg %p173
        $region14: #{bert_generation_layer.1} parent=11 // pred_check_branch
          %363 = sbr.rel (%p361) target = $region16
        $region15: #{bert_generation_layer.1} parent=11 // pred_region
          _
        $region16: #{bert_generation_layer.1} parent=11 // pred_fallthru
          _
        // Predicated region
        $region17: #{bert_generation_layer.1} parent=11 // pred_check
          %p364 = pneg %p194
        $region18: #{bert_generation_layer.1} parent=11 // pred_check_branch
          %366 = sbr.rel (%p364) target = $region20
        $region19: #{bert_generation_layer.1} parent=11 // pred_region
          _
        $region20: #{bert_generation_layer.1} parent=11 // pred_fallthru
          _
        // Predicated region
        $region21: #{bert_generation_layer.1} parent=11 // pred_check
          %p367 = pneg %p215
        $region22: #{bert_generation_layer.1} parent=11 // pred_check_branch
          %369 = sbr.rel (%p367) target = $region24
        $region23: #{bert_generation_layer.1} parent=11 // pred_region
          _
        $region24: #{bert_generation_layer.1} parent=11 // pred_fallthru
          _
        // Predicated region
        $region25: #{bert_generation_layer.1} parent=11 // pred_check
          %p370 = pneg %p236
        $region26: #{bert_generation_layer.1} parent=11 // pred_check_branch
          %372 = sbr.rel (%p370) target = $region28
        $region27: #{bert_generation_layer.1} parent=11 // pred_region
          _
        $region28: #{bert_generation_layer.1} parent=11 // pred_fallthru
          _
        // Predicated region
        $region29: #{bert_generation_layer.1} parent=11 // pred_check
          %p373 = pneg %p257
        $region30: #{bert_generation_layer.1} parent=11 // pred_check_branch
          %375 = sbr.rel (%p373) target = $region32
        $region31: #{bert_generation_layer.1} parent=11 // pred_region
          _
        $region32: #{bert_generation_layer.1} parent=11 // pred_fallthru
          _
        // Predicated region
        $region33: #{bert_generation_layer.1} parent=11 // pred_check
          %p376 = pneg %p278
        $region34: #{bert_generation_layer.1} parent=11 // pred_check_branch
          %378 = sbr.rel (%p376) target = $region36
        $region35: #{bert_generation_layer.1} parent=11 // pred_region
          _
        $region36: #{bert_generation_layer.1} parent=11 // pred_fallthru
          _
        // Predicated region
        $region37: #{bert_generation_layer.1} parent=11 // pred_check
          %p379 = pneg %p299
        $region38: #{bert_generation_layer.1} parent=11 // pred_check_branch
          %381 = sbr.rel (%p379) target = $region40
        $region39: #{bert_generation_layer.1} parent=11 // pred_region
          _
        $region40: #{bert_generation_layer.1} parent=11 // pred_fallthru
          _
        // Predicated region
        $region41: #{bert_generation_layer.1} parent=11 // pred_check
          %p382 = pneg %p320
        $region42: #{bert_generation_layer.1} parent=11 // pred_check_branch
          %384 = sbr.rel (%p382) target = $region44
        $region43: #{bert_generation_layer.1} parent=11 // pred_region
          _
        $region44: #{bert_generation_layer.1} parent=11 // pred_fallthru
          _
      $region12: #{bert_generation_layer.1} parent=5 // pred_fallthru
        _
      %p385 = scmp.lt.s32.totalorder %s22, 2
      // Predicated region
      $region45: #{bert_generation_layer.1} parent=5 // pred_check
        %p386 = pneg %p385
      $region46: #{bert_generation_layer.1} parent=5 // pred_check_branch
        %388 = sbr.rel (%p386) target = $region48
      $region47: #{bert_generation_layer.1} parent=5 // pred_region
        // Predicated region
        $region49: #{bert_generation_layer.1} parent=47 // pred_check
          %p389 = pneg %p42
        $region50: #{bert_generation_layer.1} parent=47 // pred_check_branch
          %391 = sbr.rel (%p389) target = $region52
        $region51: #{bert_generation_layer.1} parent=47 // pred_region
          %s392 = smul.u32 4, %s22
          %p393 = scmp.lt.s32.totalorder %s392, 7
          %s394 = scalar_select %p393, %s392, 7
          %s395 = smul.addr %s394, 8
          %s396 = scalar_lea.vmem %s0, %s395
          %s397 = smul.u32 4, %s22
        $region52: #{bert_generation_layer.1} parent=47 // pred_fallthru
          _
        // Predicated region
        $region53: #{bert_generation_layer.1} parent=47 // pred_check
          %p398 = pneg %p68
        $region54: #{bert_generation_layer.1} parent=47 // pred_check_branch
          %400 = sbr.rel (%p398) target = $region56
        $region55: #{bert_generation_layer.1} parent=47 // pred_region
          %s401 = smul.u32 4, %s22
          %p402 = scmp.lt.s32.totalorder %s401, 7
          %s403 = scalar_select %p402, %s401, 7
          %s404 = smul.addr %s403, 2
          %s405 = smul.addr %s404, 8
          %s406 = scalar_lea.vmem %s1, %s405
          %s407 = smul.u32 4, %s22
        $region56: #{bert_generation_layer.1} parent=47 // pred_fallthru
          _
        // Predicated region
        $region57: #{bert_generation_layer.1} parent=47 // pred_check
          %p408 = pneg %p94
        $region58: #{bert_generation_layer.1} parent=47 // pred_check_branch
          %410 = sbr.rel (%p408) target = $region60
        $region59: #{bert_generation_layer.1} parent=47 // pred_region
          %s411 = smul.u32 4, %s22
          %p412 = scmp.lt.s32.totalorder %s411, 7
          %s413 = scalar_select %p412, %s411, 7
          %s414 = smul.addr %s413, 8
          %s415 = scalar_lea.vmem %s2, %s414
          %s416 = smul.u32 4, %s22
        $region60: #{bert_generation_layer.1} parent=47 // pred_fallthru
          _
        // Predicated region
        $region61: #{bert_generation_layer.1} parent=47 // pred_check
          %p417 = pneg %p120
        $region62: #{bert_generation_layer.1} parent=47 // pred_check_branch
          %419 = sbr.rel (%p417) target = $region64
        $region63: #{bert_generation_layer.1} parent=47 // pred_region
          %s420 = smul.u32 4, %s22
          %p421 = scmp.lt.s32.totalorder %s420, 7
          %s422 = scalar_select %p421, %s420, 7
          %s423 = smul.addr %s422, 8
          %s424 = scalar_lea.vmem %s3, %s423
          %s425 = smul.u32 4, %s22
        $region64: #{bert_generation_layer.1} parent=47 // pred_fallthru
          _
        // Predicated region
        $region65: #{bert_generation_layer.1} parent=47 // pred_check
          %p426 = pneg %p146
        $region66: #{bert_generation_layer.1} parent=47 // pred_check_branch
          %428 = sbr.rel (%p426) target = $region68
        $region67: #{bert_generation_layer.1} parent=47 // pred_region
          %s429 = smul.u32 4, %s22
          %p430 = scmp.lt.s32.totalorder %s429, 7
          %s431 = scalar_select %p430, %s429, 7
          %s432 = smul.addr %s431, 8
          %s433 = scalar_lea.vmem %s4, %s432
          %s434 = smul.u32 4, %s22
        $region68: #{bert_generation_layer.1} parent=47 // pred_fallthru
          _
      $region48: #{bert_generation_layer.1} parent=5 // pred_fallthru
        _
      %p435 = scmp.le.s32.totalorder 1, %s22
      %p436 = scmp.lt.s32.totalorder %s22, 3
      %p437 = pnand %p435, %p436
      %p438 = pneg %p437
      // Predicated region
      $region69: #{bert_generation_layer.1} parent=5 // pred_check
        _
      $region70: #{bert_generation_layer.1} parent=5 // pred_check_branch
        %440 = sbr.rel (%p437) target = $region72
      $region71: #{bert_generation_layer.1} parent=5 // pred_region
        %s441 = ssub.s32 %s22, 1
        %s442 = smul.u32 4, %s27
        %p443 = scmp.lt.s32.totalorder %s442, 7
        %s444 = scalar_select %p443, %s442, 7
        %s445 = smul.addr %s444, 8
        %s446 = scalar_lea.vmem %s0, %s445
        %p447 = pneg %p48
        %p448 = pneg %p45
        %s449 = smul.u32 4, %s27
        %p450 = scmp.lt.s32.totalorder %s449, 7
        %s451 = scalar_select %p450, %s449, 7
        %s452 = smul.addr %s451, 2
        %s453 = smul.addr %s452, 8
        %s454 = scalar_lea.vmem %s1, %s453
        %p455 = pneg %p74
        %p456 = pneg %p71
        %s457 = smul.u32 4, %s27
        %p458 = scmp.lt.s32.totalorder %s457, 7
        %s459 = scalar_select %p458, %s457, 7
        %s460 = smul.addr %s459, 8
        %s461 = scalar_lea.vmem %s2, %s460
        %p462 = pneg %p100
        %p463 = pneg %p97
        %s464 = smul.u32 4, %s27
        %p465 = scmp.lt.s32.totalorder %s464, 7
        %s466 = scalar_select %p465, %s464, 7
        %s467 = smul.addr %s466, 8
        %s468 = scalar_lea.vmem %s3, %s467
        %p469 = pneg %p126
        %p470 = pneg %p123
        %s471 = smul.u32 4, %s27
        %p472 = scmp.lt.s32.totalorder %s471, 7
        %s473 = scalar_select %p472, %s471, 7
        %s474 = smul.addr %s473, 8
        %s475 = scalar_lea.vmem %s4, %s474
        %p476 = pneg %p152
        %p477 = pneg %p149
        %p478 = pneg %p173
        %p479 = pneg %p170
        %p480 = pneg %p194
        %p481 = pneg %p191
        %p482 = pneg %p215
        %p483 = pneg %p212
        %p484 = pneg %p236
        %p485 = pneg %p233
        %p486 = pneg %p257
        %p487 = pneg %p254
        %p488 = pneg %p278
        %p489 = pneg %p275
        %p490 = pneg %p299
        %p491 = pneg %p296
        %p492 = pneg %p320
        %p493 = pneg %p317
        %p494 = pneg %p346
        %p495 = pneg %p343
        %s496 = sand.u32 %s333, 1
        %s497 = scalar_lea.sflag [#allocation3], %s496
        %s498 = sand.u32 %s333, 1
        %s499 = smul.addr %s498, 32
        %s500 = scalar_lea.vmem [#allocation2], %s499
        %s501 = smul.u32 4, %s27
        %p502 = scmp.lt.s32.totalorder %s501, 7
        %s503 = scalar_select %p502, %s501, 7
        %s504 = smul.addr %s503, 8
        %s505 = scalar_lea.vmem %s0, %s504
        %s506 = smul.u32 4, %s27
        %s507 = smul.u32 4, %s27
        %p508 = scmp.lt.s32.totalorder %s507, 7
        %s509 = scalar_select %p508, %s507, 7
        %s510 = smul.addr %s509, 2
        %s511 = smul.addr %s510, 8
        %s512 = scalar_lea.vmem %s1, %s511
        %s513 = smul.u32 4, %s27
        %s514 = smul.u32 4, %s27
        %p515 = scmp.lt.s32.totalorder %s514, 7
        %s516 = scalar_select %p515, %s514, 7
        %s517 = smul.addr %s516, 8
        %s518 = scalar_lea.vmem %s2, %s517
        %s519 = smul.u32 4, %s27
        %s520 = smul.u32 4, %s27
        %p521 = scmp.lt.s32.totalorder %s520, 7
        %s522 = scalar_select %p521, %s520, 7
        %s523 = smul.addr %s522, 8
        %s524 = scalar_lea.vmem %s3, %s523
        %s525 = smul.u32 4, %s27
        %s526 = smul.u32 4, %s27
        %p527 = scmp.lt.s32.totalorder %s526, 7
        %s528 = scalar_select %p527, %s526, 7
        %s529 = smul.addr %s528, 8
        %s530 = scalar_lea.vmem %s4, %s529
        %s531 = smul.u32 4, %s27
        %s532 = smul.u32 4, %s27
        %v534 = vld [vmem:[%s10] sm:$0xff]
        %v535 = vld [vmem:[%s505] sm:$0xff]
        %v536 = vld [vmem:[%s505 + $0x8] sm:$0xff]
        %v537 = vld [vmem:[%s505 + $0x10] sm:$0xff]
        %v538 = vld [vmem:[%s505 + $0x18] sm:$0xff]
        %v539 = vld [vmem:[%s512] sm:$0xff]
        %v540 = vld [vmem:[%s512 + $0x8] sm:$0xff]
        %v541 = vld [vmem:[%s512 + $0x10] sm:$0xff]
        %v542 = vld [vmem:[%s512 + $0x18] sm:$0xff]
        %v543 = vld [vmem:[%s512 + $0x20] sm:$0xff]
        %v544 = vld [vmem:[%s512 + $0x28] sm:$0xff]
        %v545 = vld [vmem:[%s512 + $0x30] sm:$0xff]
        %v546 = vld [vmem:[%s512 + $0x38] sm:$0xff]
        %v547 = vld [vmem:[%s518] sm:$0xff]
        %v548 = vld [vmem:[%s518 + $0x8] sm:$0xff]
        %v549 = vld [vmem:[%s518 + $0x10] sm:$0xff]
        %v550 = vld [vmem:[%s518 + $0x18] sm:$0xff]
        %v551 = vld [vmem:[%s524] sm:$0xff]
        %v552 = vld [vmem:[%s524 + $0x8] sm:$0xff]
        %v553 = vld [vmem:[%s524 + $0x10] sm:$0xff]
        %v554 = vld [vmem:[%s524 + $0x18] sm:$0xff]
        %v555 = vpack.c.bf16 %v536, %v535
        %v556 = vpack.c.bf16 %v538, %v537
        %v557 = vld [vmem:[%s5] sm:$0xf]
        %v558 = vld [vmem:[%s5 + $0x4] sm:$0xf]
        %v559 = vld [vmem:[%s5 + $0x8] sm:$0xf]
        %v560 = vld [vmem:[%s5 + $0xc] sm:$0xf]
        %v561 = vld [vmem:[%s5 + $0x10] sm:$0xf]
        %v562 = vld [vmem:[%s5 + $0x14] sm:$0xf]
        %v563 = vld [vmem:[%s5 + $0x18] sm:$0xf]
        %v564 = vld [vmem:[%s5 + $0x1c] sm:$0xf]
        %v565 = vld [vmem:[%s5 + $0x20] sm:$0xf]
        %v566 = vld [vmem:[%s5 + $0x24] sm:$0xf]
        %v567 = vld [vmem:[%s5 + $0x28] sm:$0xf]
        %v568 = vld [vmem:[%s5 + $0x2c] sm:$0xf]
        %v569 = vld [vmem:[%s5 + $0x30] sm:$0xf]
        %v570 = vld [vmem:[%s5 + $0x34] sm:$0xf]
        %v571 = vld [vmem:[%s5 + $0x38] sm:$0xf]
        %v572 = vld [vmem:[%s5 + $0x3c] sm:$0xf]
        %v573 = vperm.slane %v534, 0
        %v590 = vunpack.c.l.b16 %v557
        %v591 = vunpack.c.l.b16 %v558
        %v592 = vunpack.c.l.b16 %v559
        %v593 = vunpack.c.l.b16 %v560
        %v594 = vunpack.c.l.b16 %v561
        %v595 = vunpack.c.l.b16 %v562
        %v596 = vunpack.c.l.b16 %v563
        %v597 = vunpack.c.l.b16 %v564
        %v598 = vunpack.c.l.b16 %v565
        %v599 = vunpack.c.l.b16 %v566
        %v600 = vunpack.c.l.b16 %v567
        %v601 = vunpack.c.l.b16 %v568
        %v602 = vunpack.c.l.b16 %v569
        %v603 = vunpack.c.l.b16 %v570
        %v604 = vunpack.c.l.b16 %v571
        %v605 = vunpack.c.l.b16 %v572
        %v606 = vpack.c.b16 %v591, %v590
        %v607 = vpack.c.b16 %v593, %v592
        %v608 = vpack.c.b16 %v595, %v594
        %v609 = vpack.c.b16 %v597, %v596
        %v610 = vpack.c.b16 %v599, %v598
        %v611 = vpack.c.b16 %v601, %v600
        %v612 = vpack.c.b16 %v603, %v602
        %v613 = vpack.c.b16 %v605, %v604
        %622 = vmatpush.bf16.msra.mxu0 %v613
        %623 = vmatpush.bf16.msra.mxu0 %v612
        %624 = vmatpush.bf16.msra.mxu0 %v611
        %625 = vmatpush.bf16.msra.mxu0 %v610
        %626 = vmatpush.bf16.msra.mxu0 %v609
        %627 = vmatpush.bf16.msra.mxu0 %v608
        %628 = vmatpush.bf16.msra.mxu0 %v607
        %629 = vmatpush.bf16.msra.mxu0 %v606
        %630 = vmatmul.bf16.gmra.mxu0 %v555
        %v631 = vpop.f32.mrf.mxu0
        %v632 = vadd.f32 %v573, %v631
        %v633 = vpop.f32.mrf.mxu0
        %v634 = vadd.f32 %v573, %v633
        %635 = vmatmul.bf16.gmra.mxu0 %v556
        %v636 = vpop.f32.mrf.mxu0
        %v637 = vadd.f32 %v573, %v636
        %v638 = vpop.f32.mrf.mxu0
        %v639 = vadd.f32 %v573, %v638
        %640 = vdwg.mxu0
        %v641 = vpack.c.bf16 %v539, %v535
        %v642 = vpack.c.bf16 %v547, %v540
        %v643 = vpack.c.bf16 %v536, %v551
        %v644 = vpack.c.bf16 %v542, %v541
        %v645 = vpack.c.bf16 %v552, %v548
        %v646 = vpack.c.bf16 %v543, %v537
        %v647 = vpack.c.bf16 %v549, %v544
        %v648 = vpack.c.bf16 %v538, %v553
        %v649 = vpack.c.bf16 %v546, %v545
        %v650 = vpack.c.bf16 %v554, %v550
        %v651 = vld [vmem:[%s6] sm:$0xff]
        %v652 = vld [vmem:[%s6 + $0x8] sm:$0xff]
        %v653 = vld [vmem:[%s6 + $0x10] sm:$0xff]
        %v654 = vld [vmem:[%s6 + $0x18] sm:$0xff]
        %v655 = vld [vmem:[%s6 + $0x20] sm:$0xff]
        %v656 = vld [vmem:[%s6 + $0x28] sm:$0xff]
        %v657 = vld [vmem:[%s6 + $0x30] sm:$0xff]
        %v658 = vld [vmem:[%s6 + $0x38] sm:$0xff]
        %v659 = vld [vmem:[%s6 + $0x40] sm:$0xff]
        %v660 = vld [vmem:[%s6 + $0x48] sm:$0xff]
        %v661 = vld [vmem:[%s6 + $0x50] sm:$0xff]
        %v662 = vld [vmem:[%s6 + $0x58] sm:$0xff]
        %v663 = vld [vmem:[%s6 + $0x60] sm:$0xff]
        %v664 = vld [vmem:[%s6 + $0x68] sm:$0xff]
        %v665 = vld [vmem:[%s6 + $0x70] sm:$0xff]
        %v666 = vld [vmem:[%s6 + $0x78] sm:$0xff]
        %v667 = vld [vmem:[%s11] sm:$0x3]
        %v669 = vperm.slane %v667, 0
        %v670 = vperm.slane %v667, 1
        %v689 = vunpack.c.l.b16 %v651
        %v690 = vunpack.c.h.b16 %v651
        %v691 = vunpack.c.l.b16 %v652
        %v692 = vunpack.c.h.b16 %v652
        %v693 = vunpack.c.l.b16 %v653
        %v694 = vunpack.c.h.b16 %v653
        %v695 = vunpack.c.l.b16 %v654
        %v696 = vunpack.c.h.b16 %v654
        %v697 = vunpack.c.l.b16 %v655
        %v698 = vunpack.c.h.b16 %v655
        %v699 = vunpack.c.l.b16 %v656
        %v700 = vunpack.c.h.b16 %v656
        %v701 = vunpack.c.l.b16 %v657
        %v702 = vunpack.c.h.b16 %v657
        %v703 = vunpack.c.l.b16 %v658
        %v704 = vunpack.c.h.b16 %v658
        %v705 = vunpack.c.l.b16 %v659
        %v706 = vunpack.c.h.b16 %v659
        %v707 = vunpack.c.l.b16 %v660
        %v708 = vunpack.c.h.b16 %v660
        %v709 = vunpack.c.l.b16 %v661
        %v710 = vunpack.c.h.b16 %v661
        %v711 = vunpack.c.l.b16 %v662
        %v712 = vunpack.c.h.b16 %v662
        %v713 = vunpack.c.l.b16 %v663
        %v714 = vunpack.c.h.b16 %v663
        %v715 = vunpack.c.l.b16 %v664
        %v716 = vunpack.c.h.b16 %v664
        %v717 = vunpack.c.l.b16 %v665
        %v718 = vunpack.c.h.b16 %v665
        %v719 = vunpack.c.l.b16 %v666
        %v720 = vunpack.c.h.b16 %v666
        %v721 = vpack.c.b16 %v691, %v689
        %v722 = vpack.c.b16 %v692, %v690
        %v723 = vpack.c.b16 %v695, %v693
        %v724 = vpack.c.b16 %v696, %v694
        %v725 = vpack.c.b16 %v699, %v697
        %v726 = vpack.c.b16 %v700, %v698
        %v727 = vpack.c.b16 %v703, %v701
        %v728 = vpack.c.b16 %v704, %v702
        %v729 = vpack.c.b16 %v707, %v705
        %v730 = vpack.c.b16 %v708, %v706
        %v731 = vpack.c.b16 %v711, %v709
        %v732 = vpack.c.b16 %v712, %v710
        %v733 = vpack.c.b16 %v715, %v713
        %v734 = vpack.c.b16 %v716, %v714
        %v735 = vpack.c.b16 %v719, %v717
        %v736 = vpack.c.b16 %v720, %v718
        %753 = vmatpush.bf16.msra.mxu0 %v735
        %754 = vmatpush.bf16.msra.mxu0 %v733
        %755 = vmatpush.bf16.msra.mxu0 %v731
        %756 = vmatpush.bf16.msra.mxu0 %v729
        %757 = vmatpush.bf16.msra.mxu0 %v727
        %758 = vmatpush.bf16.msra.mxu0 %v725
        %759 = vmatpush.bf16.msra.mxu0 %v723
        %760 = vmatpush.bf16.msra.mxu0 %v721
        %761 = vmatmul.bf16.gmra.mxu0 %v641
        %v762 = vpop.f32.mrf.mxu0
        %v763 = vadd.f32 %v669, %v762
        %v764 = vpop.f32.mrf.mxu0
        %v765 = vadd.f32 %v669, %v764
        %766 = vmatmul.bf16.gmra.mxu0 %v642
        %v767 = vpop.f32.mrf.mxu0
        %v768 = vadd.f32 %v669, %v767
        %v769 = vpop.f32.mrf.mxu0
        %v770 = vadd.f32 %v669, %v769
        %771 = vmatmul.bf16.gmra.mxu0 %v643
        %v772 = vpop.f32.mrf.mxu0
        %v773 = vadd.f32 %v669, %v772
        %v774 = vpop.f32.mrf.mxu0
        %v775 = vadd.f32 %v669, %v774
        %776 = vmatmul.bf16.gmra.mxu0 %v644
        %v777 = vpop.f32.mrf.mxu0
        %v778 = vadd.f32 %v669, %v777
        %v779 = vpop.f32.mrf.mxu0
        %v780 = vadd.f32 %v669, %v779
        %781 = vmatmul.bf16.gmra.mxu0 %v645
        %v782 = vpop.f32.mrf.mxu0
        %v783 = vadd.f32 %v669, %v782
        %v784 = vpop.f32.mrf.mxu0
        %v785 = vadd.f32 %v669, %v784
        %786 = vmatmul.bf16.gmra.mxu0 %v646
        %v787 = vpop.f32.mrf.mxu0
        %v788 = vadd.f32 %v669, %v787
        %v789 = vpop.f32.mrf.mxu0
        %v790 = vadd.f32 %v669, %v789
        %791 = vmatmul.bf16.gmra.mxu0 %v647
        %v792 = vpop.f32.mrf.mxu0
        %v793 = vadd.f32 %v669, %v792
        %v794 = vpop.f32.mrf.mxu0
        %v795 = vadd.f32 %v669, %v794
        %796 = vmatmul.bf16.gmra.mxu0 %v648
        %v797 = vpop.f32.mrf.mxu0
        %v798 = vadd.f32 %v669, %v797
        %v799 = vpop.f32.mrf.mxu0
        %v800 = vadd.f32 %v669, %v799
        %801 = vmatmul.bf16.gmra.mxu0 %v649
        %v802 = vpop.f32.mrf.mxu0
        %v803 = vadd.f32 %v669, %v802
        %v804 = vpop.f32.mrf.mxu0
        %v805 = vadd.f32 %v669, %v804
        %806 = vmatmul.bf16.gmra.mxu0 %v650
        %v807 = vpop.f32.mrf.mxu0
        %v808 = vadd.f32 %v669, %v807
        %v809 = vpop.f32.mrf.mxu0
        %v810 = vadd.f32 %v669, %v809
        %811 = vdwg.mxu0
        %812 = vmatpush.bf16.msra.mxu0 %v736
        %813 = vmatpush.bf16.msra.mxu0 %v734
        %814 = vmatpush.bf16.msra.mxu0 %v732
        %815 = vmatpush.bf16.msra.mxu0 %v730
        %816 = vmatpush.bf16.msra.mxu0 %v728
        %817 = vmatpush.bf16.msra.mxu0 %v726
        %818 = vmatpush.bf16.msra.mxu0 %v724
        %819 = vmatpush.bf16.msra.mxu0 %v722
        %820 = vmatmul.bf16.gmra.mxu0 %v641
        %v821 = vpop.f32.mrf.mxu0
        %v822 = vadd.f32 %v670, %v821
        %v823 = vpop.f32.mrf.mxu0
        %v824 = vadd.f32 %v670, %v823
        %825 = vmatmul.bf16.gmra.mxu0 %v642
        %v826 = vpop.f32.mrf.mxu0
        %v827 = vadd.f32 %v670, %v826
        %v828 = vpop.f32.mrf.mxu0
        %v829 = vadd.f32 %v670, %v828
        %830 = vmatmul.bf16.gmra.mxu0 %v643
        %v831 = vpop.f32.mrf.mxu0
        %v832 = vadd.f32 %v670, %v831
        %v833 = vpop.f32.mrf.mxu0
        %v834 = vadd.f32 %v670, %v833
        %835 = vmatmul.bf16.gmra.mxu0 %v644
        %v836 = vpop.f32.mrf.mxu0
        %v837 = vadd.f32 %v670, %v836
        %v838 = vpop.f32.mrf.mxu0
        %v839 = vadd.f32 %v670, %v838
        %840 = vmatmul.bf16.gmra.mxu0 %v645
        %v841 = vpop.f32.mrf.mxu0
        %v842 = vadd.f32 %v670, %v841
        %v843 = vpop.f32.mrf.mxu0
        %v844 = vadd.f32 %v670, %v843
        %845 = vmatmul.bf16.gmra.mxu0 %v646
        %v846 = vpop.f32.mrf.mxu0
        %v847 = vadd.f32 %v670, %v846
        %v848 = vpop.f32.mrf.mxu0
        %v849 = vadd.f32 %v670, %v848
        %850 = vmatmul.bf16.gmra.mxu0 %v647
        %v851 = vpop.f32.mrf.mxu0
        %v852 = vadd.f32 %v670, %v851
        %v853 = vpop.f32.mrf.mxu0
        %v854 = vadd.f32 %v670, %v853
        %855 = vmatmul.bf16.gmra.mxu0 %v648
        %v856 = vpop.f32.mrf.mxu0
        %v857 = vadd.f32 %v670, %v856
        %v858 = vpop.f32.mrf.mxu0
        %v859 = vadd.f32 %v670, %v858
        %860 = vmatmul.bf16.gmra.mxu0 %v649
        %v861 = vpop.f32.mrf.mxu0
        %v862 = vadd.f32 %v670, %v861
        %v863 = vpop.f32.mrf.mxu0
        %v864 = vadd.f32 %v670, %v863
        %865 = vmatmul.bf16.gmra.mxu0 %v650
        %v866 = vpop.f32.mrf.mxu0
        %v867 = vadd.f32 %v670, %v866
        %v868 = vpop.f32.mrf.mxu0
        %v869 = vadd.f32 %v670, %v868
        %870 = vdwg.mxu0
        %v871 = vld [vmem:[%s530] sm:$0xff]
        %v872 = vld [vmem:[%s530 + $0x8] sm:$0xff]
        %v873 = vld [vmem:[%s530 + $0x10] sm:$0xff]
        %v874 = vld [vmem:[%s530 + $0x18] sm:$0xff]
        %v875 = vpack.c.bf16 %v632, %v632
        %v876 = vpack.c.bf16 %v634, %v634
        %v877 = vpack.c.bf16 %v637, %v637
        %v878 = vpack.c.bf16 %v639, %v639
        %v879 = vpack.c.bf16 %v763, %v763
        %v880 = vpack.c.bf16 %v765, %v765
        %v881 = vpack.c.bf16 %v768, %v768
        %v882 = vpack.c.bf16 %v770, %v770
        %v883 = vpack.c.bf16 %v773, %v773
        %v884 = vpack.c.bf16 %v775, %v775
        %v885 = vpack.c.bf16 %v778, %v778
        %v886 = vpack.c.bf16 %v780, %v780
        %v887 = vpack.c.bf16 %v783, %v783
        %v888 = vpack.c.bf16 %v785, %v785
        %v889 = vpack.c.bf16 %v788, %v788
        %v890 = vpack.c.bf16 %v790, %v790
        %v891 = vpack.c.bf16 %v793, %v793
        %v892 = vpack.c.bf16 %v795, %v795
        %v893 = vpack.c.bf16 %v798, %v798
        %v894 = vpack.c.bf16 %v800, %v800
        %v895 = vpack.c.bf16 %v803, %v803
        %v896 = vpack.c.bf16 %v805, %v805
        %v897 = vpack.c.bf16 %v808, %v808
        %v898 = vpack.c.bf16 %v810, %v810
        %v899 = vpack.c.bf16 %v822, %v822
        %v900 = vpack.c.bf16 %v824, %v824
        %v901 = vpack.c.bf16 %v827, %v827
        %v902 = vpack.c.bf16 %v829, %v829
        %v903 = vpack.c.bf16 %v832, %v832
        %v904 = vpack.c.bf16 %v834, %v834
        %v905 = vpack.c.bf16 %v837, %v837
        %v906 = vpack.c.bf16 %v839, %v839
        %v907 = vpack.c.bf16 %v842, %v842
        %v908 = vpack.c.bf16 %v844, %v844
        %v909 = vpack.c.bf16 %v847, %v847
        %v910 = vpack.c.bf16 %v849, %v849
        %v911 = vpack.c.bf16 %v852, %v852
        %v912 = vpack.c.bf16 %v854, %v854
        %v913 = vpack.c.bf16 %v857, %v857
        %v914 = vpack.c.bf16 %v859, %v859
        %v915 = vpack.c.bf16 %v862, %v862
        %v916 = vpack.c.bf16 %v864, %v864
        %v917 = vpack.c.bf16 %v867, %v867
        %v918 = vpack.c.bf16 %v869, %v869
        %v924 = vunpack.c.l.b16 %v879
        %v925 = vunpack.c.l.b16 %v880
        %v926 = vunpack.c.l.b16 %v881
        %v927 = vunpack.c.l.b16 %v882
        %v928 = vunpack.c.l.b16 %v883
        %v929 = vpack.c.b16 %v925, %v924
        %v930 = vpack.c.b16 %v927, %v926
        %v931 = vpack.c.b16 %v928, %v928
        %vm932 = vcmask 261120
        %v934 = vsel %vm932, %v875, 0
        %v937 = vsel %vm932, %v929, 0
        %v940 = vsel %vm932, %v930, 0
        %v943 = vsel %vm932, %v931, 0
        %945 = vmatpush.bf16.xpose.msra.mxu0 0
        %946 = vmatpush.bf16.xpose.msra.mxu0 0
        %947 = vmatpush.bf16.xpose.msra.mxu0 0
        %948 = vmatpush.bf16.xpose.msra.mxu0 0
        %949 = vmatpush.bf16.xpose.msra.mxu0 0
        %950 = vmatpush.bf16.xpose.msra.mxu0 %v943
        %951 = vmatpush.bf16.xpose.msra.mxu0 %v940
        %952 = vmatpush.bf16.xpose.msra.mxu0 %v937
        %953 = vmatmul.bf16.gmra.mxu0 %v934
        %v954 = vpop.f32.mrf.mxu0
        %v955 = vadd.f32 %v871, %v954
        %v956 = vpop.f32.mrf.mxu0
        %957 = vdwg.mxu0
        %v963 = vunpack.c.l.b16 %v884
        %v964 = vunpack.c.l.b16 %v885
        %v965 = vunpack.c.l.b16 %v886
        %v966 = vunpack.c.l.b16 %v887
        %v967 = vunpack.c.l.b16 %v888
        %v968 = vpack.c.b16 %v964, %v963
        %v969 = vpack.c.b16 %v966, %v965
        %v970 = vpack.c.b16 %v967, %v967
        %v972 = vsel %vm932, %v876, 0
        %v975 = vsel %vm932, %v968, 0
        %v978 = vsel %vm932, %v969, 0
        %v981 = vsel %vm932, %v970, 0
        %983 = vmatpush.bf16.xpose.msra.mxu0 0
        %984 = vmatpush.bf16.xpose.msra.mxu0 0
        %985 = vmatpush.bf16.xpose.msra.mxu0 0
        %986 = vmatpush.bf16.xpose.msra.mxu0 0
        %987 = vmatpush.bf16.xpose.msra.mxu0 0
        %988 = vmatpush.bf16.xpose.msra.mxu0 %v981
        %989 = vmatpush.bf16.xpose.msra.mxu0 %v978
        %990 = vmatpush.bf16.xpose.msra.mxu0 %v975
        %991 = vmatmul.bf16.gmra.mxu0 %v972
        %v992 = vpop.f32.mrf.mxu0
        %v993 = vadd.f32 %v872, %v992
        %v994 = vpop.f32.mrf.mxu0
        %995 = vdwg.mxu0
        %v1001 = vunpack.c.l.b16 %v889
        %v1002 = vunpack.c.l.b16 %v890
        %v1003 = vunpack.c.l.b16 %v891
        %v1004 = vunpack.c.l.b16 %v892
        %v1005 = vunpack.c.l.b16 %v893
        %v1006 = vpack.c.b16 %v1002, %v1001
        %v1007 = vpack.c.b16 %v1004, %v1003
        %v1008 = vpack.c.b16 %v1005, %v1005
        %v1010 = vsel %vm932, %v877, 0
        %v1013 = vsel %vm932, %v1006, 0
        %v1016 = vsel %vm932, %v1007, 0
        %v1019 = vsel %vm932, %v1008, 0
        %1021 = vmatpush.bf16.xpose.msra.mxu0 0
        %1022 = vmatpush.bf16.xpose.msra.mxu0 0
        %1023 = vmatpush.bf16.xpose.msra.mxu0 0
        %1024 = vmatpush.bf16.xpose.msra.mxu0 0
        %1025 = vmatpush.bf16.xpose.msra.mxu0 0
        %1026 = vmatpush.bf16.xpose.msra.mxu0 %v1019
        %1027 = vmatpush.bf16.xpose.msra.mxu0 %v1016
        %1028 = vmatpush.bf16.xpose.msra.mxu0 %v1013
        %1029 = vmatmul.bf16.gmra.mxu0 %v1010
        %v1030 = vpop.f32.mrf.mxu0
        %v1031 = vadd.f32 %v873, %v1030
        %v1032 = vpop.f32.mrf.mxu0
        %1033 = vdwg.mxu0
        %v1039 = vunpack.c.l.b16 %v894
        %v1040 = vunpack.c.l.b16 %v895
        %v1041 = vunpack.c.l.b16 %v896
        %v1042 = vunpack.c.l.b16 %v897
        %v1043 = vunpack.c.l.b16 %v898
        %v1044 = vpack.c.b16 %v1040, %v1039
        %v1045 = vpack.c.b16 %v1042, %v1041
        %v1046 = vpack.c.b16 %v1043, %v1043
        %v1048 = vsel %vm932, %v878, 0
        %v1051 = vsel %vm932, %v1044, 0
        %v1054 = vsel %vm932, %v1045, 0
        %v1057 = vsel %vm932, %v1046, 0
        %1059 = vmatpush.bf16.xpose.msra.mxu0 0
        %1060 = vmatpush.bf16.xpose.msra.mxu0 0
        %1061 = vmatpush.bf16.xpose.msra.mxu0 0
        %1062 = vmatpush.bf16.xpose.msra.mxu0 0
        %1063 = vmatpush.bf16.xpose.msra.mxu0 0
        %1064 = vmatpush.bf16.xpose.msra.mxu0 %v1057
        %1065 = vmatpush.bf16.xpose.msra.mxu0 %v1054
        %1066 = vmatpush.bf16.xpose.msra.mxu0 %v1051
        %1067 = vmatmul.bf16.gmra.mxu0 %v1048
        %v1068 = vpop.f32.mrf.mxu0
        %v1069 = vadd.f32 %v874, %v1068
        %v1070 = vpop.f32.mrf.mxu0
        %1071 = vdwg.mxu0
        %vm1072 = vcmask 326656
        %v1073 = vsel %vm1072, %v955, -inf
        %1074 = vmax.xlane.f32.xlu0 %v1073
        %v1075 = vpop.xlane.xlu0 %1074
        %v1076 = vsel %vm1072, %v993, -inf
        %1077 = vmax.xlane.f32.xlu0 %v1076
        %v1078 = vpop.xlane.xlu0 %1077
        %v1079 = vsel %vm1072, %v1031, -inf
        %1080 = vmax.xlane.f32.xlu0 %v1079
        %v1081 = vpop.xlane.xlu0 %1080
        %v1082 = vsel %vm1072, %v1069, -inf
        %1083 = vmax.xlane.f32.xlu0 %v1082
        %v1084 = vpop.xlane.xlu0 %1083
        %v1085 = vsub.f32 %v955, %v1075
        %v1086 = vsub.f32 %v993, %v1078
        %v1087 = vsub.f32 %v1031, %v1081
        %v1088 = vsub.f32 %v1069, %v1084
        %v1089 = vmul.f32 %v1085, 1.442695
        %v1090 = vpow.pop %v1089
        %v1091 = vmul.f32 %v1086, 1.442695
        %v1092 = vpow.pop %v1091
        %v1093 = vmul.f32 %v1087, 1.442695
        %v1094 = vpow.pop %v1093
        %v1095 = vmul.f32 %v1088, 1.442695
        %v1096 = vpow.pop %v1095
        %v1097 = vsel %vm1072, %v1090, 0.0
        %1098 = vadd.xlane.f32.xlu0 %v1097
        %v1099 = vpop.xlane.xlu0 %1098
        %v1100 = vsel %vm1072, %v1092, 0.0
        %1101 = vadd.xlane.f32.xlu0 %v1100
        %v1102 = vpop.xlane.xlu0 %1101
        %v1103 = vsel %vm1072, %v1094, 0.0
        %1104 = vadd.xlane.f32.xlu0 %v1103
        %v1105 = vpop.xlane.xlu0 %1104
        %v1106 = vsel %vm1072, %v1096, 0.0
        %1107 = vadd.xlane.f32.xlu0 %v1106
        %v1108 = vpop.xlane.xlu0 %1107
        %v1109 = vrcp.pop %v1099
        %v1110 = vrcp.pop %v1102
        %v1111 = vrcp.pop %v1105
        %v1112 = vrcp.pop %v1108
        %v1113 = vmul.f32 %v1090, %v1109
        %v1114 = vmul.f32 %v1092, %v1110
        %v1115 = vmul.f32 %v1094, %v1111
        %v1116 = vmul.f32 %v1096, %v1112
        %v1117 = vpack.c.bf16 %v1113, %v1113
        %v1118 = vpack.c.bf16 %v1114, %v1114
        %v1119 = vpack.c.bf16 %v1115, %v1115
        %v1120 = vpack.c.bf16 %v1116, %v1116
        %v1126 = vunpack.c.l.b16 %v899
        %v1127 = vunpack.c.l.b16 %v900
        %v1128 = vunpack.c.l.b16 %v901
        %v1129 = vunpack.c.l.b16 %v902
        %v1130 = vunpack.c.l.b16 %v903
        %v1131 = vpack.c.b16 %v1127, %v1126
        %v1132 = vpack.c.b16 %v1129, %v1128
        %v1133 = vpack.c.b16 %v1130, %v1130
        %v1137 = vsel %vm1072, %v1117, 0
        %vm1139 = vcmask 1043456
        %v1141 = vsel %vm1139, %v1133, 0
        %1143 = vmatpush.bf16.msra.mxu0 0
        %1144 = vmatpush.bf16.msra.mxu0 0
        %1145 = vmatpush.bf16.msra.mxu0 0
        %1146 = vmatpush.bf16.msra.mxu0 0
        %1147 = vmatpush.bf16.msra.mxu0 0
        %1148 = vmatpush.bf16.msra.mxu0 %v1141
        %1149 = vmatpush.bf16.msra.mxu0 %v1132
        %1150 = vmatpush.bf16.msra.mxu0 %v1131
        %1151 = vmatmul.bf16.gmra.mxu0 %v1137
        %v1152 = vpop.f32.mrf.mxu0
        %v1153 = vadd.f32 0.0, %v1152
        %v1154 = vpop.f32.mrf.mxu0
        %1155 = vdwg.mxu0
        %v1161 = vunpack.c.l.b16 %v904
        %v1162 = vunpack.c.l.b16 %v905
        %v1163 = vunpack.c.l.b16 %v906
        %v1164 = vunpack.c.l.b16 %v907
        %v1165 = vunpack.c.l.b16 %v908
        %v1166 = vpack.c.b16 %v1162, %v1161
        %v1167 = vpack.c.b16 %v1164, %v1163
        %v1168 = vpack.c.b16 %v1165, %v1165
        %v1172 = vsel %vm1072, %v1118, 0
        %v1175 = vsel %vm1139, %v1168, 0
        %1177 = vmatpush.bf16.msra.mxu0 0
        %1178 = vmatpush.bf16.msra.mxu0 0
        %1179 = vmatpush.bf16.msra.mxu0 0
        %1180 = vmatpush.bf16.msra.mxu0 0
        %1181 = vmatpush.bf16.msra.mxu0 0
        %1182 = vmatpush.bf16.msra.mxu0 %v1175
        %1183 = vmatpush.bf16.msra.mxu0 %v1167
        %1184 = vmatpush.bf16.msra.mxu0 %v1166
        %1185 = vmatmul.bf16.gmra.mxu0 %v1172
        %v1186 = vpop.f32.mrf.mxu0
        %v1187 = vadd.f32 0.0, %v1186
        %v1188 = vpop.f32.mrf.mxu0
        %1189 = vdwg.mxu0
        %v1195 = vunpack.c.l.b16 %v909
        %v1196 = vunpack.c.l.b16 %v910
        %v1197 = vunpack.c.l.b16 %v911
        %v1198 = vunpack.c.l.b16 %v912
        %v1199 = vunpack.c.l.b16 %v913
        %v1200 = vpack.c.b16 %v1196, %v1195
        %v1201 = vpack.c.b16 %v1198, %v1197
        %v1202 = vpack.c.b16 %v1199, %v1199
        %v1206 = vsel %vm1072, %v1119, 0
        %v1209 = vsel %vm1139, %v1202, 0
        %1211 = vmatpush.bf16.msra.mxu0 0
        %1212 = vmatpush.bf16.msra.mxu0 0
        %1213 = vmatpush.bf16.msra.mxu0 0
        %1214 = vmatpush.bf16.msra.mxu0 0
        %1215 = vmatpush.bf16.msra.mxu0 0
        %1216 = vmatpush.bf16.msra.mxu0 %v1209
        %1217 = vmatpush.bf16.msra.mxu0 %v1201
        %1218 = vmatpush.bf16.msra.mxu0 %v1200
        %1219 = vmatmul.bf16.gmra.mxu0 %v1206
        %v1220 = vpop.f32.mrf.mxu0
        %v1221 = vadd.f32 0.0, %v1220
        %v1222 = vpop.f32.mrf.mxu0
        %1223 = vdwg.mxu0
        %v1229 = vunpack.c.l.b16 %v914
        %v1230 = vunpack.c.l.b16 %v915
        %v1231 = vunpack.c.l.b16 %v916
        %v1232 = vunpack.c.l.b16 %v917
        %v1233 = vunpack.c.l.b16 %v918
        %v1234 = vpack.c.b16 %v1230, %v1229
        %v1235 = vpack.c.b16 %v1232, %v1231
        %v1236 = vpack.c.b16 %v1233, %v1233
        %v1240 = vsel %vm1072, %v1120, 0
        %v1243 = vsel %vm1139, %v1236, 0
        %1245 = vmatpush.bf16.msra.mxu0 0
        %1246 = vmatpush.bf16.msra.mxu0 0
        %1247 = vmatpush.bf16.msra.mxu0 0
        %1248 = vmatpush.bf16.msra.mxu0 0
        %1249 = vmatpush.bf16.msra.mxu0 0
        %1250 = vmatpush.bf16.msra.mxu0 %v1243
        %1251 = vmatpush.bf16.msra.mxu0 %v1235
        %1252 = vmatpush.bf16.msra.mxu0 %v1234
        %1253 = vmatmul.bf16.gmra.mxu0 %v1240
        %v1254 = vpop.f32.mrf.mxu0
        %v1255 = vadd.f32 0.0, %v1254
        %v1256 = vpop.f32.mrf.mxu0
        %1257 = vdwg.mxu0
        %v1259 = vunpack.c.l.b16 %v875
        %v1260 = vpack.c.b16 %v1259, %v1259
        %1261 = vrot.lane.b32.xlu0 %v1260, 96
        %v1262 = vpop.permute.xlu0 %1261
        %1263 = vrot.lane.b32.xlu0 %v929, 96
        %v1264 = vpop.permute.xlu0 %1263
        %1265 = vrot.lane.b32.xlu0 %v930, 96
        %v1266 = vpop.permute.xlu0 %1265
        %1267 = vrot.lane.b32.xlu0 %v931, 96
        %v1268 = vpop.permute.xlu0 %1267
        %v1270 = vsel %vm932, %v1262, 0
        %v1273 = vsel %vm932, %v1264, 0
        %v1276 = vsel %vm932, %v1266, 0
        %v1279 = vsel %vm932, %v1268, 0
        %1281 = vmatpush.bf16.xpose.msra.mxu0 0
        %1282 = vmatpush.bf16.xpose.msra.mxu0 0
        %1283 = vmatpush.bf16.xpose.msra.mxu0 0
        %1284 = vmatpush.bf16.xpose.msra.mxu0 0
        %1285 = vmatpush.bf16.xpose.msra.mxu0 0
        %1286 = vmatpush.bf16.xpose.msra.mxu0 %v1279
        %1287 = vmatpush.bf16.xpose.msra.mxu0 %v1276
        %1288 = vmatpush.bf16.xpose.msra.mxu0 %v1273
        %1289 = vmatmul.bf16.gmra.mxu0 %v1270
        %v1290 = vpop.f32.mrf.mxu0
        %v1291 = vadd.f32 %v871, %v1290
        %v1292 = vpop.f32.mrf.mxu0
        %1293 = vdwg.mxu0
        %v1295 = vunpack.c.l.b16 %v876
        %v1296 = vpack.c.b16 %v1295, %v1295
        %1297 = vrot.lane.b32.xlu0 %v1296, 96
        %v1298 = vpop.permute.xlu0 %1297
        %1299 = vrot.lane.b32.xlu0 %v968, 96
        %v1300 = vpop.permute.xlu0 %1299
        %1301 = vrot.lane.b32.xlu0 %v969, 96
        %v1302 = vpop.permute.xlu0 %1301
        %1303 = vrot.lane.b32.xlu0 %v970, 96
        %v1304 = vpop.permute.xlu0 %1303
        %v1306 = vsel %vm932, %v1298, 0
        %v1309 = vsel %vm932, %v1300, 0
        %v1312 = vsel %vm932, %v1302, 0
        %v1315 = vsel %vm932, %v1304, 0
        %1317 = vmatpush.bf16.xpose.msra.mxu0 0
        %1318 = vmatpush.bf16.xpose.msra.mxu0 0
        %1319 = vmatpush.bf16.xpose.msra.mxu0 0
        %1320 = vmatpush.bf16.xpose.msra.mxu0 0
        %1321 = vmatpush.bf16.xpose.msra.mxu0 0
        %1322 = vmatpush.bf16.xpose.msra.mxu0 %v1315
        %1323 = vmatpush.bf16.xpose.msra.mxu0 %v1312
        %1324 = vmatpush.bf16.xpose.msra.mxu0 %v1309
        %1325 = vmatmul.bf16.gmra.mxu0 %v1306
        %v1326 = vpop.f32.mrf.mxu0
        %v1327 = vadd.f32 %v872, %v1326
        %v1328 = vpop.f32.mrf.mxu0
        %1329 = vdwg.mxu0
        %v1331 = vunpack.c.l.b16 %v877
        %v1332 = vpack.c.b16 %v1331, %v1331
        %1333 = vrot.lane.b32.xlu0 %v1332, 96
        %v1334 = vpop.permute.xlu0 %1333
        %1335 = vrot.lane.b32.xlu0 %v1006, 96
        %v1336 = vpop.permute.xlu0 %1335
        %1337 = vrot.lane.b32.xlu0 %v1007, 96
        %v1338 = vpop.permute.xlu0 %1337
        %1339 = vrot.lane.b32.xlu0 %v1008, 96
        %v1340 = vpop.permute.xlu0 %1339
        %v1342 = vsel %vm932, %v1334, 0
        %v1345 = vsel %vm932, %v1336, 0
        %v1348 = vsel %vm932, %v1338, 0
        %v1351 = vsel %vm932, %v1340, 0
        %1353 = vmatpush.bf16.xpose.msra.mxu0 0
        %1354 = vmatpush.bf16.xpose.msra.mxu0 0
        %1355 = vmatpush.bf16.xpose.msra.mxu0 0
        %1356 = vmatpush.bf16.xpose.msra.mxu0 0
        %1357 = vmatpush.bf16.xpose.msra.mxu0 0
        %1358 = vmatpush.bf16.xpose.msra.mxu0 %v1351
        %1359 = vmatpush.bf16.xpose.msra.mxu0 %v1348
        %1360 = vmatpush.bf16.xpose.msra.mxu0 %v1345
        %1361 = vmatmul.bf16.gmra.mxu0 %v1342
        %v1362 = vpop.f32.mrf.mxu0
        %v1363 = vadd.f32 %v873, %v1362
        %v1364 = vpop.f32.mrf.mxu0
        %1365 = vdwg.mxu0
        %v1367 = vunpack.c.l.b16 %v878
        %v1368 = vpack.c.b16 %v1367, %v1367
        %1369 = vrot.lane.b32.xlu0 %v1368, 96
        %v1370 = vpop.permute.xlu0 %1369
        %1371 = vrot.lane.b32.xlu0 %v1044, 96
        %v1372 = vpop.permute.xlu0 %1371
        %1373 = vrot.lane.b32.xlu0 %v1045, 96
        %v1374 = vpop.permute.xlu0 %1373
        %1375 = vrot.lane.b32.xlu0 %v1046, 96
        %v1376 = vpop.permute.xlu0 %1375
        %v1378 = vsel %vm932, %v1370, 0
        %v1381 = vsel %vm932, %v1372, 0
        %v1384 = vsel %vm932, %v1374, 0
        %v1387 = vsel %vm932, %v1376, 0
        %1389 = vmatpush.bf16.xpose.msra.mxu0 0
        %1390 = vmatpush.bf16.xpose.msra.mxu0 0
        %1391 = vmatpush.bf16.xpose.msra.mxu0 0
        %1392 = vmatpush.bf16.xpose.msra.mxu0 0
        %1393 = vmatpush.bf16.xpose.msra.mxu0 0
        %1394 = vmatpush.bf16.xpose.msra.mxu0 %v1387
        %1395 = vmatpush.bf16.xpose.msra.mxu0 %v1384
        %1396 = vmatpush.bf16.xpose.msra.mxu0 %v1381
        %1397 = vmatmul.bf16.gmra.mxu0 %v1378
        %v1398 = vpop.f32.mrf.mxu0
        %v1399 = vadd.f32 %v874, %v1398
        %v1400 = vpop.f32.mrf.mxu0
        %1401 = vdwg.mxu0
        %v1402 = vsel %vm1072, %v1291, -inf
        %1403 = vmax.xlane.f32.xlu0 %v1402
        %v1404 = vpop.xlane.xlu0 %1403
        %v1405 = vsel %vm1072, %v1327, -inf
        %1406 = vmax.xlane.f32.xlu0 %v1405
        %v1407 = vpop.xlane.xlu0 %1406
        %v1408 = vsel %vm1072, %v1363, -inf
        %1409 = vmax.xlane.f32.xlu0 %v1408
        %v1410 = vpop.xlane.xlu0 %1409
        %v1411 = vsel %vm1072, %v1399, -inf
        %1412 = vmax.xlane.f32.xlu0 %v1411
        %v1413 = vpop.xlane.xlu0 %1412
        %v1414 = vsub.f32 %v1291, %v1404
        %v1415 = vsub.f32 %v1327, %v1407
        %v1416 = vsub.f32 %v1363, %v1410
        %v1417 = vsub.f32 %v1399, %v1413
        %v1418 = vmul.f32 %v1414, 1.442695
        %v1419 = vpow.pop %v1418
        %v1420 = vmul.f32 %v1415, 1.442695
        %v1421 = vpow.pop %v1420
        %v1422 = vmul.f32 %v1416, 1.442695
        %v1423 = vpow.pop %v1422
        %v1424 = vmul.f32 %v1417, 1.442695
        %v1425 = vpow.pop %v1424
        %v1426 = vsel %vm1072, %v1419, 0.0
        %1427 = vadd.xlane.f32.xlu0 %v1426
        %v1428 = vpop.xlane.xlu0 %1427
        %v1429 = vsel %vm1072, %v1421, 0.0
        %1430 = vadd.xlane.f32.xlu0 %v1429
        %v1431 = vpop.xlane.xlu0 %1430
        %v1432 = vsel %vm1072, %v1423, 0.0
        %1433 = vadd.xlane.f32.xlu0 %v1432
        %v1434 = vpop.xlane.xlu0 %1433
        %v1435 = vsel %vm1072, %v1425, 0.0
        %1436 = vadd.xlane.f32.xlu0 %v1435
        %v1437 = vpop.xlane.xlu0 %1436
        %v1438 = vrcp.pop %v1428
        %v1439 = vrcp.pop %v1431
        %v1440 = vrcp.pop %v1434
        %v1441 = vrcp.pop %v1437
        %v1442 = vmul.f32 %v1419, %v1438
        %v1443 = vmul.f32 %v1421, %v1439
        %v1444 = vmul.f32 %v1423, %v1440
        %v1445 = vmul.f32 %v1425, %v1441
        %v1446 = vpack.c.bf16 %v1442, %v1442
        %v1447 = vpack.c.bf16 %v1443, %v1443
        %v1448 = vpack.c.bf16 %v1444, %v1444
        %v1449 = vpack.c.bf16 %v1445, %v1445
        %1450 = vrot.lane.b32.xlu0 %v1131, 96
        %v1451 = vpop.permute.xlu0 %1450
        %1452 = vrot.lane.b32.xlu0 %v1132, 96
        %v1453 = vpop.permute.xlu0 %1452
        %1454 = vrot.lane.b32.xlu0 %v1133, 96
        %v1455 = vpop.permute.xlu0 %1454
        %v1459 = vsel %vm1072, %v1446, 0
        %v1462 = vsel %vm1139, %v1455, 0
        %1464 = vmatpush.bf16.msra.mxu0 0
        %1465 = vmatpush.bf16.msra.mxu0 0
        %1466 = vmatpush.bf16.msra.mxu0 0
        %1467 = vmatpush.bf16.msra.mxu0 0
        %1468 = vmatpush.bf16.msra.mxu0 0
        %1469 = vmatpush.bf16.msra.mxu0 %v1462
        %1470 = vmatpush.bf16.msra.mxu0 %v1453
        %1471 = vmatpush.bf16.msra.mxu0 %v1451
        %1472 = vmatmul.bf16.gmra.mxu0 %v1459
        %v1473 = vpop.f32.mrf.mxu0
        %v1474 = vadd.f32 0.0, %v1473
        %v1475 = vpop.f32.mrf.mxu0
        %1476 = vdwg.mxu0
        %1477 = vrot.lane.b32.xlu0 %v1166, 96
        %v1478 = vpop.permute.xlu0 %1477
        %1479 = vrot.lane.b32.xlu0 %v1167, 96
        %v1480 = vpop.permute.xlu0 %1479
        %1481 = vrot.lane.b32.xlu0 %v1168, 96
        %v1482 = vpop.permute.xlu0 %1481
        %v1486 = vsel %vm1072, %v1447, 0
        %v1489 = vsel %vm1139, %v1482, 0
        %1491 = vmatpush.bf16.msra.mxu0 0
        %1492 = vmatpush.bf16.msra.mxu0 0
        %1493 = vmatpush.bf16.msra.mxu0 0
        %1494 = vmatpush.bf16.msra.mxu0 0
        %1495 = vmatpush.bf16.msra.mxu0 0
        %1496 = vmatpush.bf16.msra.mxu0 %v1489
        %1497 = vmatpush.bf16.msra.mxu0 %v1480
        %1498 = vmatpush.bf16.msra.mxu0 %v1478
        %1499 = vmatmul.bf16.gmra.mxu0 %v1486
        %v1500 = vpop.f32.mrf.mxu0
        %v1501 = vadd.f32 0.0, %v1500
        %v1502 = vpop.f32.mrf.mxu0
        %1503 = vdwg.mxu0
        %1504 = vrot.lane.b32.xlu0 %v1200, 96
        %v1505 = vpop.permute.xlu0 %1504
        %1506 = vrot.lane.b32.xlu0 %v1201, 96
        %v1507 = vpop.permute.xlu0 %1506
        %1508 = vrot.lane.b32.xlu0 %v1202, 96
        %v1509 = vpop.permute.xlu0 %1508
        %v1513 = vsel %vm1072, %v1448, 0
        %v1516 = vsel %vm1139, %v1509, 0
        %1518 = vmatpush.bf16.msra.mxu0 0
        %1519 = vmatpush.bf16.msra.mxu0 0
        %1520 = vmatpush.bf16.msra.mxu0 0
        %1521 = vmatpush.bf16.msra.mxu0 0
        %1522 = vmatpush.bf16.msra.mxu0 0
        %1523 = vmatpush.bf16.msra.mxu0 %v1516
        %1524 = vmatpush.bf16.msra.mxu0 %v1507
        %1525 = vmatpush.bf16.msra.mxu0 %v1505
        %1526 = vmatmul.bf16.gmra.mxu0 %v1513
        %v1527 = vpop.f32.mrf.mxu0
        %v1528 = vadd.f32 0.0, %v1527
        %v1529 = vpop.f32.mrf.mxu0
        %1530 = vdwg.mxu0
        %1531 = vrot.lane.b32.xlu0 %v1234, 96
        %v1532 = vpop.permute.xlu0 %1531
        %1533 = vrot.lane.b32.xlu0 %v1235, 96
        %v1534 = vpop.permute.xlu0 %1533
        %1535 = vrot.lane.b32.xlu0 %v1236, 96
        %v1536 = vpop.permute.xlu0 %1535
        %v1540 = vsel %vm1072, %v1449, 0
        %v1543 = vsel %vm1139, %v1536, 0
        %1545 = vmatpush.bf16.msra.mxu0 0
        %1546 = vmatpush.bf16.msra.mxu0 0
        %1547 = vmatpush.bf16.msra.mxu0 0
        %1548 = vmatpush.bf16.msra.mxu0 0
        %1549 = vmatpush.bf16.msra.mxu0 0
        %1550 = vmatpush.bf16.msra.mxu0 %v1543
        %1551 = vmatpush.bf16.msra.mxu0 %v1534
        %1552 = vmatpush.bf16.msra.mxu0 %v1532
        %1553 = vmatmul.bf16.gmra.mxu0 %v1540
        %v1554 = vpop.f32.mrf.mxu0
        %v1555 = vadd.f32 0.0, %v1554
        %v1556 = vpop.f32.mrf.mxu0
        %1557 = vdwg.mxu0
        %1558 = vrot.lane.b32.xlu0 %v1260, 64
        %v1559 = vpop.permute.xlu0 %1558
        %1560 = vrot.lane.b32.xlu0 %v929, 64
        %v1561 = vpop.permute.xlu0 %1560
        %1562 = vrot.lane.b32.xlu0 %v930, 64
        %v1563 = vpop.permute.xlu0 %1562
        %1564 = vrot.lane.b32.xlu0 %v931, 64
        %v1565 = vpop.permute.xlu0 %1564
        %v1567 = vsel %vm932, %v1559, 0
        %v1570 = vsel %vm932, %v1561, 0
        %v1573 = vsel %vm932, %v1563, 0
        %v1576 = vsel %vm932, %v1565, 0
        %1578 = vmatpush.bf16.xpose.msra.mxu0 0
        %1579 = vmatpush.bf16.xpose.msra.mxu0 0
        %1580 = vmatpush.bf16.xpose.msra.mxu0 0
        %1581 = vmatpush.bf16.xpose.msra.mxu0 0
        %1582 = vmatpush.bf16.xpose.msra.mxu0 0
        %1583 = vmatpush.bf16.xpose.msra.mxu0 %v1576
        %1584 = vmatpush.bf16.xpose.msra.mxu0 %v1573
        %1585 = vmatpush.bf16.xpose.msra.mxu0 %v1570
        %1586 = vmatmul.bf16.gmra.mxu0 %v1567
        %v1587 = vpop.f32.mrf.mxu0
        %v1588 = vadd.f32 %v871, %v1587
        %v1589 = vpop.f32.mrf.mxu0
        %1590 = vdwg.mxu0
        %1591 = vrot.lane.b32.xlu0 %v1296, 64
        %v1592 = vpop.permute.xlu0 %1591
        %1593 = vrot.lane.b32.xlu0 %v968, 64
        %v1594 = vpop.permute.xlu0 %1593
        %1595 = vrot.lane.b32.xlu0 %v969, 64
        %v1596 = vpop.permute.xlu0 %1595
        %1597 = vrot.lane.b32.xlu0 %v970, 64
        %v1598 = vpop.permute.xlu0 %1597
        %v1600 = vsel %vm932, %v1592, 0
        %v1603 = vsel %vm932, %v1594, 0
        %v1606 = vsel %vm932, %v1596, 0
        %v1609 = vsel %vm932, %v1598, 0
        %1611 = vmatpush.bf16.xpose.msra.mxu0 0
        %1612 = vmatpush.bf16.xpose.msra.mxu0 0
        %1613 = vmatpush.bf16.xpose.msra.mxu0 0
        %1614 = vmatpush.bf16.xpose.msra.mxu0 0
        %1615 = vmatpush.bf16.xpose.msra.mxu0 0
        %1616 = vmatpush.bf16.xpose.msra.mxu0 %v1609
        %1617 = vmatpush.bf16.xpose.msra.mxu0 %v1606
        %1618 = vmatpush.bf16.xpose.msra.mxu0 %v1603
        %1619 = vmatmul.bf16.gmra.mxu0 %v1600
        %v1620 = vpop.f32.mrf.mxu0
        %v1621 = vadd.f32 %v872, %v1620
        %v1622 = vpop.f32.mrf.mxu0
        %1623 = vdwg.mxu0
        %1624 = vrot.lane.b32.xlu0 %v1332, 64
        %v1625 = vpop.permute.xlu0 %1624
        %1626 = vrot.lane.b32.xlu0 %v1006, 64
        %v1627 = vpop.permute.xlu0 %1626
        %1628 = vrot.lane.b32.xlu0 %v1007, 64
        %v1629 = vpop.permute.xlu0 %1628
        %1630 = vrot.lane.b32.xlu0 %v1008, 64
        %v1631 = vpop.permute.xlu0 %1630
        %v1633 = vsel %vm932, %v1625, 0
        %v1636 = vsel %vm932, %v1627, 0
        %v1639 = vsel %vm932, %v1629, 0
        %v1642 = vsel %vm932, %v1631, 0
        %1644 = vmatpush.bf16.xpose.msra.mxu0 0
        %1645 = vmatpush.bf16.xpose.msra.mxu0 0
        %1646 = vmatpush.bf16.xpose.msra.mxu0 0
        %1647 = vmatpush.bf16.xpose.msra.mxu0 0
        %1648 = vmatpush.bf16.xpose.msra.mxu0 0
        %1649 = vmatpush.bf16.xpose.msra.mxu0 %v1642
        %1650 = vmatpush.bf16.xpose.msra.mxu0 %v1639
        %1651 = vmatpush.bf16.xpose.msra.mxu0 %v1636
        %1652 = vmatmul.bf16.gmra.mxu0 %v1633
        %v1653 = vpop.f32.mrf.mxu0
        %v1654 = vadd.f32 %v873, %v1653
        %v1655 = vpop.f32.mrf.mxu0
        %1656 = vdwg.mxu0
        %1657 = vrot.lane.b32.xlu0 %v1368, 64
        %v1658 = vpop.permute.xlu0 %1657
        %1659 = vrot.lane.b32.xlu0 %v1044, 64
        %v1660 = vpop.permute.xlu0 %1659
        %1661 = vrot.lane.b32.xlu0 %v1045, 64
        %v1662 = vpop.permute.xlu0 %1661
        %1663 = vrot.lane.b32.xlu0 %v1046, 64
        %v1664 = vpop.permute.xlu0 %1663
        %v1666 = vsel %vm932, %v1658, 0
        %v1669 = vsel %vm932, %v1660, 0
        %v1672 = vsel %vm932, %v1662, 0
        %v1675 = vsel %vm932, %v1664, 0
        %1677 = vmatpush.bf16.xpose.msra.mxu0 0
        %1678 = vmatpush.bf16.xpose.msra.mxu0 0
        %1679 = vmatpush.bf16.xpose.msra.mxu0 0
        %1680 = vmatpush.bf16.xpose.msra.mxu0 0
        %1681 = vmatpush.bf16.xpose.msra.mxu0 0
        %1682 = vmatpush.bf16.xpose.msra.mxu0 %v1675
        %1683 = vmatpush.bf16.xpose.msra.mxu0 %v1672
        %1684 = vmatpush.bf16.xpose.msra.mxu0 %v1669
        %1685 = vmatmul.bf16.gmra.mxu0 %v1666
        %v1686 = vpop.f32.mrf.mxu0
        %v1687 = vadd.f32 %v874, %v1686
        %v1688 = vpop.f32.mrf.mxu0
        %1689 = vdwg.mxu0
        %v1690 = vsel %vm1072, %v1588, -inf
        %1691 = vmax.xlane.f32.xlu0 %v1690
        %v1692 = vpop.xlane.xlu0 %1691
        %v1693 = vsel %vm1072, %v1621, -inf
        %1694 = vmax.xlane.f32.xlu0 %v1693
        %v1695 = vpop.xlane.xlu0 %1694
        %v1696 = vsel %vm1072, %v1654, -inf
        %1697 = vmax.xlane.f32.xlu0 %v1696
        %v1698 = vpop.xlane.xlu0 %1697
        %v1699 = vsel %vm1072, %v1687, -inf
        %1700 = vmax.xlane.f32.xlu0 %v1699
        %v1701 = vpop.xlane.xlu0 %1700
        %v1702 = vsub.f32 %v1588, %v1692
        %v1703 = vsub.f32 %v1621, %v1695
        %v1704 = vsub.f32 %v1654, %v1698
        %v1705 = vsub.f32 %v1687, %v1701
        %v1706 = vmul.f32 %v1702, 1.442695
        %v1707 = vpow.pop %v1706
        %v1708 = vmul.f32 %v1703, 1.442695
        %v1709 = vpow.pop %v1708
        %v1710 = vmul.f32 %v1704, 1.442695
        %v1711 = vpow.pop %v1710
        %v1712 = vmul.f32 %v1705, 1.442695
        %v1713 = vpow.pop %v1712
        %v1714 = vsel %vm1072, %v1707, 0.0
        %1715 = vadd.xlane.f32.xlu0 %v1714
        %v1716 = vpop.xlane.xlu0 %1715
        %v1717 = vsel %vm1072, %v1709, 0.0
        %1718 = vadd.xlane.f32.xlu0 %v1717
        %v1719 = vpop.xlane.xlu0 %1718
        %v1720 = vsel %vm1072, %v1711, 0.0
        %1721 = vadd.xlane.f32.xlu0 %v1720
        %v1722 = vpop.xlane.xlu0 %1721
        %v1723 = vsel %vm1072, %v1713, 0.0
        %1724 = vadd.xlane.f32.xlu0 %v1723
        %v1725 = vpop.xlane.xlu0 %1724
        %v1726 = vrcp.pop %v1716
        %v1727 = vrcp.pop %v1719
        %v1728 = vrcp.pop %v1722
        %v1729 = vrcp.pop %v1725
        %v1730 = vmul.f32 %v1707, %v1726
        %v1731 = vmul.f32 %v1709, %v1727
        %v1732 = vmul.f32 %v1711, %v1728
        %v1733 = vmul.f32 %v1713, %v1729
        %v1734 = vpack.c.bf16 %v1730, %v1730
        %v1735 = vpack.c.bf16 %v1731, %v1731
        %v1736 = vpack.c.bf16 %v1732, %v1732
        %v1737 = vpack.c.bf16 %v1733, %v1733
        %1738 = vrot.lane.b32.xlu0 %v1131, 64
        %v1739 = vpop.permute.xlu0 %1738
        %1740 = vrot.lane.b32.xlu0 %v1132, 64
        %v1741 = vpop.permute.xlu0 %1740
        %1742 = vrot.lane.b32.xlu0 %v1133, 64
        %v1743 = vpop.permute.xlu0 %1742
        %v1747 = vsel %vm1072, %v1734, 0
        %v1750 = vsel %vm1139, %v1743, 0
        %1752 = vmatpush.bf16.msra.mxu0 0
        %1753 = vmatpush.bf16.msra.mxu0 0
        %1754 = vmatpush.bf16.msra.mxu0 0
        %1755 = vmatpush.bf16.msra.mxu0 0
        %1756 = vmatpush.bf16.msra.mxu0 0
        %1757 = vmatpush.bf16.msra.mxu0 %v1750
        %1758 = vmatpush.bf16.msra.mxu0 %v1741
        %1759 = vmatpush.bf16.msra.mxu0 %v1739
        %1760 = vmatmul.bf16.gmra.mxu0 %v1747
        %v1761 = vpop.f32.mrf.mxu0
        %v1762 = vadd.f32 0.0, %v1761
        %v1763 = vpop.f32.mrf.mxu0
        %1764 = vdwg.mxu0
        %1765 = vrot.lane.b32.xlu0 %v1166, 64
        %v1766 = vpop.permute.xlu0 %1765
        %1767 = vrot.lane.b32.xlu0 %v1167, 64
        %v1768 = vpop.permute.xlu0 %1767
        %1769 = vrot.lane.b32.xlu0 %v1168, 64
        %v1770 = vpop.permute.xlu0 %1769
        %v1774 = vsel %vm1072, %v1735, 0
        %v1777 = vsel %vm1139, %v1770, 0
        %1779 = vmatpush.bf16.msra.mxu0 0
        %1780 = vmatpush.bf16.msra.mxu0 0
        %1781 = vmatpush.bf16.msra.mxu0 0
        %1782 = vmatpush.bf16.msra.mxu0 0
        %1783 = vmatpush.bf16.msra.mxu0 0
        %1784 = vmatpush.bf16.msra.mxu0 %v1777
        %1785 = vmatpush.bf16.msra.mxu0 %v1768
        %1786 = vmatpush.bf16.msra.mxu0 %v1766
        %1787 = vmatmul.bf16.gmra.mxu0 %v1774
        %v1788 = vpop.f32.mrf.mxu0
        %v1789 = vadd.f32 0.0, %v1788
        %v1790 = vpop.f32.mrf.mxu0
        %1791 = vdwg.mxu0
        %1792 = vrot.lane.b32.xlu0 %v1200, 64
        %v1793 = vpop.permute.xlu0 %1792
        %1794 = vrot.lane.b32.xlu0 %v1201, 64
        %v1795 = vpop.permute.xlu0 %1794
        %1796 = vrot.lane.b32.xlu0 %v1202, 64
        %v1797 = vpop.permute.xlu0 %1796
        %v1801 = vsel %vm1072, %v1736, 0
        %v1804 = vsel %vm1139, %v1797, 0
        %1806 = vmatpush.bf16.msra.mxu0 0
        %1807 = vmatpush.bf16.msra.mxu0 0
        %1808 = vmatpush.bf16.msra.mxu0 0
        %1809 = vmatpush.bf16.msra.mxu0 0
        %1810 = vmatpush.bf16.msra.mxu0 0
        %1811 = vmatpush.bf16.msra.mxu0 %v1804
        %1812 = vmatpush.bf16.msra.mxu0 %v1795
        %1813 = vmatpush.bf16.msra.mxu0 %v1793
        %1814 = vmatmul.bf16.gmra.mxu0 %v1801
        %v1815 = vpop.f32.mrf.mxu0
        %v1816 = vadd.f32 0.0, %v1815
        %v1817 = vpop.f32.mrf.mxu0
        %1818 = vdwg.mxu0
        %1819 = vrot.lane.b32.xlu0 %v1234, 64
        %v1820 = vpop.permute.xlu0 %1819
        %1821 = vrot.lane.b32.xlu0 %v1235, 64
        %v1822 = vpop.permute.xlu0 %1821
        %1823 = vrot.lane.b32.xlu0 %v1236, 64
        %v1824 = vpop.permute.xlu0 %1823
        %v1828 = vsel %vm1072, %v1737, 0
        %v1831 = vsel %vm1139, %v1824, 0
        %1833 = vmatpush.bf16.msra.mxu0 0
        %1834 = vmatpush.bf16.msra.mxu0 0
        %1835 = vmatpush.bf16.msra.mxu0 0
        %1836 = vmatpush.bf16.msra.mxu0 0
        %1837 = vmatpush.bf16.msra.mxu0 0
        %1838 = vmatpush.bf16.msra.mxu0 %v1831
        %1839 = vmatpush.bf16.msra.mxu0 %v1822
        %1840 = vmatpush.bf16.msra.mxu0 %v1820
        %1841 = vmatmul.bf16.gmra.mxu0 %v1828
        %v1842 = vpop.f32.mrf.mxu0
        %v1843 = vadd.f32 0.0, %v1842
        %v1844 = vpop.f32.mrf.mxu0
        %1845 = vdwg.mxu0
        %1846 = vrot.lane.b32.xlu0 %v1260, 32
        %v1847 = vpop.permute.xlu0 %1846
        %1848 = vrot.lane.b32.xlu0 %v929, 32
        %v1849 = vpop.permute.xlu0 %1848
        %1850 = vrot.lane.b32.xlu0 %v930, 32
        %v1851 = vpop.permute.xlu0 %1850
        %1852 = vrot.lane.b32.xlu0 %v931, 32
        %v1853 = vpop.permute.xlu0 %1852
        %v1855 = vsel %vm932, %v1847, 0
        %v1858 = vsel %vm932, %v1849, 0
        %v1861 = vsel %vm932, %v1851, 0
        %v1864 = vsel %vm932, %v1853, 0
        %1866 = vmatpush.bf16.xpose.msra.mxu0 0
        %1867 = vmatpush.bf16.xpose.msra.mxu0 0
        %1868 = vmatpush.bf16.xpose.msra.mxu0 0
        %1869 = vmatpush.bf16.xpose.msra.mxu0 0
        %1870 = vmatpush.bf16.xpose.msra.mxu0 0
        %1871 = vmatpush.bf16.xpose.msra.mxu0 %v1864
        %1872 = vmatpush.bf16.xpose.msra.mxu0 %v1861
        %1873 = vmatpush.bf16.xpose.msra.mxu0 %v1858
        %1874 = vmatmul.bf16.gmra.mxu0 %v1855
        %v1875 = vpop.f32.mrf.mxu0
        %v1876 = vadd.f32 %v871, %v1875
        %v1877 = vpop.f32.mrf.mxu0
        %1878 = vdwg.mxu0
        %1879 = vrot.lane.b32.xlu0 %v1296, 32
        %v1880 = vpop.permute.xlu0 %1879
        %1881 = vrot.lane.b32.xlu0 %v968, 32
        %v1882 = vpop.permute.xlu0 %1881
        %1883 = vrot.lane.b32.xlu0 %v969, 32
        %v1884 = vpop.permute.xlu0 %1883
        %1885 = vrot.lane.b32.xlu0 %v970, 32
        %v1886 = vpop.permute.xlu0 %1885
        %v1888 = vsel %vm932, %v1880, 0
        %v1891 = vsel %vm932, %v1882, 0
        %v1894 = vsel %vm932, %v1884, 0
        %v1897 = vsel %vm932, %v1886, 0
        %1899 = vmatpush.bf16.xpose.msra.mxu0 0
        %1900 = vmatpush.bf16.xpose.msra.mxu0 0
        %1901 = vmatpush.bf16.xpose.msra.mxu0 0
        %1902 = vmatpush.bf16.xpose.msra.mxu0 0
        %1903 = vmatpush.bf16.xpose.msra.mxu0 0
        %1904 = vmatpush.bf16.xpose.msra.mxu0 %v1897
        %1905 = vmatpush.bf16.xpose.msra.mxu0 %v1894
        %1906 = vmatpush.bf16.xpose.msra.mxu0 %v1891
        %1907 = vmatmul.bf16.gmra.mxu0 %v1888
        %v1908 = vpop.f32.mrf.mxu0
        %v1909 = vadd.f32 %v872, %v1908
        %v1910 = vpop.f32.mrf.mxu0
        %1911 = vdwg.mxu0
        %1912 = vrot.lane.b32.xlu0 %v1332, 32
        %v1913 = vpop.permute.xlu0 %1912
        %1914 = vrot.lane.b32.xlu0 %v1006, 32
        %v1915 = vpop.permute.xlu0 %1914
        %1916 = vrot.lane.b32.xlu0 %v1007, 32
        %v1917 = vpop.permute.xlu0 %1916
        %1918 = vrot.lane.b32.xlu0 %v1008, 32
        %v1919 = vpop.permute.xlu0 %1918
        %v1921 = vsel %vm932, %v1913, 0
        %v1924 = vsel %vm932, %v1915, 0
        %v1927 = vsel %vm932, %v1917, 0
        %v1930 = vsel %vm932, %v1919, 0
        %1932 = vmatpush.bf16.xpose.msra.mxu0 0
        %1933 = vmatpush.bf16.xpose.msra.mxu0 0
        %1934 = vmatpush.bf16.xpose.msra.mxu0 0
        %1935 = vmatpush.bf16.xpose.msra.mxu0 0
        %1936 = vmatpush.bf16.xpose.msra.mxu0 0
        %1937 = vmatpush.bf16.xpose.msra.mxu0 %v1930
        %1938 = vmatpush.bf16.xpose.msra.mxu0 %v1927
        %1939 = vmatpush.bf16.xpose.msra.mxu0 %v1924
        %1940 = vmatmul.bf16.gmra.mxu0 %v1921
        %v1941 = vpop.f32.mrf.mxu0
        %v1942 = vadd.f32 %v873, %v1941
        %v1943 = vpop.f32.mrf.mxu0
        %1944 = vdwg.mxu0
        %1945 = vrot.lane.b32.xlu0 %v1368, 32
        %v1946 = vpop.permute.xlu0 %1945
        %1947 = vrot.lane.b32.xlu0 %v1044, 32
        %v1948 = vpop.permute.xlu0 %1947
        %1949 = vrot.lane.b32.xlu0 %v1045, 32
        %v1950 = vpop.permute.xlu0 %1949
        %1951 = vrot.lane.b32.xlu0 %v1046, 32
        %v1952 = vpop.permute.xlu0 %1951
        %v1954 = vsel %vm932, %v1946, 0
        %v1957 = vsel %vm932, %v1948, 0
        %v1960 = vsel %vm932, %v1950, 0
        %v1963 = vsel %vm932, %v1952, 0
        %1965 = vmatpush.bf16.xpose.msra.mxu0 0
        %1966 = vmatpush.bf16.xpose.msra.mxu0 0
        %1967 = vmatpush.bf16.xpose.msra.mxu0 0
        %1968 = vmatpush.bf16.xpose.msra.mxu0 0
        %1969 = vmatpush.bf16.xpose.msra.mxu0 0
        %1970 = vmatpush.bf16.xpose.msra.mxu0 %v1963
        %1971 = vmatpush.bf16.xpose.msra.mxu0 %v1960
        %1972 = vmatpush.bf16.xpose.msra.mxu0 %v1957
        %1973 = vmatmul.bf16.gmra.mxu0 %v1954
        %v1974 = vpop.f32.mrf.mxu0
        %v1975 = vadd.f32 %v874, %v1974
        %v1976 = vpop.f32.mrf.mxu0
        %1977 = vdwg.mxu0
        %v1978 = vsel %vm1072, %v1876, -inf
        %1979 = vmax.xlane.f32.xlu0 %v1978
        %v1980 = vpop.xlane.xlu0 %1979
        %v1981 = vsel %vm1072, %v1909, -inf
        %1982 = vmax.xlane.f32.xlu0 %v1981
        %v1983 = vpop.xlane.xlu0 %1982
        %v1984 = vsel %vm1072, %v1942, -inf
        %1985 = vmax.xlane.f32.xlu0 %v1984
        %v1986 = vpop.xlane.xlu0 %1985
        %v1987 = vsel %vm1072, %v1975, -inf
        %1988 = vmax.xlane.f32.xlu0 %v1987
        %v1989 = vpop.xlane.xlu0 %1988
        %v1990 = vsub.f32 %v1876, %v1980
        %v1991 = vsub.f32 %v1909, %v1983
        %v1992 = vsub.f32 %v1942, %v1986
        %v1993 = vsub.f32 %v1975, %v1989
        %v1994 = vmul.f32 %v1990, 1.442695
        %v1995 = vpow.pop %v1994
        %v1996 = vmul.f32 %v1991, 1.442695
        %v1997 = vpow.pop %v1996
        %v1998 = vmul.f32 %v1992, 1.442695
        %v1999 = vpow.pop %v1998
        %v2000 = vmul.f32 %v1993, 1.442695
        %v2001 = vpow.pop %v2000
        %v2002 = vsel %vm1072, %v1995, 0.0
        %2003 = vadd.xlane.f32.xlu0 %v2002
        %v2004 = vpop.xlane.xlu0 %2003
        %v2005 = vsel %vm1072, %v1997, 0.0
        %2006 = vadd.xlane.f32.xlu0 %v2005
        %v2007 = vpop.xlane.xlu0 %2006
        %v2008 = vsel %vm1072, %v1999, 0.0
        %2009 = vadd.xlane.f32.xlu0 %v2008
        %v2010 = vpop.xlane.xlu0 %2009
        %v2011 = vsel %vm1072, %v2001, 0.0
        %2012 = vadd.xlane.f32.xlu0 %v2011
        %v2013 = vpop.xlane.xlu0 %2012
        %v2014 = vrcp.pop %v2004
        %v2015 = vrcp.pop %v2007
        %v2016 = vrcp.pop %v2010
        %v2017 = vrcp.pop %v2013
        %v2018 = vmul.f32 %v1995, %v2014
        %v2019 = vmul.f32 %v1997, %v2015
        %v2020 = vmul.f32 %v1999, %v2016
        %v2021 = vmul.f32 %v2001, %v2017
        %v2022 = vpack.c.bf16 %v2018, %v2018
        %v2023 = vpack.c.bf16 %v2019, %v2019
        %v2024 = vpack.c.bf16 %v2020, %v2020
        %v2025 = vpack.c.bf16 %v2021, %v2021
        %2026 = vrot.lane.b32.xlu0 %v1131, 32
        %v2027 = vpop.permute.xlu0 %2026
        %2028 = vrot.lane.b32.xlu0 %v1132, 32
        %v2029 = vpop.permute.xlu0 %2028
        %2030 = vrot.lane.b32.xlu0 %v1133, 32
        %v2031 = vpop.permute.xlu0 %2030
        %v2035 = vsel %vm1072, %v2022, 0
        %v2038 = vsel %vm1139, %v2031, 0
        %2040 = vmatpush.bf16.msra.mxu0 0
        %2041 = vmatpush.bf16.msra.mxu0 0
        %2042 = vmatpush.bf16.msra.mxu0 0
        %2043 = vmatpush.bf16.msra.mxu0 0
        %2044 = vmatpush.bf16.msra.mxu0 0
        %2045 = vmatpush.bf16.msra.mxu0 %v2038
        %2046 = vmatpush.bf16.msra.mxu0 %v2029
        %2047 = vmatpush.bf16.msra.mxu0 %v2027
        %2048 = vmatmul.bf16.gmra.mxu0 %v2035
        %v2049 = vpop.f32.mrf.mxu0
        %v2050 = vadd.f32 0.0, %v2049
        %v2051 = vpop.f32.mrf.mxu0
        %2052 = vdwg.mxu0
        %2053 = vrot.lane.b32.xlu0 %v1166, 32
        %v2054 = vpop.permute.xlu0 %2053
        %2055 = vrot.lane.b32.xlu0 %v1167, 32
        %v2056 = vpop.permute.xlu0 %2055
        %2057 = vrot.lane.b32.xlu0 %v1168, 32
        %v2058 = vpop.permute.xlu0 %2057
        %v2062 = vsel %vm1072, %v2023, 0
        %v2065 = vsel %vm1139, %v2058, 0
        %2067 = vmatpush.bf16.msra.mxu0 0
        %2068 = vmatpush.bf16.msra.mxu0 0
        %2069 = vmatpush.bf16.msra.mxu0 0
        %2070 = vmatpush.bf16.msra.mxu0 0
        %2071 = vmatpush.bf16.msra.mxu0 0
        %2072 = vmatpush.bf16.msra.mxu0 %v2065
        %2073 = vmatpush.bf16.msra.mxu0 %v2056
        %2074 = vmatpush.bf16.msra.mxu0 %v2054
        %2075 = vmatmul.bf16.gmra.mxu0 %v2062
        %v2076 = vpop.f32.mrf.mxu0
        %v2077 = vadd.f32 0.0, %v2076
        %v2078 = vpop.f32.mrf.mxu0
        %2079 = vdwg.mxu0
        %2080 = vrot.lane.b32.xlu0 %v1200, 32
        %v2081 = vpop.permute.xlu0 %2080
        %2082 = vrot.lane.b32.xlu0 %v1201, 32
        %v2083 = vpop.permute.xlu0 %2082
        %2084 = vrot.lane.b32.xlu0 %v1202, 32
        %v2085 = vpop.permute.xlu0 %2084
        %v2089 = vsel %vm1072, %v2024, 0
        %v2092 = vsel %vm1139, %v2085, 0
        %2094 = vmatpush.bf16.msra.mxu0 0
        %2095 = vmatpush.bf16.msra.mxu0 0
        %2096 = vmatpush.bf16.msra.mxu0 0
        %2097 = vmatpush.bf16.msra.mxu0 0
        %2098 = vmatpush.bf16.msra.mxu0 0
        %2099 = vmatpush.bf16.msra.mxu0 %v2092
        %2100 = vmatpush.bf16.msra.mxu0 %v2083
        %2101 = vmatpush.bf16.msra.mxu0 %v2081
        %2102 = vmatmul.bf16.gmra.mxu0 %v2089
        %v2103 = vpop.f32.mrf.mxu0
        %v2104 = vadd.f32 0.0, %v2103
        %v2105 = vpop.f32.mrf.mxu0
        %2106 = vdwg.mxu0
        %2107 = vrot.lane.b32.xlu0 %v1234, 32
        %v2108 = vpop.permute.xlu0 %2107
        %2109 = vrot.lane.b32.xlu0 %v1235, 32
        %v2110 = vpop.permute.xlu0 %2109
        %2111 = vrot.lane.b32.xlu0 %v1236, 32
        %v2112 = vpop.permute.xlu0 %2111
        %v2116 = vsel %vm1072, %v2025, 0
        %v2119 = vsel %vm1139, %v2112, 0
        %2121 = vmatpush.bf16.msra.mxu0 0
        %2122 = vmatpush.bf16.msra.mxu0 0
        %2123 = vmatpush.bf16.msra.mxu0 0
        %2124 = vmatpush.bf16.msra.mxu0 0
        %2125 = vmatpush.bf16.msra.mxu0 0
        %2126 = vmatpush.bf16.msra.mxu0 %v2119
        %2127 = vmatpush.bf16.msra.mxu0 %v2110
        %2128 = vmatpush.bf16.msra.mxu0 %v2108
        %2129 = vmatmul.bf16.gmra.mxu0 %v2116
        %v2130 = vpop.f32.mrf.mxu0
        %v2131 = vadd.f32 0.0, %v2130
        %v2132 = vpop.f32.mrf.mxu0
        %2133 = vdwg.mxu0
        %2138 = vrot.lane.b32.xlu0 %v1474, 32
        %v2139 = vpop.permute.xlu0 %2138
        %2140 = vrot.lane.b32.xlu0 %v1501, 32
        %v2141 = vpop.permute.xlu0 %2140
        %2142 = vrot.lane.b32.xlu0 %v1528, 32
        %v2143 = vpop.permute.xlu0 %2142
        %2144 = vrot.lane.b32.xlu0 %v1555, 32
        %v2145 = vpop.permute.xlu0 %2144
        %2154 = vrot.lane.b32.xlu0 %v1762, 64
        %v2155 = vpop.permute.xlu0 %2154
        %2156 = vrot.lane.b32.xlu0 %v1789, 64
        %v2157 = vpop.permute.xlu0 %2156
        %2158 = vrot.lane.b32.xlu0 %v1816, 64
        %v2159 = vpop.permute.xlu0 %2158
        %2160 = vrot.lane.b32.xlu0 %v1843, 64
        %v2161 = vpop.permute.xlu0 %2160
        %2170 = vrot.lane.b32.xlu0 %v2050, 96
        %v2171 = vpop.permute.xlu0 %2170
        %2172 = vrot.lane.b32.xlu0 %v2077, 96
        %v2173 = vpop.permute.xlu0 %2172
        %2174 = vrot.lane.b32.xlu0 %v2104, 96
        %v2175 = vpop.permute.xlu0 %2174
        %2176 = vrot.lane.b32.xlu0 %v2131, 96
        %v2177 = vpop.permute.xlu0 %2176
        %v2182 = vsel %vm932, %v1153, %v2139
        %v2183 = vsel %vm932, %v1187, %v2141
        %v2184 = vsel %vm932, %v1221, %v2143
        %v2185 = vsel %vm932, %v1255, %v2145
        %vm2186 = vcmask 523264
        %v2187 = vsel %vm2186, %v2182, %v2155
        %v2188 = vsel %vm2186, %v2183, %v2157
        %v2189 = vsel %vm2186, %v2184, %v2159
        %v2190 = vsel %vm2186, %v2185, %v2161
        %vm2191 = vcmask 785408
        %v2192 = vsel %vm2191, %v2187, %v2171
        %v2193 = vsel %vm2191, %v2188, %v2173
        %v2194 = vsel %vm2191, %v2189, %v2175
        %v2195 = vsel %vm2191, %v2190, %v2177
        %v2196 = vpack.c.bf16 %v2193, %v2192
        %v2197 = vpack.c.bf16 %v2195, %v2194
        %v2198 = vld [vmem:[%s7] sm:$0xf]
        %v2199 = vld [vmem:[%s7 + $0x4] sm:$0xf]
        %v2200 = vld [vmem:[%s7 + $0x8] sm:$0xf]
        %v2201 = vld [vmem:[%s7 + $0xc] sm:$0xf]
        %v2202 = vld [vmem:[%s7 + $0x10] sm:$0xf]
        %v2203 = vld [vmem:[%s7 + $0x14] sm:$0xf]
        %v2204 = vld [vmem:[%s7 + $0x18] sm:$0xf]
        %v2205 = vld [vmem:[%s7 + $0x1c] sm:$0xf]
        %v2206 = vld [vmem:[%s7 + $0x20] sm:$0xf]
        %v2207 = vld [vmem:[%s7 + $0x24] sm:$0xf]
        %v2208 = vld [vmem:[%s7 + $0x28] sm:$0xf]
        %v2209 = vld [vmem:[%s7 + $0x2c] sm:$0xf]
        %v2210 = vld [vmem:[%s7 + $0x30] sm:$0xf]
        %v2211 = vld [vmem:[%s7 + $0x34] sm:$0xf]
        %v2212 = vld [vmem:[%s7 + $0x38] sm:$0xf]
        %v2213 = vld [vmem:[%s7 + $0x3c] sm:$0xf]
        %v2214 = vperm.slane %v534, 1
        %v2231 = vunpack.c.l.b16 %v2198
        %v2232 = vunpack.c.l.b16 %v2199
        %v2233 = vunpack.c.l.b16 %v2200
        %v2234 = vunpack.c.l.b16 %v2201
        %v2235 = vunpack.c.l.b16 %v2202
        %v2236 = vunpack.c.l.b16 %v2203
        %v2237 = vunpack.c.l.b16 %v2204
        %v2238 = vunpack.c.l.b16 %v2205
        %v2239 = vunpack.c.l.b16 %v2206
        %v2240 = vunpack.c.l.b16 %v2207
        %v2241 = vunpack.c.l.b16 %v2208
        %v2242 = vunpack.c.l.b16 %v2209
        %v2243 = vunpack.c.l.b16 %v2210
        %v2244 = vunpack.c.l.b16 %v2211
        %v2245 = vunpack.c.l.b16 %v2212
        %v2246 = vunpack.c.l.b16 %v2213
        %v2247 = vpack.c.b16 %v2232, %v2231
        %v2248 = vpack.c.b16 %v2234, %v2233
        %v2249 = vpack.c.b16 %v2236, %v2235
        %v2250 = vpack.c.b16 %v2238, %v2237
        %v2251 = vpack.c.b16 %v2240, %v2239
        %v2252 = vpack.c.b16 %v2242, %v2241
        %v2253 = vpack.c.b16 %v2244, %v2243
        %v2254 = vpack.c.b16 %v2246, %v2245
        %2263 = vmatpush.bf16.msra.mxu0 %v2254
        %2264 = vmatpush.bf16.msra.mxu0 %v2253
        %2265 = vmatpush.bf16.msra.mxu0 %v2252
        %2266 = vmatpush.bf16.msra.mxu0 %v2251
        %2267 = vmatpush.bf16.msra.mxu0 %v2250
        %2268 = vmatpush.bf16.msra.mxu0 %v2249
        %2269 = vmatpush.bf16.msra.mxu0 %v2248
        %2270 = vmatpush.bf16.msra.mxu0 %v2247
        %2271 = vmatmul.bf16.gmra.mxu0 %v2196
        %v2272 = vpop.f32.mrf.mxu0
        %v2273 = vadd.f32 %v2214, %v2272
        %v2274 = vpop.f32.mrf.mxu0
        %v2275 = vadd.f32 %v2214, %v2274
        %2276 = vmatmul.bf16.gmra.mxu0 %v2197
        %v2277 = vpop.f32.mrf.mxu0
        %v2278 = vadd.f32 %v2214, %v2277
        %v2279 = vpop.f32.mrf.mxu0
        %v2280 = vadd.f32 %v2214, %v2279
        %2281 = vdwg.mxu0
        %v2282 = vadd.f32 %v2273, %v535
        %v2283 = vadd.f32 %v2275, %v536
        %v2284 = vadd.f32 %v2278, %v537
        %v2285 = vadd.f32 %v2280, %v538
        %2286 = vadd.xlane.f32.xlu0 %v2282
        %v2287 = vpop.xlane.xlu0 %2286
        %2288 = vadd.xlane.f32.xlu0 %v2283
        %v2289 = vpop.xlane.xlu0 %2288
        %2290 = vadd.xlane.f32.xlu0 %v2284
        %v2291 = vpop.xlane.xlu0 %2290
        %2292 = vadd.xlane.f32.xlu0 %v2285
        %v2293 = vpop.xlane.xlu0 %2292
        %v2294 = vrcp.pop 128.0
        %v2295 = vmul.f32 128.0, %v2294
        %v2296 = vsub.f32 1.0, %v2295
        %v2297 = vmul.f32 %v2294, %v2296
        %v2298 = vadd.f32 %v2294, %v2297
        %vm2299 = vweird.f32 %v2294
        %v2300 = vsel %vm2299, %v2294, %v2298
        %v2301 = vmul.f32 %v2287, %v2300
        %v2302 = vmul.f32 %v2289, %v2300
        %v2303 = vmul.f32 %v2291, %v2300
        %v2304 = vmul.f32 %v2293, %v2300
        %v2305 = vsub.f32 %v2282, %v2301
        %v2306 = vsub.f32 %v2283, %v2302
        %v2307 = vsub.f32 %v2284, %v2303
        %v2308 = vsub.f32 %v2285, %v2304
        %v2309 = vmul.f32 %v2305, %v2305
        %v2310 = vmul.f32 %v2306, %v2306
        %v2311 = vmul.f32 %v2307, %v2307
        %v2312 = vmul.f32 %v2308, %v2308
        %2313 = vadd.xlane.f32.xlu0 %v2309
        %v2314 = vpop.xlane.xlu0 %2313
        %2315 = vadd.xlane.f32.xlu0 %v2310
        %v2316 = vpop.xlane.xlu0 %2315
        %2317 = vadd.xlane.f32.xlu0 %v2311
        %v2318 = vpop.xlane.xlu0 %2317
        %2319 = vadd.xlane.f32.xlu0 %v2312
        %v2320 = vpop.xlane.xlu0 %2319
        %v2321 = vmul.f32 %v2314, %v2300
        %v2322 = vmul.f32 %v2316, %v2300
        %v2323 = vmul.f32 %v2318, %v2300
        %v2324 = vmul.f32 %v2320, %v2300
        %v2325 = vadd.f32 %v2321, 1e-12
        %v2326 = vadd.f32 %v2322, 1e-12
        %v2327 = vadd.f32 %v2323, 1e-12
        %v2328 = vadd.f32 %v2324, 1e-12
        %v2329 = vrsqrt.pop %v2325
        %v2330 = vmul.f32 %v2329, %v2325
        %v2331 = vmul.f32 %v2330, %v2329
        %v2332 = vmul.f32 0.5, %v2331
        %v2333 = vsub.f32 1.5, %v2332
        %v2334 = vmul.f32 %v2329, %v2333
        %vm2335 = vweird.f32 %v2325
        %vm2336 = vweird.f32 %v2329
        %vm2337 = vmor %vm2335, %vm2336
        %v2338 = vsel %vm2337, %v2329, %v2334
        %v2339 = vrsqrt.pop %v2326
        %v2340 = vmul.f32 %v2339, %v2326
        %v2341 = vmul.f32 %v2340, %v2339
        %v2342 = vmul.f32 0.5, %v2341
        %v2343 = vsub.f32 1.5, %v2342
        %v2344 = vmul.f32 %v2339, %v2343
        %vm2345 = vweird.f32 %v2326
        %vm2346 = vweird.f32 %v2339
        %vm2347 = vmor %vm2345, %vm2346
        %v2348 = vsel %vm2347, %v2339, %v2344
        %v2349 = vrsqrt.pop %v2327
        %v2350 = vmul.f32 %v2349, %v2327
        %v2351 = vmul.f32 %v2350, %v2349
        %v2352 = vmul.f32 0.5, %v2351
        %v2353 = vsub.f32 1.5, %v2352
        %v2354 = vmul.f32 %v2349, %v2353
        %vm2355 = vweird.f32 %v2327
        %vm2356 = vweird.f32 %v2349
        %vm2357 = vmor %vm2355, %vm2356
        %v2358 = vsel %vm2357, %v2349, %v2354
        %v2359 = vrsqrt.pop %v2328
        %v2360 = vmul.f32 %v2359, %v2328
        %v2361 = vmul.f32 %v2360, %v2359
        %v2362 = vmul.f32 0.5, %v2361
        %v2363 = vsub.f32 1.5, %v2362
        %v2364 = vmul.f32 %v2359, %v2363
        %vm2365 = vweird.f32 %v2328
        %vm2366 = vweird.f32 %v2359
        %vm2367 = vmor %vm2365, %vm2366
        %v2368 = vsel %vm2367, %v2359, %v2364
        %v2369 = vmul.f32 %v2305, %v2338
        %v2370 = vmul.f32 %v2306, %v2348
        %v2371 = vmul.f32 %v2307, %v2358
        %v2372 = vmul.f32 %v2308, %v2368
        %v2373 = vperm.slane %v534, 2
        %v2374 = vmul.f32 %v2369, %v2373
        %v2375 = vmul.f32 %v2370, %v2373
        %v2376 = vmul.f32 %v2371, %v2373
        %v2377 = vmul.f32 %v2372, %v2373
        %v2378 = vperm.slane %v534, 3
        %v2379 = vadd.f32 %v2374, %v2378
        %v2380 = vadd.f32 %v2375, %v2378
        %v2381 = vadd.f32 %v2376, %v2378
        %v2382 = vadd.f32 %v2377, %v2378
        %v2383 = vpack.c.bf16 %v2380, %v2379
        %v2384 = vpack.c.bf16 %v2382, %v2381
        %v2385 = vld [vmem:[%s8] sm:$0xff]
        %v2386 = vld [vmem:[%s8 + $0x8] sm:$0xff]
        %v2387 = vld [vmem:[%s8 + $0x10] sm:$0xff]
        %v2388 = vld [vmem:[%s8 + $0x18] sm:$0xff]
        %v2389 = vld [vmem:[%s8 + $0x20] sm:$0xff]
        %v2390 = vld [vmem:[%s8 + $0x28] sm:$0xff]
        %v2391 = vld [vmem:[%s8 + $0x30] sm:$0xff]
        %v2392 = vld [vmem:[%s8 + $0x38] sm:$0xff]
        %v2393 = vld [vmem:[%s8 + $0x40] sm:$0xff]
        %v2394 = vld [vmem:[%s8 + $0x48] sm:$0xff]
        %v2395 = vld [vmem:[%s8 + $0x50] sm:$0xff]
        %v2396 = vld [vmem:[%s8 + $0x58] sm:$0xff]
        %v2397 = vld [vmem:[%s8 + $0x60] sm:$0xff]
        %v2398 = vld [vmem:[%s8 + $0x68] sm:$0xff]
        %v2399 = vld [vmem:[%s8 + $0x70] sm:$0xff]
        %v2400 = vld [vmem:[%s8 + $0x78] sm:$0xff]
        %v2401 = vld [vmem:[%s8 + $0x80] sm:$0xff]
        %v2402 = vld [vmem:[%s8 + $0x88] sm:$0xff]
        %v2403 = vld [vmem:[%s8 + $0x90] sm:$0xff]
        %v2404 = vld [vmem:[%s8 + $0x98] sm:$0xff]
        %v2405 = vld [vmem:[%s8 + $0xa0] sm:$0xff]
        %v2406 = vld [vmem:[%s8 + $0xa8] sm:$0xff]
        %v2407 = vld [vmem:[%s8 + $0xb0] sm:$0xff]
        %v2408 = vld [vmem:[%s8 + $0xb8] sm:$0xff]
        %v2409 = vld [vmem:[%s8 + $0xc0] sm:$0xff]
        %v2410 = vld [vmem:[%s8 + $0xc8] sm:$0xff]
        %v2411 = vld [vmem:[%s8 + $0xd0] sm:$0xff]
        %v2412 = vld [vmem:[%s8 + $0xd8] sm:$0xff]
        %v2413 = vld [vmem:[%s8 + $0xe0] sm:$0xff]
        %v2414 = vld [vmem:[%s8 + $0xe8] sm:$0xff]
        %v2415 = vld [vmem:[%s8 + $0xf0] sm:$0xff]
        %v2416 = vld [vmem:[%s8 + $0xf8] sm:$0xff]
        %v2417 = vld [vmem:[%s12] sm:$0xf]
        %v2419 = vperm.slane %v2417, 0
        %v2420 = vperm.slane %v2417, 1
        %v2421 = vperm.slane %v2417, 2
        %v2422 = vperm.slane %v2417, 3
        %v2459 = vunpack.c.l.b16 %v2385
        %v2460 = vunpack.c.h.b16 %v2385
        %v2461 = vunpack.c.l.b16 %v2386
        %v2462 = vunpack.c.h.b16 %v2386
        %v2463 = vunpack.c.l.b16 %v2387
        %v2464 = vunpack.c.h.b16 %v2387
        %v2465 = vunpack.c.l.b16 %v2388
        %v2466 = vunpack.c.h.b16 %v2388
        %v2467 = vunpack.c.l.b16 %v2389
        %v2468 = vunpack.c.h.b16 %v2389
        %v2469 = vunpack.c.l.b16 %v2390
        %v2470 = vunpack.c.h.b16 %v2390
        %v2471 = vunpack.c.l.b16 %v2391
        %v2472 = vunpack.c.h.b16 %v2391
        %v2473 = vunpack.c.l.b16 %v2392
        %v2474 = vunpack.c.h.b16 %v2392
        %v2475 = vunpack.c.l.b16 %v2393
        %v2476 = vunpack.c.h.b16 %v2393
        %v2477 = vunpack.c.l.b16 %v2394
        %v2478 = vunpack.c.h.b16 %v2394
        %v2479 = vunpack.c.l.b16 %v2395
        %v2480 = vunpack.c.h.b16 %v2395
        %v2481 = vunpack.c.l.b16 %v2396
        %v2482 = vunpack.c.h.b16 %v2396
        %v2483 = vunpack.c.l.b16 %v2397
        %v2484 = vunpack.c.h.b16 %v2397
        %v2485 = vunpack.c.l.b16 %v2398
        %v2486 = vunpack.c.h.b16 %v2398
        %v2487 = vunpack.c.l.b16 %v2399
        %v2488 = vunpack.c.h.b16 %v2399
        %v2489 = vunpack.c.l.b16 %v2400
        %v2490 = vunpack.c.h.b16 %v2400
        %v2491 = vunpack.c.l.b16 %v2401
        %v2492 = vunpack.c.h.b16 %v2401
        %v2493 = vunpack.c.l.b16 %v2402
        %v2494 = vunpack.c.h.b16 %v2402
        %v2495 = vunpack.c.l.b16 %v2403
        %v2496 = vunpack.c.h.b16 %v2403
        %v2497 = vunpack.c.l.b16 %v2404
        %v2498 = vunpack.c.h.b16 %v2404
        %v2499 = vunpack.c.l.b16 %v2405
        %v2500 = vunpack.c.h.b16 %v2405
        %v2501 = vunpack.c.l.b16 %v2406
        %v2502 = vunpack.c.h.b16 %v2406
        %v2503 = vunpack.c.l.b16 %v2407
        %v2504 = vunpack.c.h.b16 %v2407
        %v2505 = vunpack.c.l.b16 %v2408
        %v2506 = vunpack.c.h.b16 %v2408
        %v2507 = vunpack.c.l.b16 %v2409
        %v2508 = vunpack.c.h.b16 %v2409
        %v2509 = vunpack.c.l.b16 %v2410
        %v2510 = vunpack.c.h.b16 %v2410
        %v2511 = vunpack.c.l.b16 %v2411
        %v2512 = vunpack.c.h.b16 %v2411
        %v2513 = vunpack.c.l.b16 %v2412
        %v2514 = vunpack.c.h.b16 %v2412
        %v2515 = vunpack.c.l.b16 %v2413
        %v2516 = vunpack.c.h.b16 %v2413
        %v2517 = vunpack.c.l.b16 %v2414
        %v2518 = vunpack.c.h.b16 %v2414
        %v2519 = vunpack.c.l.b16 %v2415
        %v2520 = vunpack.c.h.b16 %v2415
        %v2521 = vunpack.c.l.b16 %v2416
        %v2522 = vunpack.c.h.b16 %v2416
        %v2523 = vpack.c.b16 %v2463, %v2459
        %v2524 = vpack.c.b16 %v2464, %v2460
        %v2525 = vpack.c.b16 %v2465, %v2461
        %v2526 = vpack.c.b16 %v2466, %v2462
        %v2527 = vpack.c.b16 %v2471, %v2467
        %v2528 = vpack.c.b16 %v2472, %v2468
        %v2529 = vpack.c.b16 %v2473, %v2469
        %v2530 = vpack.c.b16 %v2474, %v2470
        %v2531 = vpack.c.b16 %v2479, %v2475
        %v2532 = vpack.c.b16 %v2480, %v2476
        %v2533 = vpack.c.b16 %v2481, %v2477
        %v2534 = vpack.c.b16 %v2482, %v2478
        %v2535 = vpack.c.b16 %v2487, %v2483
        %v2536 = vpack.c.b16 %v2488, %v2484
        %v2537 = vpack.c.b16 %v2489, %v2485
        %v2538 = vpack.c.b16 %v2490, %v2486
        %v2539 = vpack.c.b16 %v2495, %v2491
        %v2540 = vpack.c.b16 %v2496, %v2492
        %v2541 = vpack.c.b16 %v2497, %v2493
        %v2542 = vpack.c.b16 %v2498, %v2494
        %v2543 = vpack.c.b16 %v2503, %v2499
        %v2544 = vpack.c.b16 %v2504, %v2500
        %v2545 = vpack.c.b16 %v2505, %v2501
        %v2546 = vpack.c.b16 %v2506, %v2502
        %v2547 = vpack.c.b16 %v2511, %v2507
        %v2548 = vpack.c.b16 %v2512, %v2508
        %v2549 = vpack.c.b16 %v2513, %v2509
        %v2550 = vpack.c.b16 %v2514, %v2510
        %v2551 = vpack.c.b16 %v2519, %v2515
        %v2552 = vpack.c.b16 %v2520, %v2516
        %v2553 = vpack.c.b16 %v2521, %v2517
        %v2554 = vpack.c.b16 %v2522, %v2518
        %2587 = vmatpush.bf16.msra.mxu0 %v2551
        %2588 = vmatpush.bf16.msra.mxu0 %v2547
        %2589 = vmatpush.bf16.msra.mxu0 %v2543
        %2590 = vmatpush.bf16.msra.mxu0 %v2539
        %2591 = vmatpush.bf16.msra.mxu0 %v2535
        %2592 = vmatpush.bf16.msra.mxu0 %v2531
        %2593 = vmatpush.bf16.msra.mxu0 %v2527
        %2594 = vmatpush.bf16.msra.mxu0 %v2523
        %2595 = vmatmul.bf16.gmra.mxu0 %v2383
        %v2596 = vpop.f32.mrf.mxu0
        %v2597 = vadd.f32 %v2419, %v2596
        %v2598 = vpop.f32.mrf.mxu0
        %v2599 = vadd.f32 %v2419, %v2598
        %2600 = vmatmul.bf16.gmra.mxu0 %v2384
        %v2601 = vpop.f32.mrf.mxu0
        %v2602 = vadd.f32 %v2419, %v2601
        %v2603 = vpop.f32.mrf.mxu0
        %v2604 = vadd.f32 %v2419, %v2603
        %2605 = vdwg.mxu0
        %2606 = vmatpush.bf16.msra.mxu0 %v2552
        %2607 = vmatpush.bf16.msra.mxu0 %v2548
        %2608 = vmatpush.bf16.msra.mxu0 %v2544
        %2609 = vmatpush.bf16.msra.mxu0 %v2540
        %2610 = vmatpush.bf16.msra.mxu0 %v2536
        %2611 = vmatpush.bf16.msra.mxu0 %v2532
        %2612 = vmatpush.bf16.msra.mxu0 %v2528
        %2613 = vmatpush.bf16.msra.mxu0 %v2524
        %2614 = vmatmul.bf16.gmra.mxu0 %v2383
        %v2615 = vpop.f32.mrf.mxu0
        %v2616 = vadd.f32 %v2420, %v2615
        %v2617 = vpop.f32.mrf.mxu0
        %v2618 = vadd.f32 %v2420, %v2617
        %2619 = vmatmul.bf16.gmra.mxu0 %v2384
        %v2620 = vpop.f32.mrf.mxu0
        %v2621 = vadd.f32 %v2420, %v2620
        %v2622 = vpop.f32.mrf.mxu0
        %v2623 = vadd.f32 %v2420, %v2622
        %2624 = vdwg.mxu0
        %2625 = vmatpush.bf16.msra.mxu0 %v2553
        %2626 = vmatpush.bf16.msra.mxu0 %v2549
        %2627 = vmatpush.bf16.msra.mxu0 %v2545
        %2628 = vmatpush.bf16.msra.mxu0 %v2541
        %2629 = vmatpush.bf16.msra.mxu0 %v2537
        %2630 = vmatpush.bf16.msra.mxu0 %v2533
        %2631 = vmatpush.bf16.msra.mxu0 %v2529
        %2632 = vmatpush.bf16.msra.mxu0 %v2525
        %2633 = vmatmul.bf16.gmra.mxu0 %v2383
        %v2634 = vpop.f32.mrf.mxu0
        %v2635 = vadd.f32 %v2421, %v2634
        %v2636 = vpop.f32.mrf.mxu0
        %v2637 = vadd.f32 %v2421, %v2636
        %2638 = vmatmul.bf16.gmra.mxu0 %v2384
        %v2639 = vpop.f32.mrf.mxu0
        %v2640 = vadd.f32 %v2421, %v2639
        %v2641 = vpop.f32.mrf.mxu0
        %v2642 = vadd.f32 %v2421, %v2641
        %2643 = vdwg.mxu0
        %2644 = vmatpush.bf16.msra.mxu0 %v2554
        %2645 = vmatpush.bf16.msra.mxu0 %v2550
        %2646 = vmatpush.bf16.msra.mxu0 %v2546
        %2647 = vmatpush.bf16.msra.mxu0 %v2542
        %2648 = vmatpush.bf16.msra.mxu0 %v2538
        %2649 = vmatpush.bf16.msra.mxu0 %v2534
        %2650 = vmatpush.bf16.msra.mxu0 %v2530
        %2651 = vmatpush.bf16.msra.mxu0 %v2526
        %2652 = vmatmul.bf16.gmra.mxu0 %v2383
        %v2653 = vpop.f32.mrf.mxu0
        %v2654 = vadd.f32 %v2422, %v2653
        %v2655 = vpop.f32.mrf.mxu0
        %v2656 = vadd.f32 %v2422, %v2655
        %2657 = vmatmul.bf16.gmra.mxu0 %v2384
        %v2658 = vpop.f32.mrf.mxu0
        %v2659 = vadd.f32 %v2422, %v2658
        %v2660 = vpop.f32.mrf.mxu0
        %v2661 = vadd.f32 %v2422, %v2660
        %2662 = vdwg.mxu0
        %v2663 = vmul.f32 %v2597, 0.5
        %v2664 = vmul.f32 %v2616, 0.5
        %v2665 = vmul.f32 %v2635, 0.5
        %v2666 = vmul.f32 %v2654, 0.5
        %v2667 = vmul.f32 %v2599, 0.5
        %v2668 = vmul.f32 %v2618, 0.5
        %v2669 = vmul.f32 %v2637, 0.5
        %v2670 = vmul.f32 %v2656, 0.5
        %v2671 = vmul.f32 %v2602, 0.5
        %v2672 = vmul.f32 %v2621, 0.5
        %v2673 = vmul.f32 %v2640, 0.5
        %v2674 = vmul.f32 %v2659, 0.5
        %v2675 = vmul.f32 %v2604, 0.5
        %v2676 = vmul.f32 %v2623, 0.5
        %v2677 = vmul.f32 %v2642, 0.5
        %v2678 = vmul.f32 %v2661, 0.5
        %v2679 = vmul.f32 %v2597, 0.70710677
        %v2680 = vmul.f32 %v2616, 0.70710677
        %v2681 = vmul.f32 %v2635, 0.70710677
        %v2682 = vmul.f32 %v2654, 0.70710677
        %v2683 = vmul.f32 %v2599, 0.70710677
        %v2684 = vmul.f32 %v2618, 0.70710677
        %v2685 = vmul.f32 %v2637, 0.70710677
        %v2686 = vmul.f32 %v2656, 0.70710677
        %v2687 = vmul.f32 %v2602, 0.70710677
        %v2688 = vmul.f32 %v2621, 0.70710677
        %v2689 = vmul.f32 %v2640, 0.70710677
        %v2690 = vmul.f32 %v2659, 0.70710677
        %v2691 = vmul.f32 %v2604, 0.70710677
        %v2692 = vmul.f32 %v2623, 0.70710677
        %v2693 = vmul.f32 %v2642, 0.70710677
        %v2694 = vmul.f32 %v2661, 0.70710677
        %v2695 = vmul.f32 %v2679, %v2679
        %v2696 = vmin.f32 16.0, %v2695
        %v2697 = vmul.f32 %v2696, 2.1237322e-06
        %v2698 = vadd.f32 %v2697, 0.00028619796
        %v2699 = vmul.f32 %v2696, %v2698
        %v2700 = vadd.f32 %v2699, 0.0036580483
        %v2701 = vmul.f32 %v2696, %v2700
        %v2702 = vadd.f32 %v2701, 0.05243302
        %v2703 = vmul.f32 %v2696, %v2702
        %v2704 = vadd.f32 %v2703, 0.18741608
        %v2705 = vmul.f32 %v2696, %v2704
        %v2706 = vadd.f32 %v2705, 1.1283791
        %v2707 = vmul.f32 %v2679, %v2706
        %v2708 = vmul.f32 %v2696, 3.8918573e-05
        %v2709 = vadd.f32 %v2708, 0.001143296
        %v2710 = vmul.f32 %v2696, %v2709
        %v2711 = vadd.f32 %v2710, 0.014752088
        %v2712 = vmul.f32 %v2696, %v2711
        %v2713 = vadd.f32 %v2712, 0.112945676
        %v2714 = vmul.f32 %v2696, %v2713
        %v2715 = vadd.f32 %v2714, 0.4994258
        %v2716 = vmul.f32 %v2696, %v2715
        %v2717 = vadd.f32 %v2716, 1.0
        %v2718 = vrcp.pop %v2717
        %v2719 = vmul.f32 %v2717, %v2718
        %v2720 = vsub.f32 1.0, %v2719
        %v2721 = vmul.f32 %v2718, %v2720
        %v2722 = vadd.f32 %v2718, %v2721
        %vm2723 = vweird.f32 %v2717
        %vm2724 = vweird.f32 %v2718
        %vm2725 = vmor %vm2723, %vm2724
        %v2726 = vsel %vm2725, %v2718, %v2722
        %v2727 = vand.u32 2147483647, %v2717
        %vm2728 = vcmp.eq.f32.partialorder %v2727, 8.507059e+37
        %v2729 = vand.u32 %v2717, 2147483648
        %v2730 = vor.u32 1.1754944e-38, %v2729
        %v2731 = vsel %vm2728, %v2730, %v2726
        %v2732 = vmul.f32 %v2707, %v2731
        %v2733 = vmin.f32 %v2732, 1.0
        %v2734 = vmax.f32 %v2733, -1.0
        %v2735 = vmul.f32 %v2680, %v2680
        %v2736 = vmin.f32 16.0, %v2735
        %v2737 = vmul.f32 %v2736, 2.1237322e-06
        %v2738 = vadd.f32 %v2737, 0.00028619796
        %v2739 = vmul.f32 %v2736, %v2738
        %v2740 = vadd.f32 %v2739, 0.0036580483
        %v2741 = vmul.f32 %v2736, %v2740
        %v2742 = vadd.f32 %v2741, 0.05243302
        %v2743 = vmul.f32 %v2736, %v2742
        %v2744 = vadd.f32 %v2743, 0.18741608
        %v2745 = vmul.f32 %v2736, %v2744
        %v2746 = vadd.f32 %v2745, 1.1283791
        %v2747 = vmul.f32 %v2680, %v2746
        %v2748 = vmul.f32 %v2736, 3.8918573e-05
        %v2749 = vadd.f32 %v2748, 0.001143296
        %v2750 = vmul.f32 %v2736, %v2749
        %v2751 = vadd.f32 %v2750, 0.014752088
        %v2752 = vmul.f32 %v2736, %v2751
        %v2753 = vadd.f32 %v2752, 0.112945676
        %v2754 = vmul.f32 %v2736, %v2753
        %v2755 = vadd.f32 %v2754, 0.4994258
        %v2756 = vmul.f32 %v2736, %v2755
        %v2757 = vadd.f32 %v2756, 1.0
        %v2758 = vrcp.pop %v2757
        %v2759 = vmul.f32 %v2757, %v2758
        %v2760 = vsub.f32 1.0, %v2759
        %v2761 = vmul.f32 %v2758, %v2760
        %v2762 = vadd.f32 %v2758, %v2761
        %vm2763 = vweird.f32 %v2757
        %vm2764 = vweird.f32 %v2758
        %vm2765 = vmor %vm2763, %vm2764
        %v2766 = vsel %vm2765, %v2758, %v2762
        %v2767 = vand.u32 2147483647, %v2757
        %vm2768 = vcmp.eq.f32.partialorder %v2767, 8.507059e+37
        %v2769 = vand.u32 %v2757, 2147483648
        %v2770 = vor.u32 1.1754944e-38, %v2769
        %v2771 = vsel %vm2768, %v2770, %v2766
        %v2772 = vmul.f32 %v2747, %v2771
        %v2773 = vmin.f32 %v2772, 1.0
        %v2774 = vmax.f32 %v2773, -1.0
        %v2775 = vmul.f32 %v2681, %v2681
        %v2776 = vmin.f32 16.0, %v2775
        %v2777 = vmul.f32 %v2776, 2.1237322e-06
        %v2778 = vadd.f32 %v2777, 0.00028619796
        %v2779 = vmul.f32 %v2776, %v2778
        %v2780 = vadd.f32 %v2779, 0.0036580483
        %v2781 = vmul.f32 %v2776, %v2780
        %v2782 = vadd.f32 %v2781, 0.05243302
        %v2783 = vmul.f32 %v2776, %v2782
        %v2784 = vadd.f32 %v2783, 0.18741608
        %v2785 = vmul.f32 %v2776, %v2784
        %v2786 = vadd.f32 %v2785, 1.1283791
        %v2787 = vmul.f32 %v2681, %v2786
        %v2788 = vmul.f32 %v2776, 3.8918573e-05
        %v2789 = vadd.f32 %v2788, 0.001143296
        %v2790 = vmul.f32 %v2776, %v2789
        %v2791 = vadd.f32 %v2790, 0.014752088
        %v2792 = vmul.f32 %v2776, %v2791
        %v2793 = vadd.f32 %v2792, 0.112945676
        %v2794 = vmul.f32 %v2776, %v2793
        %v2795 = vadd.f32 %v2794, 0.4994258
        %v2796 = vmul.f32 %v2776, %v2795
        %v2797 = vadd.f32 %v2796, 1.0
        %v2798 = vrcp.pop %v2797
        %v2799 = vmul.f32 %v2797, %v2798
        %v2800 = vsub.f32 1.0, %v2799
        %v2801 = vmul.f32 %v2798, %v2800
        %v2802 = vadd.f32 %v2798, %v2801
        %vm2803 = vweird.f32 %v2797
        %vm2804 = vweird.f32 %v2798
        %vm2805 = vmor %vm2803, %vm2804
        %v2806 = vsel %vm2805, %v2798, %v2802
        %v2807 = vand.u32 2147483647, %v2797
        %vm2808 = vcmp.eq.f32.partialorder %v2807, 8.507059e+37
        %v2809 = vand.u32 %v2797, 2147483648
        %v2810 = vor.u32 1.1754944e-38, %v2809
        %v2811 = vsel %vm2808, %v2810, %v2806
        %v2812 = vmul.f32 %v2787, %v2811
        %v2813 = vmin.f32 %v2812, 1.0
        %v2814 = vmax.f32 %v2813, -1.0
        %v2815 = vmul.f32 %v2682, %v2682
        %v2816 = vmin.f32 16.0, %v2815
        %v2817 = vmul.f32 %v2816, 2.1237322e-06
        %v2818 = vadd.f32 %v2817, 0.00028619796
        %v2819 = vmul.f32 %v2816, %v2818
        %v2820 = vadd.f32 %v2819, 0.0036580483
        %v2821 = vmul.f32 %v2816, %v2820
        %v2822 = vadd.f32 %v2821, 0.05243302
        %v2823 = vmul.f32 %v2816, %v2822
        %v2824 = vadd.f32 %v2823, 0.18741608
        %v2825 = vmul.f32 %v2816, %v2824
        %v2826 = vadd.f32 %v2825, 1.1283791
        %v2827 = vmul.f32 %v2682, %v2826
        %v2828 = vmul.f32 %v2816, 3.8918573e-05
        %v2829 = vadd.f32 %v2828, 0.001143296
        %v2830 = vmul.f32 %v2816, %v2829
        %v2831 = vadd.f32 %v2830, 0.014752088
        %v2832 = vmul.f32 %v2816, %v2831
        %v2833 = vadd.f32 %v2832, 0.112945676
        %v2834 = vmul.f32 %v2816, %v2833
        %v2835 = vadd.f32 %v2834, 0.4994258
        %v2836 = vmul.f32 %v2816, %v2835
        %v2837 = vadd.f32 %v2836, 1.0
        %v2838 = vrcp.pop %v2837
        %v2839 = vmul.f32 %v2837, %v2838
        %v2840 = vsub.f32 1.0, %v2839
        %v2841 = vmul.f32 %v2838, %v2840
        %v2842 = vadd.f32 %v2838, %v2841
        %vm2843 = vweird.f32 %v2837
        %vm2844 = vweird.f32 %v2838
        %vm2845 = vmor %vm2843, %vm2844
        %v2846 = vsel %vm2845, %v2838, %v2842
        %v2847 = vand.u32 2147483647, %v2837
        %vm2848 = vcmp.eq.f32.partialorder %v2847, 8.507059e+37
        %v2849 = vand.u32 %v2837, 2147483648
        %v2850 = vor.u32 1.1754944e-38, %v2849
        %v2851 = vsel %vm2848, %v2850, %v2846
        %v2852 = vmul.f32 %v2827, %v2851
        %v2853 = vmin.f32 %v2852, 1.0
        %v2854 = vmax.f32 %v2853, -1.0
        %v2855 = vmul.f32 %v2683, %v2683
        %v2856 = vmin.f32 16.0, %v2855
        %v2857 = vmul.f32 %v2856, 2.1237322e-06
        %v2858 = vadd.f32 %v2857, 0.00028619796
        %v2859 = vmul.f32 %v2856, %v2858
        %v2860 = vadd.f32 %v2859, 0.0036580483
        %v2861 = vmul.f32 %v2856, %v2860
        %v2862 = vadd.f32 %v2861, 0.05243302
        %v2863 = vmul.f32 %v2856, %v2862
        %v2864 = vadd.f32 %v2863, 0.18741608
        %v2865 = vmul.f32 %v2856, %v2864
        %v2866 = vadd.f32 %v2865, 1.1283791
        %v2867 = vmul.f32 %v2683, %v2866
        %v2868 = vmul.f32 %v2856, 3.8918573e-05
        %v2869 = vadd.f32 %v2868, 0.001143296
        %v2870 = vmul.f32 %v2856, %v2869
        %v2871 = vadd.f32 %v2870, 0.014752088
        %v2872 = vmul.f32 %v2856, %v2871
        %v2873 = vadd.f32 %v2872, 0.112945676
        %v2874 = vmul.f32 %v2856, %v2873
        %v2875 = vadd.f32 %v2874, 0.4994258
        %v2876 = vmul.f32 %v2856, %v2875
        %v2877 = vadd.f32 %v2876, 1.0
        %v2878 = vrcp.pop %v2877
        %v2879 = vmul.f32 %v2877, %v2878
        %v2880 = vsub.f32 1.0, %v2879
        %v2881 = vmul.f32 %v2878, %v2880
        %v2882 = vadd.f32 %v2878, %v2881
        %vm2883 = vweird.f32 %v2877
        %vm2884 = vweird.f32 %v2878
        %vm2885 = vmor %vm2883, %vm2884
        %v2886 = vsel %vm2885, %v2878, %v2882
        %v2887 = vand.u32 2147483647, %v2877
        %vm2888 = vcmp.eq.f32.partialorder %v2887, 8.507059e+37
        %v2889 = vand.u32 %v2877, 2147483648
        %v2890 = vor.u32 1.1754944e-38, %v2889
        %v2891 = vsel %vm2888, %v2890, %v2886
        %v2892 = vmul.f32 %v2867, %v2891
        %v2893 = vmin.f32 %v2892, 1.0
        %v2894 = vmax.f32 %v2893, -1.0
        %v2895 = vmul.f32 %v2684, %v2684
        %v2896 = vmin.f32 16.0, %v2895
        %v2897 = vmul.f32 %v2896, 2.1237322e-06
        %v2898 = vadd.f32 %v2897, 0.00028619796
        %v2899 = vmul.f32 %v2896, %v2898
        %v2900 = vadd.f32 %v2899, 0.0036580483
        %v2901 = vmul.f32 %v2896, %v2900
        %v2902 = vadd.f32 %v2901, 0.05243302
        %v2903 = vmul.f32 %v2896, %v2902
        %v2904 = vadd.f32 %v2903, 0.18741608
        %v2905 = vmul.f32 %v2896, %v2904
        %v2906 = vadd.f32 %v2905, 1.1283791
        %v2907 = vmul.f32 %v2684, %v2906
        %v2908 = vmul.f32 %v2896, 3.8918573e-05
        %v2909 = vadd.f32 %v2908, 0.001143296
        %v2910 = vmul.f32 %v2896, %v2909
        %v2911 = vadd.f32 %v2910, 0.014752088
        %v2912 = vmul.f32 %v2896, %v2911
        %v2913 = vadd.f32 %v2912, 0.112945676
        %v2914 = vmul.f32 %v2896, %v2913
        %v2915 = vadd.f32 %v2914, 0.4994258
        %v2916 = vmul.f32 %v2896, %v2915
        %v2917 = vadd.f32 %v2916, 1.0
        %v2918 = vrcp.pop %v2917
        %v2919 = vmul.f32 %v2917, %v2918
        %v2920 = vsub.f32 1.0, %v2919
        %v2921 = vmul.f32 %v2918, %v2920
        %v2922 = vadd.f32 %v2918, %v2921
        %vm2923 = vweird.f32 %v2917
        %vm2924 = vweird.f32 %v2918
        %vm2925 = vmor %vm2923, %vm2924
        %v2926 = vsel %vm2925, %v2918, %v2922
        %v2927 = vand.u32 2147483647, %v2917
        %vm2928 = vcmp.eq.f32.partialorder %v2927, 8.507059e+37
        %v2929 = vand.u32 %v2917, 2147483648
        %v2930 = vor.u32 1.1754944e-38, %v2929
        %v2931 = vsel %vm2928, %v2930, %v2926
        %v2932 = vmul.f32 %v2907, %v2931
        %v2933 = vmin.f32 %v2932, 1.0
        %v2934 = vmax.f32 %v2933, -1.0
        %v2935 = vmul.f32 %v2685, %v2685
        %v2936 = vmin.f32 16.0, %v2935
        %v2937 = vmul.f32 %v2936, 2.1237322e-06
        %v2938 = vadd.f32 %v2937, 0.00028619796
        %v2939 = vmul.f32 %v2936, %v2938
        %v2940 = vadd.f32 %v2939, 0.0036580483
        %v2941 = vmul.f32 %v2936, %v2940
        %v2942 = vadd.f32 %v2941, 0.05243302
        %v2943 = vmul.f32 %v2936, %v2942
        %v2944 = vadd.f32 %v2943, 0.18741608
        %v2945 = vmul.f32 %v2936, %v2944
        %v2946 = vadd.f32 %v2945, 1.1283791
        %v2947 = vmul.f32 %v2685, %v2946
        %v2948 = vmul.f32 %v2936, 3.8918573e-05
        %v2949 = vadd.f32 %v2948, 0.001143296
        %v2950 = vmul.f32 %v2936, %v2949
        %v2951 = vadd.f32 %v2950, 0.014752088
        %v2952 = vmul.f32 %v2936, %v2951
        %v2953 = vadd.f32 %v2952, 0.112945676
        %v2954 = vmul.f32 %v2936, %v2953
        %v2955 = vadd.f32 %v2954, 0.4994258
        %v2956 = vmul.f32 %v2936, %v2955
        %v2957 = vadd.f32 %v2956, 1.0
        %v2958 = vrcp.pop %v2957
        %v2959 = vmul.f32 %v2957, %v2958
        %v2960 = vsub.f32 1.0, %v2959
        %v2961 = vmul.f32 %v2958, %v2960
        %v2962 = vadd.f32 %v2958, %v2961
        %vm2963 = vweird.f32 %v2957
        %vm2964 = vweird.f32 %v2958
        %vm2965 = vmor %vm2963, %vm2964
        %v2966 = vsel %vm2965, %v2958, %v2962
        %v2967 = vand.u32 2147483647, %v2957
        %vm2968 = vcmp.eq.f32.partialorder %v2967, 8.507059e+37
        %v2969 = vand.u32 %v2957, 2147483648
        %v2970 = vor.u32 1.1754944e-38, %v2969
        %v2971 = vsel %vm2968, %v2970, %v2966
        %v2972 = vmul.f32 %v2947, %v2971
        %v2973 = vmin.f32 %v2972, 1.0
        %v2974 = vmax.f32 %v2973, -1.0
        %v2975 = vmul.f32 %v2686, %v2686
        %v2976 = vmin.f32 16.0, %v2975
        %v2977 = vmul.f32 %v2976, 2.1237322e-06
        %v2978 = vadd.f32 %v2977, 0.00028619796
        %v2979 = vmul.f32 %v2976, %v2978
        %v2980 = vadd.f32 %v2979, 0.0036580483
        %v2981 = vmul.f32 %v2976, %v2980
        %v2982 = vadd.f32 %v2981, 0.05243302
        %v2983 = vmul.f32 %v2976, %v2982
        %v2984 = vadd.f32 %v2983, 0.18741608
        %v2985 = vmul.f32 %v2976, %v2984
        %v2986 = vadd.f32 %v2985, 1.1283791
        %v2987 = vmul.f32 %v2686, %v2986
        %v2988 = vmul.f32 %v2976, 3.8918573e-05
        %v2989 = vadd.f32 %v2988, 0.001143296
        %v2990 = vmul.f32 %v2976, %v2989
        %v2991 = vadd.f32 %v2990, 0.014752088
        %v2992 = vmul.f32 %v2976, %v2991
        %v2993 = vadd.f32 %v2992, 0.112945676
        %v2994 = vmul.f32 %v2976, %v2993
        %v2995 = vadd.f32 %v2994, 0.4994258
        %v2996 = vmul.f32 %v2976, %v2995
        %v2997 = vadd.f32 %v2996, 1.0
        %v2998 = vrcp.pop %v2997
        %v2999 = vmul.f32 %v2997, %v2998
        %v3000 = vsub.f32 1.0, %v2999
        %v3001 = vmul.f32 %v2998, %v3000
        %v3002 = vadd.f32 %v2998, %v3001
        %vm3003 = vweird.f32 %v2997
        %vm3004 = vweird.f32 %v2998
        %vm3005 = vmor %vm3003, %vm3004
        %v3006 = vsel %vm3005, %v2998, %v3002
        %v3007 = vand.u32 2147483647, %v2997
        %vm3008 = vcmp.eq.f32.partialorder %v3007, 8.507059e+37
        %v3009 = vand.u32 %v2997, 2147483648
        %v3010 = vor.u32 1.1754944e-38, %v3009
        %v3011 = vsel %vm3008, %v3010, %v3006
        %v3012 = vmul.f32 %v2987, %v3011
        %v3013 = vmin.f32 %v3012, 1.0
        %v3014 = vmax.f32 %v3013, -1.0
        %v3015 = vmul.f32 %v2687, %v2687
        %v3016 = vmin.f32 16.0, %v3015
        %v3017 = vmul.f32 %v3016, 2.1237322e-06
        %v3018 = vadd.f32 %v3017, 0.00028619796
        %v3019 = vmul.f32 %v3016, %v3018
        %v3020 = vadd.f32 %v3019, 0.0036580483
        %v3021 = vmul.f32 %v3016, %v3020
        %v3022 = vadd.f32 %v3021, 0.05243302
        %v3023 = vmul.f32 %v3016, %v3022
        %v3024 = vadd.f32 %v3023, 0.18741608
        %v3025 = vmul.f32 %v3016, %v3024
        %v3026 = vadd.f32 %v3025, 1.1283791
        %v3027 = vmul.f32 %v2687, %v3026
        %v3028 = vmul.f32 %v3016, 3.8918573e-05
        %v3029 = vadd.f32 %v3028, 0.001143296
        %v3030 = vmul.f32 %v3016, %v3029
        %v3031 = vadd.f32 %v3030, 0.014752088
        %v3032 = vmul.f32 %v3016, %v3031
        %v3033 = vadd.f32 %v3032, 0.112945676
        %v3034 = vmul.f32 %v3016, %v3033
        %v3035 = vadd.f32 %v3034, 0.4994258
        %v3036 = vmul.f32 %v3016, %v3035
        %v3037 = vadd.f32 %v3036, 1.0
        %v3038 = vrcp.pop %v3037
        %v3039 = vmul.f32 %v3037, %v3038
        %v3040 = vsub.f32 1.0, %v3039
        %v3041 = vmul.f32 %v3038, %v3040
        %v3042 = vadd.f32 %v3038, %v3041
        %vm3043 = vweird.f32 %v3037
        %vm3044 = vweird.f32 %v3038
        %vm3045 = vmor %vm3043, %vm3044
        %v3046 = vsel %vm3045, %v3038, %v3042
        %v3047 = vand.u32 2147483647, %v3037
        %vm3048 = vcmp.eq.f32.partialorder %v3047, 8.507059e+37
        %v3049 = vand.u32 %v3037, 2147483648
        %v3050 = vor.u32 1.1754944e-38, %v3049
        %v3051 = vsel %vm3048, %v3050, %v3046
        %v3052 = vmul.f32 %v3027, %v3051
        %v3053 = vmin.f32 %v3052, 1.0
        %v3054 = vmax.f32 %v3053, -1.0
        %v3055 = vmul.f32 %v2688, %v2688
        %v3056 = vmin.f32 16.0, %v3055
        %v3057 = vmul.f32 %v3056, 2.1237322e-06
        %v3058 = vadd.f32 %v3057, 0.00028619796
        %v3059 = vmul.f32 %v3056, %v3058
        %v3060 = vadd.f32 %v3059, 0.0036580483
        %v3061 = vmul.f32 %v3056, %v3060
        %v3062 = vadd.f32 %v3061, 0.05243302
        %v3063 = vmul.f32 %v3056, %v3062
        %v3064 = vadd.f32 %v3063, 0.18741608
        %v3065 = vmul.f32 %v3056, %v3064
        %v3066 = vadd.f32 %v3065, 1.1283791
        %v3067 = vmul.f32 %v2688, %v3066
        %v3068 = vmul.f32 %v3056, 3.8918573e-05
        %v3069 = vadd.f32 %v3068, 0.001143296
        %v3070 = vmul.f32 %v3056, %v3069
        %v3071 = vadd.f32 %v3070, 0.014752088
        %v3072 = vmul.f32 %v3056, %v3071
        %v3073 = vadd.f32 %v3072, 0.112945676
        %v3074 = vmul.f32 %v3056, %v3073
        %v3075 = vadd.f32 %v3074, 0.4994258
        %v3076 = vmul.f32 %v3056, %v3075
        %v3077 = vadd.f32 %v3076, 1.0
        %v3078 = vrcp.pop %v3077
        %v3079 = vmul.f32 %v3077, %v3078
        %v3080 = vsub.f32 1.0, %v3079
        %v3081 = vmul.f32 %v3078, %v3080
        %v3082 = vadd.f32 %v3078, %v3081
        %vm3083 = vweird.f32 %v3077
        %vm3084 = vweird.f32 %v3078
        %vm3085 = vmor %vm3083, %vm3084
        %v3086 = vsel %vm3085, %v3078, %v3082
        %v3087 = vand.u32 2147483647, %v3077
        %vm3088 = vcmp.eq.f32.partialorder %v3087, 8.507059e+37
        %v3089 = vand.u32 %v3077, 2147483648
        %v3090 = vor.u32 1.1754944e-38, %v3089
        %v3091 = vsel %vm3088, %v3090, %v3086
        %v3092 = vmul.f32 %v3067, %v3091
        %v3093 = vmin.f32 %v3092, 1.0
        %v3094 = vmax.f32 %v3093, -1.0
        %v3095 = vmul.f32 %v2689, %v2689
        %v3096 = vmin.f32 16.0, %v3095
        %v3097 = vmul.f32 %v3096, 2.1237322e-06
        %v3098 = vadd.f32 %v3097, 0.00028619796
        %v3099 = vmul.f32 %v3096, %v3098
        %v3100 = vadd.f32 %v3099, 0.0036580483
        %v3101 = vmul.f32 %v3096, %v3100
        %v3102 = vadd.f32 %v3101, 0.05243302
        %v3103 = vmul.f32 %v3096, %v3102
        %v3104 = vadd.f32 %v3103, 0.18741608
        %v3105 = vmul.f32 %v3096, %v3104
        %v3106 = vadd.f32 %v3105, 1.1283791
        %v3107 = vmul.f32 %v2689, %v3106
        %v3108 = vmul.f32 %v3096, 3.8918573e-05
        %v3109 = vadd.f32 %v3108, 0.001143296
        %v3110 = vmul.f32 %v3096, %v3109
        %v3111 = vadd.f32 %v3110, 0.014752088
        %v3112 = vmul.f32 %v3096, %v3111
        %v3113 = vadd.f32 %v3112, 0.112945676
        %v3114 = vmul.f32 %v3096, %v3113
        %v3115 = vadd.f32 %v3114, 0.4994258
        %v3116 = vmul.f32 %v3096, %v3115
        %v3117 = vadd.f32 %v3116, 1.0
        %v3118 = vrcp.pop %v3117
        %v3119 = vmul.f32 %v3117, %v3118
        %v3120 = vsub.f32 1.0, %v3119
        %v3121 = vmul.f32 %v3118, %v3120
        %v3122 = vadd.f32 %v3118, %v3121
        %vm3123 = vweird.f32 %v3117
        %vm3124 = vweird.f32 %v3118
        %vm3125 = vmor %vm3123, %vm3124
        %v3126 = vsel %vm3125, %v3118, %v3122
        %v3127 = vand.u32 2147483647, %v3117
        %vm3128 = vcmp.eq.f32.partialorder %v3127, 8.507059e+37
        %v3129 = vand.u32 %v3117, 2147483648
        %v3130 = vor.u32 1.1754944e-38, %v3129
        %v3131 = vsel %vm3128, %v3130, %v3126
        %v3132 = vmul.f32 %v3107, %v3131
        %v3133 = vmin.f32 %v3132, 1.0
        %v3134 = vmax.f32 %v3133, -1.0
        %v3135 = vmul.f32 %v2690, %v2690
        %v3136 = vmin.f32 16.0, %v3135
        %v3137 = vmul.f32 %v3136, 2.1237322e-06
        %v3138 = vadd.f32 %v3137, 0.00028619796
        %v3139 = vmul.f32 %v3136, %v3138
        %v3140 = vadd.f32 %v3139, 0.0036580483
        %v3141 = vmul.f32 %v3136, %v3140
        %v3142 = vadd.f32 %v3141, 0.05243302
        %v3143 = vmul.f32 %v3136, %v3142
        %v3144 = vadd.f32 %v3143, 0.18741608
        %v3145 = vmul.f32 %v3136, %v3144
        %v3146 = vadd.f32 %v3145, 1.1283791
        %v3147 = vmul.f32 %v2690, %v3146
        %v3148 = vmul.f32 %v3136, 3.8918573e-05
        %v3149 = vadd.f32 %v3148, 0.001143296
        %v3150 = vmul.f32 %v3136, %v3149
        %v3151 = vadd.f32 %v3150, 0.014752088
        %v3152 = vmul.f32 %v3136, %v3151
        %v3153 = vadd.f32 %v3152, 0.112945676
        %v3154 = vmul.f32 %v3136, %v3153
        %v3155 = vadd.f32 %v3154, 0.4994258
        %v3156 = vmul.f32 %v3136, %v3155
        %v3157 = vadd.f32 %v3156, 1.0
        %v3158 = vrcp.pop %v3157
        %v3159 = vmul.f32 %v3157, %v3158
        %v3160 = vsub.f32 1.0, %v3159
        %v3161 = vmul.f32 %v3158, %v3160
        %v3162 = vadd.f32 %v3158, %v3161
        %vm3163 = vweird.f32 %v3157
        %vm3164 = vweird.f32 %v3158
        %vm3165 = vmor %vm3163, %vm3164
        %v3166 = vsel %vm3165, %v3158, %v3162
        %v3167 = vand.u32 2147483647, %v3157
        %vm3168 = vcmp.eq.f32.partialorder %v3167, 8.507059e+37
        %v3169 = vand.u32 %v3157, 2147483648
        %v3170 = vor.u32 1.1754944e-38, %v3169
        %v3171 = vsel %vm3168, %v3170, %v3166
        %v3172 = vmul.f32 %v3147, %v3171
        %v3173 = vmin.f32 %v3172, 1.0
        %v3174 = vmax.f32 %v3173, -1.0
        %v3175 = vmul.f32 %v2691, %v2691
        %v3176 = vmin.f32 16.0, %v3175
        %v3177 = vmul.f32 %v3176, 2.1237322e-06
        %v3178 = vadd.f32 %v3177, 0.00028619796
        %v3179 = vmul.f32 %v3176, %v3178
        %v3180 = vadd.f32 %v3179, 0.0036580483
        %v3181 = vmul.f32 %v3176, %v3180
        %v3182 = vadd.f32 %v3181, 0.05243302
        %v3183 = vmul.f32 %v3176, %v3182
        %v3184 = vadd.f32 %v3183, 0.18741608
        %v3185 = vmul.f32 %v3176, %v3184
        %v3186 = vadd.f32 %v3185, 1.1283791
        %v3187 = vmul.f32 %v2691, %v3186
        %v3188 = vmul.f32 %v3176, 3.8918573e-05
        %v3189 = vadd.f32 %v3188, 0.001143296
        %v3190 = vmul.f32 %v3176, %v3189
        %v3191 = vadd.f32 %v3190, 0.014752088
        %v3192 = vmul.f32 %v3176, %v3191
        %v3193 = vadd.f32 %v3192, 0.112945676
        %v3194 = vmul.f32 %v3176, %v3193
        %v3195 = vadd.f32 %v3194, 0.4994258
        %v3196 = vmul.f32 %v3176, %v3195
        %v3197 = vadd.f32 %v3196, 1.0
        %v3198 = vrcp.pop %v3197
        %v3199 = vmul.f32 %v3197, %v3198
        %v3200 = vsub.f32 1.0, %v3199
        %v3201 = vmul.f32 %v3198, %v3200
        %v3202 = vadd.f32 %v3198, %v3201
        %vm3203 = vweird.f32 %v3197
        %vm3204 = vweird.f32 %v3198
        %vm3205 = vmor %vm3203, %vm3204
        %v3206 = vsel %vm3205, %v3198, %v3202
        %v3207 = vand.u32 2147483647, %v3197
        %vm3208 = vcmp.eq.f32.partialorder %v3207, 8.507059e+37
        %v3209 = vand.u32 %v3197, 2147483648
        %v3210 = vor.u32 1.1754944e-38, %v3209
        %v3211 = vsel %vm3208, %v3210, %v3206
        %v3212 = vmul.f32 %v3187, %v3211
        %v3213 = vmin.f32 %v3212, 1.0
        %v3214 = vmax.f32 %v3213, -1.0
        %v3215 = vmul.f32 %v2692, %v2692
        %v3216 = vmin.f32 16.0, %v3215
        %v3217 = vmul.f32 %v3216, 2.1237322e-06
        %v3218 = vadd.f32 %v3217, 0.00028619796
        %v3219 = vmul.f32 %v3216, %v3218
        %v3220 = vadd.f32 %v3219, 0.0036580483
        %v3221 = vmul.f32 %v3216, %v3220
        %v3222 = vadd.f32 %v3221, 0.05243302
        %v3223 = vmul.f32 %v3216, %v3222
        %v3224 = vadd.f32 %v3223, 0.18741608
        %v3225 = vmul.f32 %v3216, %v3224
        %v3226 = vadd.f32 %v3225, 1.1283791
        %v3227 = vmul.f32 %v2692, %v3226
        %v3228 = vmul.f32 %v3216, 3.8918573e-05
        %v3229 = vadd.f32 %v3228, 0.001143296
        %v3230 = vmul.f32 %v3216, %v3229
        %v3231 = vadd.f32 %v3230, 0.014752088
        %v3232 = vmul.f32 %v3216, %v3231
        %v3233 = vadd.f32 %v3232, 0.112945676
        %v3234 = vmul.f32 %v3216, %v3233
        %v3235 = vadd.f32 %v3234, 0.4994258
        %v3236 = vmul.f32 %v3216, %v3235
        %v3237 = vadd.f32 %v3236, 1.0
        %v3238 = vrcp.pop %v3237
        %v3239 = vmul.f32 %v3237, %v3238
        %v3240 = vsub.f32 1.0, %v3239
        %v3241 = vmul.f32 %v3238, %v3240
        %v3242 = vadd.f32 %v3238, %v3241
        %vm3243 = vweird.f32 %v3237
        %vm3244 = vweird.f32 %v3238
        %vm3245 = vmor %vm3243, %vm3244
        %v3246 = vsel %vm3245, %v3238, %v3242
        %v3247 = vand.u32 2147483647, %v3237
        %vm3248 = vcmp.eq.f32.partialorder %v3247, 8.507059e+37
        %v3249 = vand.u32 %v3237, 2147483648
        %v3250 = vor.u32 1.1754944e-38, %v3249
        %v3251 = vsel %vm3248, %v3250, %v3246
        %v3252 = vmul.f32 %v3227, %v3251
        %v3253 = vmin.f32 %v3252, 1.0
        %v3254 = vmax.f32 %v3253, -1.0
        %v3255 = vmul.f32 %v2693, %v2693
        %v3256 = vmin.f32 16.0, %v3255
        %v3257 = vmul.f32 %v3256, 2.1237322e-06
        %v3258 = vadd.f32 %v3257, 0.00028619796
        %v3259 = vmul.f32 %v3256, %v3258
        %v3260 = vadd.f32 %v3259, 0.0036580483
        %v3261 = vmul.f32 %v3256, %v3260
        %v3262 = vadd.f32 %v3261, 0.05243302
        %v3263 = vmul.f32 %v3256, %v3262
        %v3264 = vadd.f32 %v3263, 0.18741608
        %v3265 = vmul.f32 %v3256, %v3264
        %v3266 = vadd.f32 %v3265, 1.1283791
        %v3267 = vmul.f32 %v2693, %v3266
        %v3268 = vmul.f32 %v3256, 3.8918573e-05
        %v3269 = vadd.f32 %v3268, 0.001143296
        %v3270 = vmul.f32 %v3256, %v3269
        %v3271 = vadd.f32 %v3270, 0.014752088
        %v3272 = vmul.f32 %v3256, %v3271
        %v3273 = vadd.f32 %v3272, 0.112945676
        %v3274 = vmul.f32 %v3256, %v3273
        %v3275 = vadd.f32 %v3274, 0.4994258
        %v3276 = vmul.f32 %v3256, %v3275
        %v3277 = vadd.f32 %v3276, 1.0
        %v3278 = vrcp.pop %v3277
        %v3279 = vmul.f32 %v3277, %v3278
        %v3280 = vsub.f32 1.0, %v3279
        %v3281 = vmul.f32 %v3278, %v3280
        %v3282 = vadd.f32 %v3278, %v3281
        %vm3283 = vweird.f32 %v3277
        %vm3284 = vweird.f32 %v3278
        %vm3285 = vmor %vm3283, %vm3284
        %v3286 = vsel %vm3285, %v3278, %v3282
        %v3287 = vand.u32 2147483647, %v3277
        %vm3288 = vcmp.eq.f32.partialorder %v3287, 8.507059e+37
        %v3289 = vand.u32 %v3277, 2147483648
        %v3290 = vor.u32 1.1754944e-38, %v3289
        %v3291 = vsel %vm3288, %v3290, %v3286
        %v3292 = vmul.f32 %v3267, %v3291
        %v3293 = vmin.f32 %v3292, 1.0
        %v3294 = vmax.f32 %v3293, -1.0
        %v3295 = vmul.f32 %v2694, %v2694
        %v3296 = vmin.f32 16.0, %v3295
        %v3297 = vmul.f32 %v3296, 2.1237322e-06
        %v3298 = vadd.f32 %v3297, 0.00028619796
        %v3299 = vmul.f32 %v3296, %v3298
        %v3300 = vadd.f32 %v3299, 0.0036580483
        %v3301 = vmul.f32 %v3296, %v3300
        %v3302 = vadd.f32 %v3301, 0.05243302
        %v3303 = vmul.f32 %v3296, %v3302
        %v3304 = vadd.f32 %v3303, 0.18741608
        %v3305 = vmul.f32 %v3296, %v3304
        %v3306 = vadd.f32 %v3305, 1.1283791
        %v3307 = vmul.f32 %v2694, %v3306
        %v3308 = vmul.f32 %v3296, 3.8918573e-05
        %v3309 = vadd.f32 %v3308, 0.001143296
        %v3310 = vmul.f32 %v3296, %v3309
        %v3311 = vadd.f32 %v3310, 0.014752088
        %v3312 = vmul.f32 %v3296, %v3311
        %v3313 = vadd.f32 %v3312, 0.112945676
        %v3314 = vmul.f32 %v3296, %v3313
        %v3315 = vadd.f32 %v3314, 0.4994258
        %v3316 = vmul.f32 %v3296, %v3315
        %v3317 = vadd.f32 %v3316, 1.0
        %v3318 = vrcp.pop %v3317
        %v3319 = vmul.f32 %v3317, %v3318
        %v3320 = vsub.f32 1.0, %v3319
        %v3321 = vmul.f32 %v3318, %v3320
        %v3322 = vadd.f32 %v3318, %v3321
        %vm3323 = vweird.f32 %v3317
        %vm3324 = vweird.f32 %v3318
        %vm3325 = vmor %vm3323, %vm3324
        %v3326 = vsel %vm3325, %v3318, %v3322
        %v3327 = vand.u32 2147483647, %v3317
        %vm3328 = vcmp.eq.f32.partialorder %v3327, 8.507059e+37
        %v3329 = vand.u32 %v3317, 2147483648
        %v3330 = vor.u32 1.1754944e-38, %v3329
        %v3331 = vsel %vm3328, %v3330, %v3326
        %v3332 = vmul.f32 %v3307, %v3331
        %v3333 = vmin.f32 %v3332, 1.0
        %v3334 = vmax.f32 %v3333, -1.0
        %v3335 = vadd.f32 %v2734, 1.0
        %v3336 = vadd.f32 %v2774, 1.0
        %v3337 = vadd.f32 %v2814, 1.0
        %v3338 = vadd.f32 %v2854, 1.0
        %v3339 = vadd.f32 %v2894, 1.0
        %v3340 = vadd.f32 %v2934, 1.0
        %v3341 = vadd.f32 %v2974, 1.0
        %v3342 = vadd.f32 %v3014, 1.0
        %v3343 = vadd.f32 %v3054, 1.0
        %v3344 = vadd.f32 %v3094, 1.0
        %v3345 = vadd.f32 %v3134, 1.0
        %v3346 = vadd.f32 %v3174, 1.0
        %v3347 = vadd.f32 %v3214, 1.0
        %v3348 = vadd.f32 %v3254, 1.0
        %v3349 = vadd.f32 %v3294, 1.0
        %v3350 = vadd.f32 %v3334, 1.0
        %v3351 = vmul.f32 %v2663, %v3335
        %v3352 = vmul.f32 %v2664, %v3336
        %v3353 = vmul.f32 %v2665, %v3337
        %v3354 = vmul.f32 %v2666, %v3338
        %v3355 = vmul.f32 %v2667, %v3339
        %v3356 = vmul.f32 %v2668, %v3340
        %v3357 = vmul.f32 %v2669, %v3341
        %v3358 = vmul.f32 %v2670, %v3342
        %v3359 = vmul.f32 %v2671, %v3343
        %v3360 = vmul.f32 %v2672, %v3344
        %v3361 = vmul.f32 %v2673, %v3345
        %v3362 = vmul.f32 %v2674, %v3346
        %v3363 = vmul.f32 %v2675, %v3347
        %v3364 = vmul.f32 %v2676, %v3348
        %v3365 = vmul.f32 %v2677, %v3349
        %v3366 = vmul.f32 %v2678, %v3350
        %v3367 = vpack.c.bf16 %v3355, %v3351
        %v3368 = vpack.c.bf16 %v3356, %v3352
        %v3369 = vpack.c.bf16 %v3357, %v3353
        %v3370 = vpack.c.bf16 %v3358, %v3354
        %v3371 = vpack.c.bf16 %v3363, %v3359
        %v3372 = vpack.c.bf16 %v3364, %v3360
        %v3373 = vpack.c.bf16 %v3365, %v3361
        %v3374 = vpack.c.bf16 %v3366, %v3362
        %v3375 = vld [vmem:[%s9] sm:$0xf]
        %v3376 = vld [vmem:[%s9 + $0x4] sm:$0xf]
        %v3377 = vld [vmem:[%s9 + $0x8] sm:$0xf]
        %v3378 = vld [vmem:[%s9 + $0xc] sm:$0xf]
        %v3379 = vld [vmem:[%s9 + $0x10] sm:$0xf]
        %v3380 = vld [vmem:[%s9 + $0x14] sm:$0xf]
        %v3381 = vld [vmem:[%s9 + $0x18] sm:$0xf]
        %v3382 = vld [vmem:[%s9 + $0x1c] sm:$0xf]
        %v3383 = vld [vmem:[%s9 + $0x20] sm:$0xf]
        %v3384 = vld [vmem:[%s9 + $0x24] sm:$0xf]
        %v3385 = vld [vmem:[%s9 + $0x28] sm:$0xf]
        %v3386 = vld [vmem:[%s9 + $0x2c] sm:$0xf]
        %v3387 = vld [vmem:[%s9 + $0x30] sm:$0xf]
        %v3388 = vld [vmem:[%s9 + $0x34] sm:$0xf]
        %v3389 = vld [vmem:[%s9 + $0x38] sm:$0xf]
        %v3390 = vld [vmem:[%s9 + $0x3c] sm:$0xf]
        %v3391 = vld [vmem:[%s9 + $0x40] sm:$0xf]
        %v3392 = vld [vmem:[%s9 + $0x44] sm:$0xf]
        %v3393 = vld [vmem:[%s9 + $0x48] sm:$0xf]
        %v3394 = vld [vmem:[%s9 + $0x4c] sm:$0xf]
        %v3395 = vld [vmem:[%s9 + $0x50] sm:$0xf]
        %v3396 = vld [vmem:[%s9 + $0x54] sm:$0xf]
        %v3397 = vld [vmem:[%s9 + $0x58] sm:$0xf]
        %v3398 = vld [vmem:[%s9 + $0x5c] sm:$0xf]
        %v3399 = vld [vmem:[%s9 + $0x60] sm:$0xf]
        %v3400 = vld [vmem:[%s9 + $0x64] sm:$0xf]
        %v3401 = vld [vmem:[%s9 + $0x68] sm:$0xf]
        %v3402 = vld [vmem:[%s9 + $0x6c] sm:$0xf]
        %v3403 = vld [vmem:[%s9 + $0x70] sm:$0xf]
        %v3404 = vld [vmem:[%s9 + $0x74] sm:$0xf]
        %v3405 = vld [vmem:[%s9 + $0x78] sm:$0xf]
        %v3406 = vld [vmem:[%s9 + $0x7c] sm:$0xf]
        %v3407 = vld [vmem:[%s9 + $0x80] sm:$0xf]
        %v3408 = vld [vmem:[%s9 + $0x84] sm:$0xf]
        %v3409 = vld [vmem:[%s9 + $0x88] sm:$0xf]
        %v3410 = vld [vmem:[%s9 + $0x8c] sm:$0xf]
        %v3411 = vld [vmem:[%s9 + $0x90] sm:$0xf]
        %v3412 = vld [vmem:[%s9 + $0x94] sm:$0xf]
        %v3413 = vld [vmem:[%s9 + $0x98] sm:$0xf]
        %v3414 = vld [vmem:[%s9 + $0x9c] sm:$0xf]
        %v3415 = vld [vmem:[%s9 + $0xa0] sm:$0xf]
        %v3416 = vld [vmem:[%s9 + $0xa4] sm:$0xf]
        %v3417 = vld [vmem:[%s9 + $0xa8] sm:$0xf]
        %v3418 = vld [vmem:[%s9 + $0xac] sm:$0xf]
        %v3419 = vld [vmem:[%s9 + $0xb0] sm:$0xf]
        %v3420 = vld [vmem:[%s9 + $0xb4] sm:$0xf]
        %v3421 = vld [vmem:[%s9 + $0xb8] sm:$0xf]
        %v3422 = vld [vmem:[%s9 + $0xbc] sm:$0xf]
        %v3423 = vld [vmem:[%s9 + $0xc0] sm:$0xf]
        %v3424 = vld [vmem:[%s9 + $0xc4] sm:$0xf]
        %v3425 = vld [vmem:[%s9 + $0xc8] sm:$0xf]
        %v3426 = vld [vmem:[%s9 + $0xcc] sm:$0xf]
        %v3427 = vld [vmem:[%s9 + $0xd0] sm:$0xf]
        %v3428 = vld [vmem:[%s9 + $0xd4] sm:$0xf]
        %v3429 = vld [vmem:[%s9 + $0xd8] sm:$0xf]
        %v3430 = vld [vmem:[%s9 + $0xdc] sm:$0xf]
        %v3431 = vld [vmem:[%s9 + $0xe0] sm:$0xf]
        %v3432 = vld [vmem:[%s9 + $0xe4] sm:$0xf]
        %v3433 = vld [vmem:[%s9 + $0xe8] sm:$0xf]
        %v3434 = vld [vmem:[%s9 + $0xec] sm:$0xf]
        %v3435 = vld [vmem:[%s9 + $0xf0] sm:$0xf]
        %v3436 = vld [vmem:[%s9 + $0xf4] sm:$0xf]
        %v3437 = vld [vmem:[%s9 + $0xf8] sm:$0xf]
        %v3438 = vld [vmem:[%s9 + $0xfc] sm:$0xf]
        %v3439 = vperm.slane %v534, 4
        %v3504 = vunpack.c.l.b16 %v3375
        %v3505 = vunpack.c.l.b16 %v3376
        %v3506 = vunpack.c.l.b16 %v3377
        %v3507 = vunpack.c.l.b16 %v3378
        %v3508 = vunpack.c.l.b16 %v3379
        %v3509 = vunpack.c.l.b16 %v3380
        %v3510 = vunpack.c.l.b16 %v3381
        %v3511 = vunpack.c.l.b16 %v3382
        %v3512 = vunpack.c.l.b16 %v3383
        %v3513 = vunpack.c.l.b16 %v3384
        %v3514 = vunpack.c.l.b16 %v3385
        %v3515 = vunpack.c.l.b16 %v3386
        %v3516 = vunpack.c.l.b16 %v3387
        %v3517 = vunpack.c.l.b16 %v3388
        %v3518 = vunpack.c.l.b16 %v3389
        %v3519 = vunpack.c.l.b16 %v3390
        %v3520 = vunpack.c.l.b16 %v3391
        %v3521 = vunpack.c.l.b16 %v3392
        %v3522 = vunpack.c.l.b16 %v3393
        %v3523 = vunpack.c.l.b16 %v3394
        %v3524 = vunpack.c.l.b16 %v3395
        %v3525 = vunpack.c.l.b16 %v3396
        %v3526 = vunpack.c.l.b16 %v3397
        %v3527 = vunpack.c.l.b16 %v3398
        %v3528 = vunpack.c.l.b16 %v3399
        %v3529 = vunpack.c.l.b16 %v3400
        %v3530 = vunpack.c.l.b16 %v3401
        %v3531 = vunpack.c.l.b16 %v3402
        %v3532 = vunpack.c.l.b16 %v3403
        %v3533 = vunpack.c.l.b16 %v3404
        %v3534 = vunpack.c.l.b16 %v3405
        %v3535 = vunpack.c.l.b16 %v3406
        %v3536 = vunpack.c.l.b16 %v3407
        %v3537 = vunpack.c.l.b16 %v3408
        %v3538 = vunpack.c.l.b16 %v3409
        %v3539 = vunpack.c.l.b16 %v3410
        %v3540 = vunpack.c.l.b16 %v3411
        %v3541 = vunpack.c.l.b16 %v3412
        %v3542 = vunpack.c.l.b16 %v3413
        %v3543 = vunpack.c.l.b16 %v3414
        %v3544 = vunpack.c.l.b16 %v3415
        %v3545 = vunpack.c.l.b16 %v3416
        %v3546 = vunpack.c.l.b16 %v3417
        %v3547 = vunpack.c.l.b16 %v3418
        %v3548 = vunpack.c.l.b16 %v3419
        %v3549 = vunpack.c.l.b16 %v3420
        %v3550 = vunpack.c.l.b16 %v3421
        %v3551 = vunpack.c.l.b16 %v3422
        %v3552 = vunpack.c.l.b16 %v3423
        %v3553 = vunpack.c.l.b16 %v3424
        %v3554 = vunpack.c.l.b16 %v3425
        %v3555 = vunpack.c.l.b16 %v3426
        %v3556 = vunpack.c.l.b16 %v3427
        %v3557 = vunpack.c.l.b16 %v3428
        %v3558 = vunpack.c.l.b16 %v3429
        %v3559 = vunpack.c.l.b16 %v3430
        %v3560 = vunpack.c.l.b16 %v3431
        %v3561 = vunpack.c.l.b16 %v3432
        %v3562 = vunpack.c.l.b16 %v3433
        %v3563 = vunpack.c.l.b16 %v3434
        %v3564 = vunpack.c.l.b16 %v3435
        %v3565 = vunpack.c.l.b16 %v3436
        %v3566 = vunpack.c.l.b16 %v3437
        %v3567 = vunpack.c.l.b16 %v3438
        %v3568 = vpack.c.b16 %v3505, %v3504
        %v3569 = vpack.c.b16 %v3507, %v3506
        %v3570 = vpack.c.b16 %v3509, %v3508
        %v3571 = vpack.c.b16 %v3511, %v3510
        %v3572 = vpack.c.b16 %v3513, %v3512
        %v3573 = vpack.c.b16 %v3515, %v3514
        %v3574 = vpack.c.b16 %v3517, %v3516
        %v3575 = vpack.c.b16 %v3519, %v3518
        %v3576 = vpack.c.b16 %v3521, %v3520
        %v3577 = vpack.c.b16 %v3523, %v3522
        %v3578 = vpack.c.b16 %v3525, %v3524
        %v3579 = vpack.c.b16 %v3527, %v3526
        %v3580 = vpack.c.b16 %v3529, %v3528
        %v3581 = vpack.c.b16 %v3531, %v3530
        %v3582 = vpack.c.b16 %v3533, %v3532
        %v3583 = vpack.c.b16 %v3535, %v3534
        %v3584 = vpack.c.b16 %v3537, %v3536
        %v3585 = vpack.c.b16 %v3539, %v3538
        %v3586 = vpack.c.b16 %v3541, %v3540
        %v3587 = vpack.c.b16 %v3543, %v3542
        %v3588 = vpack.c.b16 %v3545, %v3544
        %v3589 = vpack.c.b16 %v3547, %v3546
        %v3590 = vpack.c.b16 %v3549, %v3548
        %v3591 = vpack.c.b16 %v3551, %v3550
        %v3592 = vpack.c.b16 %v3553, %v3552
        %v3593 = vpack.c.b16 %v3555, %v3554
        %v3594 = vpack.c.b16 %v3557, %v3556
        %v3595 = vpack.c.b16 %v3559, %v3558
        %v3596 = vpack.c.b16 %v3561, %v3560
        %v3597 = vpack.c.b16 %v3563, %v3562
        %v3598 = vpack.c.b16 %v3565, %v3564
        %v3599 = vpack.c.b16 %v3567, %v3566
        %3632 = vmatpush.bf16.msra.mxu0 %v3575
        %3633 = vmatpush.bf16.msra.mxu0 %v3574
        %3634 = vmatpush.bf16.msra.mxu0 %v3573
        %3635 = vmatpush.bf16.msra.mxu0 %v3572
        %3636 = vmatpush.bf16.msra.mxu0 %v3571
        %3637 = vmatpush.bf16.msra.mxu0 %v3570
        %3638 = vmatpush.bf16.msra.mxu0 %v3569
        %3639 = vmatpush.bf16.msra.mxu0 %v3568
        %3640 = vmatmul.bf16.gmra.mxu0 %v3367
        %v3641 = vpop.f32.mrf.mxu0
        %v3642 = vadd.f32 %v3439, %v3641
        %v3643 = vpop.f32.mrf.mxu0
        %v3644 = vadd.f32 %v3439, %v3643
        %3645 = vmatmul.bf16.gmra.mxu0 %v3371
        %v3646 = vpop.f32.mrf.mxu0
        %v3647 = vadd.f32 %v3439, %v3646
        %v3648 = vpop.f32.mrf.mxu0
        %v3649 = vadd.f32 %v3439, %v3648
        %3650 = vdwg.mxu0
        %3651 = vmatpush.bf16.msra.mxu0 %v3583
        %3652 = vmatpush.bf16.msra.mxu0 %v3582
        %3653 = vmatpush.bf16.msra.mxu0 %v3581
        %3654 = vmatpush.bf16.msra.mxu0 %v3580
        %3655 = vmatpush.bf16.msra.mxu0 %v3579
        %3656 = vmatpush.bf16.msra.mxu0 %v3578
        %3657 = vmatpush.bf16.msra.mxu0 %v3577
        %3658 = vmatpush.bf16.msra.mxu0 %v3576
        %3659 = vmatmul.bf16.gmra.mxu0 %v3368
        %v3660 = vpop.f32.mrf.mxu0
        %v3661 = vadd.f32 %v3642, %v3660
        %v3662 = vpop.f32.mrf.mxu0
        %v3663 = vadd.f32 %v3644, %v3662
        %3664 = vmatmul.bf16.gmra.mxu0 %v3372
        %v3665 = vpop.f32.mrf.mxu0
        %v3666 = vadd.f32 %v3647, %v3665
        %v3667 = vpop.f32.mrf.mxu0
        %v3668 = vadd.f32 %v3649, %v3667
        %3669 = vdwg.mxu0
        %3670 = vmatpush.bf16.msra.mxu0 %v3591
        %3671 = vmatpush.bf16.msra.mxu0 %v3590
        %3672 = vmatpush.bf16.msra.mxu0 %v3589
        %3673 = vmatpush.bf16.msra.mxu0 %v3588
        %3674 = vmatpush.bf16.msra.mxu0 %v3587
        %3675 = vmatpush.bf16.msra.mxu0 %v3586
        %3676 = vmatpush.bf16.msra.mxu0 %v3585
        %3677 = vmatpush.bf16.msra.mxu0 %v3584
        %3678 = vmatmul.bf16.gmra.mxu0 %v3369
        %v3679 = vpop.f32.mrf.mxu0
        %v3680 = vadd.f32 %v3661, %v3679
        %v3681 = vpop.f32.mrf.mxu0
        %v3682 = vadd.f32 %v3663, %v3681
        %3683 = vmatmul.bf16.gmra.mxu0 %v3373
        %v3684 = vpop.f32.mrf.mxu0
        %v3685 = vadd.f32 %v3666, %v3684
        %v3686 = vpop.f32.mrf.mxu0
        %v3687 = vadd.f32 %v3668, %v3686
        %3688 = vdwg.mxu0
        %3689 = vmatpush.bf16.msra.mxu0 %v3599
        %3690 = vmatpush.bf16.msra.mxu0 %v3598
        %3691 = vmatpush.bf16.msra.mxu0 %v3597
        %3692 = vmatpush.bf16.msra.mxu0 %v3596
        %3693 = vmatpush.bf16.msra.mxu0 %v3595
        %3694 = vmatpush.bf16.msra.mxu0 %v3594
        %3695 = vmatpush.bf16.msra.mxu0 %v3593
        %3696 = vmatpush.bf16.msra.mxu0 %v3592
        %3697 = vmatmul.bf16.gmra.mxu0 %v3370
        %v3698 = vpop.f32.mrf.mxu0
        %v3699 = vadd.f32 %v3680, %v3698
        %v3700 = vpop.f32.mrf.mxu0
        %v3701 = vadd.f32 %v3682, %v3700
        %3702 = vmatmul.bf16.gmra.mxu0 %v3374
        %v3703 = vpop.f32.mrf.mxu0
        %v3704 = vadd.f32 %v3685, %v3703
        %v3705 = vpop.f32.mrf.mxu0
        %v3706 = vadd.f32 %v3687, %v3705
        %3707 = vdwg.mxu0
        %v3708 = vadd.f32 %v3699, %v2379
        %v3709 = vadd.f32 %v3701, %v2380
        %v3710 = vadd.f32 %v3704, %v2381
        %v3711 = vadd.f32 %v3706, %v2382
        %3712 = vadd.xlane.f32.xlu0 %v3708
        %v3713 = vpop.xlane.xlu0 %3712
        %3714 = vadd.xlane.f32.xlu0 %v3709
        %v3715 = vpop.xlane.xlu0 %3714
        %3716 = vadd.xlane.f32.xlu0 %v3710
        %v3717 = vpop.xlane.xlu0 %3716
        %3718 = vadd.xlane.f32.xlu0 %v3711
        %v3719 = vpop.xlane.xlu0 %3718
        %v3720 = vmul.f32 %v3713, %v2300
        %v3721 = vmul.f32 %v3715, %v2300
        %v3722 = vmul.f32 %v3717, %v2300
        %v3723 = vmul.f32 %v3719, %v2300
        %v3724 = vsub.f32 %v3708, %v3720
        %v3725 = vsub.f32 %v3709, %v3721
        %v3726 = vsub.f32 %v3710, %v3722
        %v3727 = vsub.f32 %v3711, %v3723
        %v3728 = vmul.f32 %v3724, %v3724
        %v3729 = vmul.f32 %v3725, %v3725
        %v3730 = vmul.f32 %v3726, %v3726
        %v3731 = vmul.f32 %v3727, %v3727
        %3732 = vadd.xlane.f32.xlu0 %v3728
        %v3733 = vpop.xlane.xlu0 %3732
        %3734 = vadd.xlane.f32.xlu0 %v3729
        %v3735 = vpop.xlane.xlu0 %3734
        %3736 = vadd.xlane.f32.xlu0 %v3730
        %v3737 = vpop.xlane.xlu0 %3736
        %3738 = vadd.xlane.f32.xlu0 %v3731
        %v3739 = vpop.xlane.xlu0 %3738
        %v3740 = vmul.f32 %v3733, %v2300
        %v3741 = vmul.f32 %v3735, %v2300
        %v3742 = vmul.f32 %v3737, %v2300
        %v3743 = vmul.f32 %v3739, %v2300
        %v3744 = vadd.f32 %v3740, 1e-12
        %v3745 = vadd.f32 %v3741, 1e-12
        %v3746 = vadd.f32 %v3742, 1e-12
        %v3747 = vadd.f32 %v3743, 1e-12
        %v3748 = vrsqrt.pop %v3744
        %v3749 = vmul.f32 %v3748, %v3744
        %v3750 = vmul.f32 %v3749, %v3748
        %v3751 = vmul.f32 0.5, %v3750
        %v3752 = vsub.f32 1.5, %v3751
        %v3753 = vmul.f32 %v3748, %v3752
        %vm3754 = vweird.f32 %v3744
        %vm3755 = vweird.f32 %v3748
        %vm3756 = vmor %vm3754, %vm3755
        %v3757 = vsel %vm3756, %v3748, %v3753
        %v3758 = vrsqrt.pop %v3745
        %v3759 = vmul.f32 %v3758, %v3745
        %v3760 = vmul.f32 %v3759, %v3758
        %v3761 = vmul.f32 0.5, %v3760
        %v3762 = vsub.f32 1.5, %v3761
        %v3763 = vmul.f32 %v3758, %v3762
        %vm3764 = vweird.f32 %v3745
        %vm3765 = vweird.f32 %v3758
        %vm3766 = vmor %vm3764, %vm3765
        %v3767 = vsel %vm3766, %v3758, %v3763
        %v3768 = vrsqrt.pop %v3746
        %v3769 = vmul.f32 %v3768, %v3746
        %v3770 = vmul.f32 %v3769, %v3768
        %v3771 = vmul.f32 0.5, %v3770
        %v3772 = vsub.f32 1.5, %v3771
        %v3773 = vmul.f32 %v3768, %v3772
        %vm3774 = vweird.f32 %v3746
        %vm3775 = vweird.f32 %v3768
        %vm3776 = vmor %vm3774, %vm3775
        %v3777 = vsel %vm3776, %v3768, %v3773
        %v3778 = vrsqrt.pop %v3747
        %v3779 = vmul.f32 %v3778, %v3747
        %v3780 = vmul.f32 %v3779, %v3778
        %v3781 = vmul.f32 0.5, %v3780
        %v3782 = vsub.f32 1.5, %v3781
        %v3783 = vmul.f32 %v3778, %v3782
        %vm3784 = vweird.f32 %v3747
        %vm3785 = vweird.f32 %v3778
        %vm3786 = vmor %vm3784, %vm3785
        %v3787 = vsel %vm3786, %v3778, %v3783
        %v3788 = vmul.f32 %v3724, %v3757
        %v3789 = vmul.f32 %v3725, %v3767
        %v3790 = vmul.f32 %v3726, %v3777
        %v3791 = vmul.f32 %v3727, %v3787
        %v3792 = vperm.slane %v534, 5
        %v3793 = vmul.f32 %v3788, %v3792
        %v3794 = vmul.f32 %v3789, %v3792
        %v3795 = vmul.f32 %v3790, %v3792
        %v3796 = vmul.f32 %v3791, %v3792
        %v3797 = vperm.slane %v534, 6
        %v3798 = vadd.f32 %v3793, %v3797
        %v3799 = vadd.f32 %v3794, %v3797
        %v3800 = vadd.f32 %v3795, %v3797
        %v3801 = vadd.f32 %v3796, %v3797
        %3802 = vst [vmem:[%s500] sm:$0xff] %v3798
        %3803 = vst [vmem:[%s500 + $0x8] sm:$0xff] %v3799
        %3804 = vst [vmem:[%s500 + $0x10] sm:$0xff] %v3800
        %3805 = vst [vmem:[%s500 + $0x18] sm:$0xff] %v3801
        %s3806 = sand.u32 %s333, 1
        %s3807 = scalar_lea.sflag [#allocation3], %s3806
        %s3808 = sand.u32 %s333, 1
        %s3809 = smul.addr %s3808, 32
        %s3810 = scalar_lea.vmem [#allocation2], %s3809
        // Predicated region
        $region73: #{bert_generation_layer.1} parent=71 // pred_check
          %p3811 = pneg %p343
        $region74: #{bert_generation_layer.1} parent=71 // pred_check_branch
          %3813 = sbr.rel (%p3811) target = $region76
        $region75: #{bert_generation_layer.1} parent=71 // pred_region
          %s3814 = smul.u32 4, %s27
          %3816 = vsyncadd %s3807, 0
          %s3817 = smul.addr %s3814, 8
          %s3818 = scalar_lea.hbm %s13, %s3817
          %s3819 = sshll.u32 %s3810, 4
          %s3820 = int_to_ptr.vmem [resolvable:$true] %s3819
          %s3821 = sshll.u32 %s3818, 4
          %s3822 = int_to_ptr.hbm [resolvable:$true] %s3821
          %3827 = dma.vmem_to_hbm [thread:$0]  %s3820, 512, %s3822, %s3807, 128, 128, 8
        $region76: #{bert_generation_layer.1} parent=71 // pred_fallthru
          _
      $region72: #{bert_generation_layer.1} parent=5 // pred_fallthru
        _
      %p3828 = scmp.le.s32.totalorder 2, %s22
      // Predicated region
      $region77: #{bert_generation_layer.1} parent=5 // pred_check
        %p3829 = pneg %p3828
      $region78: #{bert_generation_layer.1} parent=5 // pred_check_branch
        %3831 = sbr.rel (%p3829) target = $region80
      $region79: #{bert_generation_layer.1} parent=5 // pred_region
        %s3832 = ssub.s32 %s22, 2
        // Predicated region
        $region81: #{bert_generation_layer.1} parent=79 // pred_check
          %p3833 = pneg %p349
        $region82: #{bert_generation_layer.1} parent=79 // pred_check_branch
          %3835 = sbr.rel (%p3833) target = $region84
        $region83: #{bert_generation_layer.1} parent=79 // pred_region
          %s3836 = sand.u32 %s334, 1
          %s3837 = scalar_lea.sflag [#allocation3], %s3836
          %s3838 = sand.u32 %s334, 1
          %s3839 = smul.addr %s3838, 32
          %s3840 = scalar_lea.vmem [#allocation2], %s3839
          %3842 = dma.done %s3837, 512
        $region84: #{bert_generation_layer.1} parent=79 // pred_fallthru
          _
      $region80: #{bert_generation_layer.1} parent=5 // pred_fallthru
        _
    $region6: #{bert_generation_layer.1} parent=1 // loop_footer
      %s26 = sadd.s32 1, %s22
    $region7: #{bert_generation_layer.1} parent=1 // loop_footer_branch
      %21 = sbr.rel target = $region3
    $region8: #{bert_generation_layer.1} parent=1 // loop_exit
      _
    %3843 = vsyncpa [#allocation3], 1
    %s3844 = scalar_lea.sflag [#allocation3], 1
    %3845 = vsyncpa %s3844, 1

</llo_original>
